<compile_context>
chip_gen: v5e
topology: v5e:2x2
jax: 0.10.0
libtpu: 0.0.40
codegen_flags: <defaults>
</compile_context>

<pallas_src>
import numpy as np
import jax
import jax.numpy as jnp
from jax import lax
from jax.experimental import pallas as pl
from jax.experimental.pallas import tpu as pltpu


# ---------------------------------------------------------------------------
# Generation-aware VMEM limit (review #4).
# ---------------------------------------------------------------------------
_VMEM_LIMIT_CACHE = None


def _vmem_limit_bytes():
    global _VMEM_LIMIT_CACHE
    if _VMEM_LIMIT_CACHE is None:
        try:
            cap = int(pltpu.get_tpu_info().vmem_capacity_bytes)
        except Exception:
            cap = 64 << 20
        _VMEM_LIMIT_CACHE = min(cap * 3 // 4, 96 << 20)
    return _VMEM_LIMIT_CACHE


# ---------------------------------------------------------------------------
# Tap geometry of the causal ("masked") convolutions.
#   order 'A': output(h,w) sees rows h-kH..h-1,  cols w-cW..w+cW
#   order 'B': rows h+1..h+kH
#   order 'C': cols w-kW..w-1, rows h-cH..h+cH
#   order 'D': cols w+1..w+kW
# Each tap is a (dy, dx) image shift; built in-kernel as a lane roll + mask.
# ---------------------------------------------------------------------------
def _tap_shifts(order, kh, kw):
    if order == 'A':
        cw = (kw - 1) // 2
        return [(ky - kh, kx - cw) for ky in range(kh) for kx in range(kw)]
    if order == 'B':
        cw = (kw - 1) // 2
        return [(ky + 1, kx - cw) for ky in range(kh) for kx in range(kw)]
    if order == 'C':
        ch = (kh - 1) // 2
        return [(ky - ch, kx - kw) for ky in range(kh) for kx in range(kw)]
    if order == 'D':
        ch = (kh - 1) // 2
        return [(ky - ch, kx + 1) for ky in range(kh) for kx in range(kw)]
    raise ValueError(order)


def _tap_masks(shifts, H, W, C):
    """(T*C, H*W) 0/1 mask: row t*C+c masks tap t (image-boundary zeros)."""
    hh, ww = np.meshgrid(np.arange(H), np.arange(W), indexing='ij')
    rows = []
    for dy, dx in shifts:
        valid = ((hh + dy >= 0) & (hh + dy < H) &
                 (ww + dx >= 0) & (ww + dx < W))
        rows.append(valid.reshape(-1).astype(np.float32))
    m = np.stack(rows, axis=0)                      # (T, HW)
    return np.repeat(m, C, axis=0)                  # (T*C, HW)


# ---------------------------------------------------------------------------
# Pallas kernels
# ---------------------------------------------------------------------------
def _make_mcf_kernel(alpha, shifts, img_w, HW):
    """Fused MaskedConvFlow step (one image per grid step).

    optional per-channel pre-affine (fused ActNorm)      -> y = s*x + b
    kh*kw causal taps built in VMEM (lane rolls + masks)  -> patches (T*C, HW)
    single K=T*C bf16 MXU matmul -> ReLU -> split 1x1 heads -> mu, log_scale
    affine coupling + logdet + per-channel sum / sum-of-squares stats.
    """
    def kernel(x_ref, mask_ref, wm_ref, bm_ref, wmu_ref, bmu_ref,
               wls_ref, bls_ref, s_ref, b_ref, out_ref, aux_ref, patch_ref):
        C = x_ref.shape[1]

        # Fused ActNorm affine of the *previous* stage (identity when unused).
        y = x_ref[0] * s_ref[...] + b_ref[...]                 # (C, HW) f32

        # Build the shifted taps in VMEM: flattened-image lane roll per tap.
        # tap_t[j] = y[(j + dy*W + dx) mod HW]; boundary wrap is zeroed by the
        # precomputed mask, reproducing the causal zero padding.
        for t, (dy, dx) in enumerate(shifts):
            sft = (-(dy * img_w + dx)) % HW
            r = pltpu.roll(y, shift=sft, axis=1) if sft else y
            patch_ref[pl.ds(t * C, C), :] = r

        patches = (patch_ref[...] * mask_ref[...]).astype(jnp.bfloat16)

        # Shifted conv: one K = T*C matmul (bf16 operands, f32 accumulate).
        acc = jnp.dot(wm_ref[...], patches,
                      preferred_element_type=jnp.float32) + bm_ref[...]
        h = jnp.maximum(acc, 0.0).astype(jnp.bfloat16)         # ReLU

        # 1x1 conv, split into mu / log-scale heads (no lane slicing).
        mu = jnp.dot(wmu_ref[...], h,
                     preferred_element_type=jnp.float32) + bmu_ref[...]
        ls = jnp.dot(wls_ref[...], h,
                     preferred_element_type=jnp.float32) + bls_ref[...]

        # MaCow Affine coupling: scale = sigmoid(log_scale + 2), alpha blend.
        # Stable log-sigmoid + EUP exp (no VALU divide, no exp overflow).
        z = ls + 2.0
        log_sig = jnp.minimum(z, 0.0) - jnp.log(1.0 + jnp.exp(-jnp.abs(z)))
        if alpha == 1.0:
            scale = jnp.exp(log_sig)
            log_scale = log_sig
        else:
            scale = jnp.exp(log_sig) * alpha + (1.0 - alpha)
            log_scale = jnp.log(scale)

        o = scale * y + mu
        out_ref[0] = o                                          # lane-dense

        # Per-channel stats (fused ActNorm init) + per-channel logdet partials.
        aux_ref[0, :, 0:1] = jnp.sum(o, axis=1, keepdims=True)
        aux_ref[0, :, 1:2] = jnp.sum(o * o, axis=1, keepdims=True)
        aux_ref[0, :, 2:3] = jnp.sum(log_scale, axis=1, keepdims=True)
    return kernel


def _actnorm_kernel(x_ref, s_ref, b_ref, out_ref):
    """ActNorm affine: out = x * exp(log_scale) + bias, channel-major."""
    out_ref[0] = x_ref[0] * s_ref[...] + b_ref[...]


# ---------------------------------------------------------------------------
# pallas_call wrappers
# ---------------------------------------------------------------------------
def mcf_flow(x3, p, order, kh, kw, H, W, alpha=1.0,
             pre_scale=None, pre_bias=None):
    """One MaskedConvFlow (affine) step.  x3: (B, C, H*W) f32.

    Returns (out3, aux) where aux[b, c] = (sum, sum_sq, sum_log_scale) over HW.
    `pre_scale`/`pre_bias` (C,) apply a fused per-channel affine (the previous
    ActNorm) to the input inside the kernel.
    """
    B, C, HW = x3.shape
    hidden = p['w_masked'].shape[-1]
    T = kh * kw
    TC = T * C
    shifts = _tap_shifts(order, kh, kw)
    masks = jnp.asarray(_tap_masks(shifts, H, W, C), dtype=jnp.float32)

    wm_t = jnp.transpose(p['w_masked'].reshape(TC, hidden)).astype(jnp.bfloat16)
    bm = p['b_masked'].reshape(hidden, 1).astype(jnp.float32)
    w1 = p['w_1x1']                                             # (hidden, 2C)
    wmu = jnp.transpose(w1[:, :C]).astype(jnp.bfloat16)         # (C, hidden)
    wls = jnp.transpose(w1[:, C:]).astype(jnp.bfloat16)
    b1 = p['b_1x1'].reshape(2 * C)
    bmu = b1[:C].reshape(C, 1).astype(jnp.float32)
    bls = b1[C:].reshape(C, 1).astype(jnp.float32)

    if pre_scale is None:
        ps = jnp.ones((C, 1), jnp.float32)
        pb = jnp.zeros((C, 1), jnp.float32)
    else:
        ps = pre_scale.reshape(C, 1).astype(jnp.float32)
        pb = pre_bias.reshape(C, 1).astype(jnp.float32)

    # Full-image blocks (grid over batch only).
    approx_vmem = HW * (C * 48 + TC * 10 + hidden * 8)
    assert approx_vmem < _vmem_limit_bytes(), (
        "image too large for full-image blocks; needs a halo-tiled path")

    out3, aux = pl.pallas_call(
        _make_mcf_kernel(alpha, shifts, W, HW),
        grid=(B,),
        out_shape=(jax.ShapeDtypeStruct((B, C, HW), jnp.float32),
                   jax.ShapeDtypeStruct((B, C, 3), jnp.float32)),
        in_specs=[
            pl.BlockSpec((1, C, HW),   lambda b: (b, 0, 0)),   # activation
            pl.BlockSpec((TC, HW),     lambda b: (0, 0)),      # tap masks
            pl.BlockSpec((hidden, TC), lambda b: (0, 0)),      # masked-conv W^T
            pl.BlockSpec((hidden, 1),  lambda b: (0, 0)),      # masked-conv bias
            pl.BlockSpec((C, hidden),  lambda b: (0, 0)),      # 1x1 mu head
            pl.BlockSpec((C, 1),       lambda b: (0, 0)),
            pl.BlockSpec((C, hidden),  lambda b: (0, 0)),      # 1x1 log-scale head
            pl.BlockSpec((C, 1),       lambda b: (0, 0)),
            pl.BlockSpec((C, 1),       lambda b: (0, 0)),      # fused pre-affine s
            pl.BlockSpec((C, 1),       lambda b: (0, 0)),      # fused pre-affine b
        ],
        out_specs=(pl.BlockSpec((1, C, HW), lambda b: (b, 0, 0)),
                   pl.BlockSpec((1, C, 3),  lambda b: (b, 0, 0))),
        scratch_shapes=[pltpu.VMEM((TC, HW), jnp.float32)],     # in-VMEM patches
        compiler_params=pltpu.CompilerParams(
            dimension_semantics=("parallel",),
            vmem_limit_bytes=_vmem_limit_bytes()),
    )(x3, masks, wm_t, bm, wmu, bmu, wls, bls, ps, pb)
    return out3, aux


def actnorm_flow(x3, log_scale, bias):
    """Standalone ActNorm affine (only needed after the last MCF stage)."""
    B, C, HW = x3.shape
    s = jnp.exp(log_scale).reshape(C, 1).astype(jnp.float32)
    b = bias.reshape(C, 1).astype(jnp.float32)
    return pl.pallas_call(
        _actnorm_kernel,
        grid=(B,),
        out_shape=jax.ShapeDtypeStruct((B, C, HW), jnp.float32),
        in_specs=[
            pl.BlockSpec((1, C, HW), lambda bi: (bi, 0, 0)),
            pl.BlockSpec((C, 1),     lambda bi: (0, 0)),
            pl.BlockSpec((C, 1),     lambda bi: (0, 0)),
        ],
        out_specs=pl.BlockSpec((1, C, HW), lambda bi: (bi, 0, 0)),
        compiler_params=pltpu.CompilerParams(
            dimension_semantics=("parallel",),
            vmem_limit_bytes=_vmem_limit_bytes()),
    )(x3, s, b)


def actnorm_params_from_stats(sum_x, sumsq_x, log_scale0, bias0, n,
                              init_scale=1.0):
    """ActNorm2dFlow.init computed from per-(batch,channel) sum / sum-of-sq
    of the *pre*-ActNorm activation (emitted by the preceding MCF kernel)."""
    S = jnp.sum(sum_x, axis=0)                 # (C,)
    Q = jnp.sum(sumsq_x, axis=0)
    mean_x = S / n
    var_x = jnp.maximum((Q - S * S / n) / (n - 1.0), 0.0)   # unbiased
    a0 = jnp.exp(log_scale0)
    mean_out = a0 * mean_x + bias0
    std_out = a0 * jnp.sqrt(var_x)
    inv_std = init_scale / (std_out + 1e-6)
    return jnp.log(inv_std), -mean_out * inv_std


# ---------------------------------------------------------------------------
# MaCowUnit forward (Pallas path).  Input / output are NCHW like PyTorch;
# channel-major (B, C, H*W) is already lane-dense so no layout transposes.
# ---------------------------------------------------------------------------
def macow_unit_forward(x_nchw, params, ks=(2, 3), alpha=1.0):
    x = x_nchw.astype(jnp.float32)
    B, C, H, W = x.shape
    HW = H * W
    n = float(B * HW)
    x3 = x.reshape(B, C, HW)

    out, aux = mcf_flow(x3, params['conv1'], 'A', ks[0], ks[1], H, W, alpha)
    logdet = jnp.sum(aux[:, :, 2], axis=1)
    out, aux = mcf_flow(out, params['conv2'], 'B', ks[0], ks[1], H, W, alpha)
    logdet = logdet + jnp.sum(aux[:, :, 2], axis=1)

    # actnorm1: stats came out of conv2's kernel; the affine is folded into
    # conv3's kernel (never materialized to HBM).
    ls1, b1 = actnorm_params_from_stats(aux[:, :, 0], aux[:, :, 1],
                                        params['actnorm1'][0],
                                        params['actnorm1'][1], n)
    logdet = logdet + jnp.sum(ls1) * float(HW)

    out, aux = mcf_flow(out, params['conv3'], 'C', ks[1], ks[0], H, W, alpha,
                        pre_scale=jnp.exp(ls1), pre_bias=b1)
    logdet = logdet + jnp.sum(aux[:, :, 2], axis=1)
    out, aux = mcf_flow(out, params['conv4'], 'D', ks[1], ks[0], H, W, alpha)
    logdet = logdet + jnp.sum(aux[:, :, 2], axis=1)

    # actnorm2: stats from conv4's kernel; one elementwise pass for the affine.
    ls2, b2 = actnorm_params_from_stats(aux[:, :, 0], aux[:, :, 1],
                                        params['actnorm2'][0],
                                        params['actnorm2'][1], n)
    logdet = logdet + jnp.sum(ls2) * float(HW)
    out = actnorm_flow(out, ls2, b2)

    return out.reshape(B, C, H, W), logdet


# ---------------------------------------------------------------------------
# Pure-JAX reference (correctness check).  Matmul operands are rounded to
# bf16 (f32 accumulation) to mirror the kernel's MXU path.
# ---------------------------------------------------------------------------
def shift_pad_nchw(x, order, kh, kw):
    if order == 'A':
        cw = (kw - 1) // 2
        return jnp.pad(x, ((0, 0), (0, 0), (kh, 0), (cw, cw)))[:, :, :-1, :]
    elif order == 'B':
        cw = (kw - 1) // 2
        return jnp.pad(x, ((0, 0), (0, 0), (0, kh), (cw, cw)))[:, :, 1:, :]
    elif order == 'C':
        ch = (kh - 1) // 2
        return jnp.pad(x, ((0, 0), (0, 0), (ch, ch), (kw, 0)))[:, :, :, :-1]
    elif order == 'D':
        ch = (kh - 1) // 2
        return jnp.pad(x, ((0, 0), (0, 0), (ch, ch), (0, kw)))[:, :, :, 1:]
    raise ValueError(order)


def actnorm_init(x3, log_scale0, bias0, init_scale=1.0):
    """ActNorm2dFlow.init (two-pass reference)."""
    C = x3.shape[1]
    out = x3 * jnp.exp(log_scale0).reshape(1, C, 1) + bias0.reshape(1, C, 1)
    flat = jnp.transpose(out, (1, 0, 2)).reshape(C, -1)
    mean = jnp.mean(flat, axis=1)
    std = jnp.std(flat, axis=1, ddof=1)            # torch.std is unbiased
    inv_std = init_scale / (std + 1e-6)
    return jnp.log(inv_std), -mean * inv_std


def _q(x):
    return x.astype(jnp.bfloat16).astype(jnp.float32)


def _mcf_ref(x4, p, order, kh, kw, alpha):
    B, C, H, W = x4.shape
    xp = shift_pad_nchw(x4, order, kh, kw)
    c = lax.conv_general_dilated(
        _q(xp), _q(p['w_masked']), (1, 1), 'VALID',
        dimension_numbers=('NCHW', 'HWIO', 'NCHW'),
        precision=lax.Precision.HIGHEST) + p['b_masked'].reshape(1, -1, 1, 1)
    hact = _q(jnp.maximum(c, 0.0))
    pr = jnp.einsum('bkhw,kc->bchw', hact, _q(p['w_1x1']),
                    precision=lax.Precision.HIGHEST) + p['b_1x1'].reshape(1, -1, 1, 1)
    mu = pr[:, :C]
    log_scale = pr[:, C:]
    scale = 1.0 / (1.0 + jnp.exp(-(log_scale + 2.0)))
    scale = scale * alpha + (1.0 - alpha)
    out = scale * x4 + mu
    ld = jnp.sum(jnp.log(scale), axis=(1, 2, 3))
    return out, ld


def macow_unit_forward_ref(x_nchw, params, ks=(2, 3), alpha=1.0):
    x = x_nchw.astype(jnp.float32)
    B, C, H, W = x.shape
    logdet = jnp.zeros((B,), jnp.float32)

    def an(x4, ls0, b0, logdet):
        ls, b = actnorm_init(x4.reshape(B, C, H * W), ls0, b0)
        out = x4 * jnp.exp(ls).reshape(1, C, 1, 1) + b.reshape(1, C, 1, 1)
        return out, logdet + jnp.sum(ls) * (H * W)

    out, ld = _mcf_ref(x, params['conv1'], 'A', ks[0], ks[1], alpha); logdet = logdet + ld
    out, ld = _mcf_ref(out, params['conv2'], 'B', ks[0], ks[1], alpha); logdet = logdet + ld
    out, logdet = an(out, *params['actnorm1'], logdet)
    out, ld = _mcf_ref(out, params['conv3'], 'C', ks[1], ks[0], alpha); logdet = logdet + ld
    out, ld = _mcf_ref(out, params['conv4'], 'D', ks[1], ks[0], alpha); logdet = logdet + ld
    out, logdet = an(out, *params['actnorm2'], logdet)
    return out, logdet


# ---------------------------------------------------------------------------
# Deterministic synthetic parameter init (shapes follow MaCowUnit.__init__;
# the weight-norm of the reference impl is folded into the effective weights).
# ---------------------------------------------------------------------------
def init_macow_params(key, C, hidden, ks):
    params = {}
    specs = [('conv1', (ks[0], ks[1])), ('conv2', (ks[0], ks[1])),
             ('conv3', (ks[1], ks[0])), ('conv4', (ks[1], ks[0]))]
    for name, (kh, kw) in specs:
        key, a, b, c, d = jax.random.split(key, 5)
        params[name] = {
            'w_masked': jax.random.normal(a, (kh, kw, C, hidden), jnp.float32) * 0.1,
            'b_masked': jax.random.normal(b, (1, hidden), jnp.float32) * 0.01,
            'w_1x1':    jax.random.normal(c, (hidden, 2 * C), jnp.float32) * 0.1,
            'b_1x1':    jax.random.normal(d, (1, 2 * C), jnp.float32) * 0.01,
        }
    for name in ('actnorm1', 'actnorm2'):
        key, a = jax.random.split(key)
        # ActNorm2dFlow.reset_parameters: log_scale ~ N(0, 0.05), bias = 0
        params[name] = (jax.random.normal(a, (C,), jnp.float32) * 0.05,
                        jnp.zeros((C,), jnp.float32))
    return params


if __name__ == "__main__":
    key = jax.random.PRNGKey(0)
    kx, kp = jax.random.split(key)

    B, C, H, W = 2, 4, 16, 16
    ks = (2, 3)
    hidden = 4 * C                        # in_channels <= 96 -> 4 * in_channels

    x = jax.random.normal(kx, (B, C, H, W), jnp.float32)    # NCHW, like PyTorch
    params = init_macow_params(kp, C, hidden, ks)

    fwd = jax.jit(lambda xx: macow_unit_forward(xx, params, ks=ks, alpha=1.0))
    out, logdet = fwd(x)
    out = jax.block_until_ready(out)
    logdet = jax.block_until_ready(logdet)

    out_ref, logdet_ref = macow_unit_forward_ref(x, params, ks=ks, alpha=1.0)

    assert out.shape == (B, C, H, W)
    assert logdet.shape == (B,)
    np.testing.assert_allclose(np.asarray(out), np.asarray(out_ref),
                               rtol=3e-3, atol=3e-3)
    np.testing.assert_allclose(np.asarray(logdet), np.asarray(logdet_ref),
                               rtol=3e-3, atol=2e-2)
    print("KERNEL_OK")
</pallas_src>

<mosaic_0001>
module attributes {stable_mosaic.version = 11 : i64} {
  func.func @kernel(%arg0: i32, %arg1: memref<1x4x256xf32, #tpu.memory_space<vmem>>, %arg2: memref<24x256xf32, #tpu.memory_space<vmem>>, %arg3: memref<16x24xbf16, #tpu.memory_space<vmem>>, %arg4: memref<16x1xf32, #tpu.memory_space<vmem>>, %arg5: memref<4x16xbf16, #tpu.memory_space<vmem>>, %arg6: memref<4x1xf32, #tpu.memory_space<vmem>>, %arg7: memref<4x16xbf16, #tpu.memory_space<vmem>>, %arg8: memref<4x1xf32, #tpu.memory_space<vmem>>, %arg9: memref<4x1xf32, #tpu.memory_space<vmem>>, %arg10: memref<4x1xf32, #tpu.memory_space<vmem>>, %arg11: memref<1x4x256xf32, #tpu.memory_space<vmem>>, %arg12: memref<1x4x3xf32, #tpu.memory_space<vmem>>, %arg13: memref<24x256xf32, #tpu.memory_space<vmem>>) attributes {dimension_semantics = [#tpu.dimension_semantics<parallel>], iteration_bounds = array<i64: 2>, scalar_prefetch = 0 : i64, scratch_operands = 1 : i64, tpu.core_type = #tpu.core_type<tc>, window_params = [{transform_indices = @transform_0, window_bounds = array<i64: 1, 4, 256>}, {pipeline_mode = #tpu.pipeline_mode<synchronous>, transform_indices = @transform_1, window_bounds = array<i64: 24, 256>}, {pipeline_mode = #tpu.pipeline_mode<synchronous>, transform_indices = @transform_2, window_bounds = array<i64: 16, 24>}, {pipeline_mode = #tpu.pipeline_mode<synchronous>, transform_indices = @transform_3, window_bounds = array<i64: 16, 1>}, {pipeline_mode = #tpu.pipeline_mode<synchronous>, transform_indices = @transform_4, window_bounds = array<i64: 4, 16>}, {pipeline_mode = #tpu.pipeline_mode<synchronous>, transform_indices = @transform_5, window_bounds = array<i64: 4, 1>}, {pipeline_mode = #tpu.pipeline_mode<synchronous>, transform_indices = @transform_6, window_bounds = array<i64: 4, 16>}, {pipeline_mode = #tpu.pipeline_mode<synchronous>, transform_indices = @transform_7, window_bounds = array<i64: 4, 1>}, {pipeline_mode = #tpu.pipeline_mode<synchronous>, transform_indices = @transform_8, window_bounds = array<i64: 4, 1>}, {pipeline_mode = #tpu.pipeline_mode<synchronous>, transform_indices = @transform_9, window_bounds = array<i64: 4, 1>}, {transform_indices = @transform_10, window_bounds = array<i64: 1, 4, 256>}, {transform_indices = @transform_11, window_bounds = array<i64: 1, 4, 3>}]} {
    %c0 = arith.constant 0 : index
    %c0_0 = arith.constant 0 : index
    %c0_1 = arith.constant 0 : index
    %0 = vector.load %arg1[%c0, %c0_0, %c0_1] : memref<1x4x256xf32, #tpu.memory_space<vmem>>, vector<1x4x256xf32>
    %1 = vector.shape_cast %0 : vector<1x4x256xf32> to vector<4x256xf32>
    %c0_2 = arith.constant 0 : index
    %c0_3 = arith.constant 0 : index
    %2 = vector.load %arg9[%c0_2, %c0_3] : memref<4x1xf32, #tpu.memory_space<vmem>>, vector<4x1xf32>
    %3 = vector.broadcast %2 : vector<4x1xf32> to vector<4x256xf32>
    %4 = arith.mulf %1, %3 : vector<4x256xf32>
    %c0_4 = arith.constant 0 : index
    %c0_5 = arith.constant 0 : index
    %5 = vector.load %arg10[%c0_4, %c0_5] : memref<4x1xf32, #tpu.memory_space<vmem>>, vector<4x1xf32>
    %6 = vector.broadcast %5 : vector<4x1xf32> to vector<4x256xf32>
    %7 = arith.addf %4, %6 : vector<4x256xf32>
    %c33_i32 = arith.constant 33 : i32
    %8 = tpu.dynamic_rotate %7 by %c33_i32 dim 1 : vector<4x256xf32>, i32 -> vector<4x256xf32>
    %c0_6 = arith.constant 0 : index
    %c0_7 = arith.constant 0 : index
    %9 = vector.load %arg13[%c0_6, %c0_7] : memref<24x256xf32, #tpu.memory_space<vmem>>, vector<4x256xf32>
    tpu.vector_store %arg13[%c0_6, %c0_7], %8 {strides = array<i32>} : memref<24x256xf32, #tpu.memory_space<vmem>>, vector<4x256xf32>,
    %c32_i32 = arith.constant 32 : i32
    %10 = tpu.dynamic_rotate %7 by %c32_i32 dim 1 : vector<4x256xf32>, i32 -> vector<4x256xf32>
    %c4 = arith.constant 4 : index
    %c0_8 = arith.constant 0 : index
    %11 = vector.load %arg13[%c4, %c0_8] : memref<24x256xf32, #tpu.memory_space<vmem>>, vector<4x256xf32>
    tpu.vector_store %arg13[%c4, %c0_8], %10 {strides = array<i32>} : memref<24x256xf32, #tpu.memory_space<vmem>>, vector<4x256xf32>,
    %c31_i32 = arith.constant 31 : i32
    %12 = tpu.dynamic_rotate %7 by %c31_i32 dim 1 : vector<4x256xf32>, i32 -> vector<4x256xf32>
    %c8 = arith.constant 8 : index
    %c0_9 = arith.constant 0 : index
    %13 = vector.load %arg13[%c8, %c0_9] : memref<24x256xf32, #tpu.memory_space<vmem>>, vector<4x256xf32>
    tpu.vector_store %arg13[%c8, %c0_9], %12 {strides = array<i32>} : memref<24x256xf32, #tpu.memory_space<vmem>>, vector<4x256xf32>,
    %c17_i32 = arith.constant 17 : i32
    %14 = tpu.dynamic_rotate %7 by %c17_i32 dim 1 : vector<4x256xf32>, i32 -> vector<4x256xf32>
    %c12 = arith.constant 12 : index
    %c0_10 = arith.constant 0 : index
    %15 = vector.load %arg13[%c12, %c0_10] : memref<24x256xf32, #tpu.memory_space<vmem>>, vector<4x256xf32>
    tpu.vector_store %arg13[%c12, %c0_10], %14 {strides = array<i32>} : memref<24x256xf32, #tpu.memory_space<vmem>>, vector<4x256xf32>,
    %c16_i32 = arith.constant 16 : i32
    %16 = tpu.dynamic_rotate %7 by %c16_i32 dim 1 : vector<4x256xf32>, i32 -> vector<4x256xf32>
    %c16 = arith.constant 16 : index
    %c0_11 = arith.constant 0 : index
    %17 = vector.load %arg13[%c16, %c0_11] : memref<24x256xf32, #tpu.memory_space<vmem>>, vector<4x256xf32>
    tpu.vector_store %arg13[%c16, %c0_11], %16 {strides = array<i32>} : memref<24x256xf32, #tpu.memory_space<vmem>>, vector<4x256xf32>,
    %c15_i32 = arith.constant 15 : i32
    %18 = tpu.dynamic_rotate %7 by %c15_i32 dim 1 : vector<4x256xf32>, i32 -> vector<4x256xf32>
    %c20 = arith.constant 20 : index
    %c0_12 = arith.constant 0 : index
    %19 = vector.load %arg13[%c20, %c0_12] : memref<24x256xf32, #tpu.memory_space<vmem>>, vector<4x256xf32>
    tpu.vector_store %arg13[%c20, %c0_12], %18 {strides = array<i32>} : memref<24x256xf32, #tpu.memory_space<vmem>>, vector<4x256xf32>,
    %c0_13 = arith.constant 0 : index
    %c0_14 = arith.constant 0 : index
    %20 = vector.load %arg13[%c0_13, %c0_14] : memref<24x256xf32, #tpu.memory_space<vmem>>, vector<24x256xf32>
    %c0_15 = arith.constant 0 : index
    %c0_16 = arith.constant 0 : index
    %21 = vector.load %arg2[%c0_15, %c0_16] : memref<24x256xf32, #tpu.memory_space<vmem>>, vector<24x256xf32>
    %22 = arith.mulf %20, %21 : vector<24x256xf32>
    %23 = arith.truncf %22 : vector<24x256xf32> to vector<24x256xbf16>
    %c0_17 = arith.constant 0 : index
    %c0_18 = arith.constant 0 : index
    %24 = vector.load %arg3[%c0_17, %c0_18] : memref<16x24xbf16, #tpu.memory_space<vmem>>, vector<16x24xbf16>
    %cst = arith.constant dense<0.000000e+00> : vector<16x256xf32>
    %25 = tpu.matmul %24, %23, %cst {dimension_numbers = #tpu.dot_dimension_numbers<[1], [0], [0], [1], [0, 0, 1, 1], [], []>} : vector<16x24xbf16>, vector<24x256xbf16>, vector<16x256xf32> -> vector<16x256xf32>
    %c0_19 = arith.constant 0 : index
    %c0_20 = arith.constant 0 : index
    %26 = vector.load %arg4[%c0_19, %c0_20] : memref<16x1xf32, #tpu.memory_space<vmem>>, vector<16x1xf32>
    %27 = vector.broadcast %26 : vector<16x1xf32> to vector<16x256xf32>
    %28 = arith.addf %25, %27 : vector<16x256xf32>
    %cst_21 = arith.constant 0.000000e+00 : f32
    %29 = vector.broadcast %cst_21 : f32 to vector<16x256xf32>
    %30 = arith.maximumf %28, %29 : vector<16x256xf32>
    %31 = arith.truncf %30 : vector<16x256xf32> to vector<16x256xbf16>
    %c0_22 = arith.constant 0 : index
    %c0_23 = arith.constant 0 : index
    %32 = vector.load %arg5[%c0_22, %c0_23] : memref<4x16xbf16, #tpu.memory_space<vmem>>, vector<4x16xbf16>
    %cst_24 = arith.constant dense<0.000000e+00> : vector<4x256xf32>
    %33 = tpu.matmul %32, %31, %cst_24 {dimension_numbers = #tpu.dot_dimension_numbers<[1], [0], [0], [1], [0, 0, 1, 1], [], []>} : vector<4x16xbf16>, vector<16x256xbf16>, vector<4x256xf32> -> vector<4x256xf32>
    %c0_25 = arith.constant 0 : index
    %c0_26 = arith.constant 0 : index
    %34 = vector.load %arg6[%c0_25, %c0_26] : memref<4x1xf32, #tpu.memory_space<vmem>>, vector<4x1xf32>
    %35 = vector.broadcast %34 : vector<4x1xf32> to vector<4x256xf32>
    %36 = arith.addf %33, %35 : vector<4x256xf32>
    %c0_27 = arith.constant 0 : index
    %c0_28 = arith.constant 0 : index
    %37 = vector.load %arg7[%c0_27, %c0_28] : memref<4x16xbf16, #tpu.memory_space<vmem>>, vector<4x16xbf16>
    %cst_29 = arith.constant dense<0.000000e+00> : vector<4x256xf32>
    %38 = tpu.matmul %37, %31, %cst_29 {dimension_numbers = #tpu.dot_dimension_numbers<[1], [0], [0], [1], [0, 0, 1, 1], [], []>} : vector<4x16xbf16>, vector<16x256xbf16>, vector<4x256xf32> -> vector<4x256xf32>
    %c0_30 = arith.constant 0 : index
    %c0_31 = arith.constant 0 : index
    %39 = vector.load %arg8[%c0_30, %c0_31] : memref<4x1xf32, #tpu.memory_space<vmem>>, vector<4x1xf32>
    %40 = vector.broadcast %39 : vector<4x1xf32> to vector<4x256xf32>
    %41 = arith.addf %38, %40 : vector<4x256xf32>
    %cst_32 = arith.constant 2.000000e+00 : f32
    %42 = vector.broadcast %cst_32 : f32 to vector<4x256xf32>
    %43 = arith.addf %41, %42 : vector<4x256xf32>
    %cst_33 = arith.constant 0.000000e+00 : f32
    %44 = vector.broadcast %cst_33 : f32 to vector<4x256xf32>
    %45 = arith.minimumf %43, %44 : vector<4x256xf32>
    %46 = math.absf %43 : vector<4x256xf32>
    %cst_34 = arith.constant 0.000000e+00 : f32
    %47 = vector.broadcast %cst_34 : f32 to vector<4x256xf32>
    %48 = arith.subf %47, %46 : vector<4x256xf32>
    %49 = math.exp %48 : vector<4x256xf32>
    %cst_35 = arith.constant 1.000000e+00 : f32
    %50 = vector.broadcast %cst_35 : f32 to vector<4x256xf32>
    %51 = arith.addf %50, %49 : vector<4x256xf32>
    %52 = math.log %51 : vector<4x256xf32>
    %53 = arith.subf %45, %52 : vector<4x256xf32>
    %54 = math.exp %53 : vector<4x256xf32>
    %55 = arith.mulf %54, %7 : vector<4x256xf32>
    %56 = arith.addf %55, %36 : vector<4x256xf32>
    %c0_36 = arith.constant 0 : index
    %c0_37 = arith.constant 0 : index
    %c0_38 = arith.constant 0 : index
    %57 = vector.load %arg11[%c0_36, %c0_37, %c0_38] : memref<1x4x256xf32, #tpu.memory_space<vmem>>, vector<1x4x256xf32>
    %58 = vector.shape_cast %57 : vector<1x4x256xf32> to vector<4x256xf32>
    %59 = vector.shape_cast %56 : vector<4x256xf32> to vector<1x4x256xf32>
    tpu.vector_store %arg11[%c0_36, %c0_37, %c0_38], %59 {strides = array<i32>} : memref<1x4x256xf32, #tpu.memory_space<vmem>>, vector<1x4x256xf32>,
    %cst_39 = arith.constant dense<0.000000e+00> : vector<4xf32>
    %60 = vector.multi_reduction <add>, %56, %cst_39 [1] : vector<4x256xf32> to vector<4xf32>
    %61 = vector.shape_cast %60 : vector<4xf32> to vector<4x1xf32>
    %c0_40 = arith.constant 0 : index
    %c0_41 = arith.constant 0 : index
    %c0_42 = arith.constant 0 : index
    %62 = vector.load %arg12[%c0_40, %c0_41, %c0_42] : memref<1x4x3xf32, #tpu.memory_space<vmem>>, vector<1x4x1xf32>
    %63 = vector.shape_cast %62 : vector<1x4x1xf32> to vector<4x1xf32>
    %64 = vector.shape_cast %61 : vector<4x1xf32> to vector<1x4x1xf32>
    tpu.vector_store %arg12[%c0_40, %c0_41, %c0_42], %64 {strides = array<i32>} : memref<1x4x3xf32, #tpu.memory_space<vmem>>, vector<1x4x1xf32>,
    %65 = arith.mulf %56, %56 : vector<4x256xf32>
    %cst_43 = arith.constant dense<0.000000e+00> : vector<4xf32>
    %66 = vector.multi_reduction <add>, %65, %cst_43 [1] : vector<4x256xf32> to vector<4xf32>
    %67 = vector.shape_cast %66 : vector<4xf32> to vector<4x1xf32>
    %c0_44 = arith.constant 0 : index
    %c0_45 = arith.constant 0 : index
    %c1 = arith.constant 1 : index
    %68 = vector.load %arg12[%c0_44, %c0_45, %c1] : memref<1x4x3xf32, #tpu.memory_space<vmem>>, vector<1x4x1xf32>
    %69 = vector.shape_cast %68 : vector<1x4x1xf32> to vector<4x1xf32>
    %70 = vector.shape_cast %67 : vector<4x1xf32> to vector<1x4x1xf32>
    tpu.vector_store %arg12[%c0_44, %c0_45, %c1], %70 {strides = array<i32>} : memref<1x4x3xf32, #tpu.memory_space<vmem>>, vector<1x4x1xf32>,
    %cst_46 = arith.constant dense<0.000000e+00> : vector<4xf32>
    %71 = vector.multi_reduction <add>, %53, %cst_46 [1] : vector<4x256xf32> to vector<4xf32>
    %72 = vector.shape_cast %71 : vector<4xf32> to vector<4x1xf32>
    %c0_47 = arith.constant 0 : index
    %c0_48 = arith.constant 0 : index
    %c2 = arith.constant 2 : index
    %73 = vector.load %arg12[%c0_47, %c0_48, %c2] : memref<1x4x3xf32, #tpu.memory_space<vmem>>, vector<1x4x1xf32>
    %74 = vector.shape_cast %73 : vector<1x4x1xf32> to vector<4x1xf32>
    %75 = vector.shape_cast %72 : vector<4x1xf32> to vector<1x4x1xf32>
    tpu.vector_store %arg12[%c0_47, %c0_48, %c2], %75 {strides = array<i32>} : memref<1x4x3xf32, #tpu.memory_space<vmem>>, vector<1x4x1xf32>,
    return
  }
  func.func @transform_0(%arg0: i32) -> (i32, i32, i32) {
    %c0_i32 = arith.constant 0 : i32
    %c0_i32_0 = arith.constant 0 : i32
    %c0_i32_1 = arith.constant 0 : i32
    return %arg0, %c0_i32, %c0_i32_0 : i32, i32, i32
  }
  func.func @transform_1(%arg0: i32) -> (i32, i32) {
    %c0_i32 = arith.constant 0 : i32
    %c0_i32_0 = arith.constant 0 : i32
    %c0_i32_1 = arith.constant 0 : i32
    return %c0_i32, %c0_i32_0 : i32, i32
  }
  func.func @transform_2(%arg0: i32) -> (i32, i32) {
    %c0_i32 = arith.constant 0 : i32
    %c0_i32_0 = arith.constant 0 : i32
    %c0_i32_1 = arith.constant 0 : i32
    return %c0_i32, %c0_i32_0 : i32, i32
  }
  func.func @transform_3(%arg0: i32) -> (i32, i32) {
    %c0_i32 = arith.constant 0 : i32
    %c0_i32_0 = arith.constant 0 : i32
    %c0_i32_1 = arith.constant 0 : i32
    return %c0_i32, %c0_i32_0 : i32, i32
  }
  func.func @transform_4(%arg0: i32) -> (i32, i32) {
    %c0_i32 = arith.constant 0 : i32
    %c0_i32_0 = arith.constant 0 : i32
    %c0_i32_1 = arith.constant 0 : i32
    return %c0_i32, %c0_i32_0 : i32, i32
  }
  func.func @transform_5(%arg0: i32) -> (i32, i32) {
    %c0_i32 = arith.constant 0 : i32
    %c0_i32_0 = arith.constant 0 : i32
    %c0_i32_1 = arith.constant 0 : i32
    return %c0_i32, %c0_i32_0 : i32, i32
  }
  func.func @transform_6(%arg0: i32) -> (i32, i32) {
    %c0_i32 = arith.constant 0 : i32
    %c0_i32_0 = arith.constant 0 : i32
    %c0_i32_1 = arith.constant 0 : i32
    return %c0_i32, %c0_i32_0 : i32, i32
  }
  func.func @transform_7(%arg0: i32) -> (i32, i32) {
    %c0_i32 = arith.constant 0 : i32
    %c0_i32_0 = arith.constant 0 : i32
    %c0_i32_1 = arith.constant 0 : i32
    return %c0_i32, %c0_i32_0 : i32, i32
  }
  func.func @transform_8(%arg0: i32) -> (i32, i32) {
    %c0_i32 = arith.constant 0 : i32
    %c0_i32_0 = arith.constant 0 : i32
    %c0_i32_1 = arith.constant 0 : i32
    return %c0_i32, %c0_i32_0 : i32, i32
  }
  func.func @transform_9(%arg0: i32) -> (i32, i32) {
    %c0_i32 = arith.constant 0 : i32
    %c0_i32_0 = arith.constant 0 : i32
    %c0_i32_1 = arith.constant 0 : i32
    return %c0_i32, %c0_i32_0 : i32, i32
  }
  func.func @transform_10(%arg0: i32) -> (i32, i32, i32) {
    %c0_i32 = arith.constant 0 : i32
    %c0_i32_0 = arith.constant 0 : i32
    %c0_i32_1 = arith.constant 0 : i32
    return %arg0, %c0_i32, %c0_i32_0 : i32, i32, i32
  }
  func.func @transform_11(%arg0: i32) -> (i32, i32, i32) {
    %c0_i32 = arith.constant 0 : i32
    %c0_i32_0 = arith.constant 0 : i32
    %c0_i32_1 = arith.constant 0 : i32
    return %arg0, %c0_i32, %c0_i32_0 : i32, i32, i32
  }
}

module attributes {stable_mosaic.version = 11 : i64} {
  func.func @kernel(%arg0: i32, %arg1: memref<1x4x256xf32, #tpu.memory_space<vmem>>, %arg2: memref<24x256xf32, #tpu.memory_space<vmem>>, %arg3: memref<16x24xbf16, #tpu.memory_space<vmem>>, %arg4: memref<16x1xf32, #tpu.memory_space<vmem>>, %arg5: memref<4x16xbf16, #tpu.memory_space<vmem>>, %arg6: memref<4x1xf32, #tpu.memory_space<vmem>>, %arg7: memref<4x16xbf16, #tpu.memory_space<vmem>>, %arg8: memref<4x1xf32, #tpu.memory_space<vmem>>, %arg9: memref<4x1xf32, #tpu.memory_space<vmem>>, %arg10: memref<4x1xf32, #tpu.memory_space<vmem>>, %arg11: memref<1x4x256xf32, #tpu.memory_space<vmem>>, %arg12: memref<1x4x3xf32, #tpu.memory_space<vmem>>, %arg13: memref<24x256xf32, #tpu.memory_space<vmem>>) attributes {dimension_semantics = [#tpu.dimension_semantics<parallel>], iteration_bounds = array<i64: 2>, scalar_prefetch = 0 : i64, scratch_operands = 1 : i64, tpu.core_type = #tpu.core_type<tc>, window_params = [{transform_indices = @transform_0, window_bounds = array<i64: 1, 4, 256>}, {pipeline_mode = #tpu.pipeline_mode<synchronous>, transform_indices = @transform_1, window_bounds = array<i64: 24, 256>}, {pipeline_mode = #tpu.pipeline_mode<synchronous>, transform_indices = @transform_2, window_bounds = array<i64: 16, 24>}, {pipeline_mode = #tpu.pipeline_mode<synchronous>, transform_indices = @transform_3, window_bounds = array<i64: 16, 1>}, {pipeline_mode = #tpu.pipeline_mode<synchronous>, transform_indices = @transform_4, window_bounds = array<i64: 4, 16>}, {pipeline_mode = #tpu.pipeline_mode<synchronous>, transform_indices = @transform_5, window_bounds = array<i64: 4, 1>}, {pipeline_mode = #tpu.pipeline_mode<synchronous>, transform_indices = @transform_6, window_bounds = array<i64: 4, 16>}, {pipeline_mode = #tpu.pipeline_mode<synchronous>, transform_indices = @transform_7, window_bounds = array<i64: 4, 1>}, {pipeline_mode = #tpu.pipeline_mode<synchronous>, transform_indices = @transform_8, window_bounds = array<i64: 4, 1>}, {pipeline_mode = #tpu.pipeline_mode<synchronous>, transform_indices = @transform_9, window_bounds = array<i64: 4, 1>}, {transform_indices = @transform_10, window_bounds = array<i64: 1, 4, 256>}, {transform_indices = @transform_11, window_bounds = array<i64: 1, 4, 3>}]} {
    %c0 = arith.constant 0 : index
    %c0_0 = arith.constant 0 : index
    %c0_1 = arith.constant 0 : index
    %0 = vector.load %arg1[%c0, %c0_0, %c0_1] : memref<1x4x256xf32, #tpu.memory_space<vmem>>, vector<1x4x256xf32>
    %1 = vector.shape_cast %0 : vector<1x4x256xf32> to vector<4x256xf32>
    %c0_2 = arith.constant 0 : index
    %c0_3 = arith.constant 0 : index
    %2 = vector.load %arg9[%c0_2, %c0_3] : memref<4x1xf32, #tpu.memory_space<vmem>>, vector<4x1xf32>
    %3 = vector.broadcast %2 : vector<4x1xf32> to vector<4x256xf32>
    %4 = arith.mulf %1, %3 : vector<4x256xf32>
    %c0_4 = arith.constant 0 : index
    %c0_5 = arith.constant 0 : index
    %5 = vector.load %arg10[%c0_4, %c0_5] : memref<4x1xf32, #tpu.memory_space<vmem>>, vector<4x1xf32>
    %6 = vector.broadcast %5 : vector<4x1xf32> to vector<4x256xf32>
    %7 = arith.addf %4, %6 : vector<4x256xf32>
    %c241_i32 = arith.constant 241 : i32
    %8 = tpu.dynamic_rotate %7 by %c241_i32 dim 1 : vector<4x256xf32>, i32 -> vector<4x256xf32>
    %c0_6 = arith.constant 0 : index
    %c0_7 = arith.constant 0 : index
    %9 = vector.load %arg13[%c0_6, %c0_7] : memref<24x256xf32, #tpu.memory_space<vmem>>, vector<4x256xf32>
    tpu.vector_store %arg13[%c0_6, %c0_7], %8 {strides = array<i32>} : memref<24x256xf32, #tpu.memory_space<vmem>>, vector<4x256xf32>,
    %c240_i32 = arith.constant 240 : i32
    %10 = tpu.dynamic_rotate %7 by %c240_i32 dim 1 : vector<4x256xf32>, i32 -> vector<4x256xf32>
    %c4 = arith.constant 4 : index
    %c0_8 = arith.constant 0 : index
    %11 = vector.load %arg13[%c4, %c0_8] : memref<24x256xf32, #tpu.memory_space<vmem>>, vector<4x256xf32>
    tpu.vector_store %arg13[%c4, %c0_8], %10 {strides = array<i32>} : memref<24x256xf32, #tpu.memory_space<vmem>>, vector<4x256xf32>,
    %c239_i32 = arith.constant 239 : i32
    %12 = tpu.dynamic_rotate %7 by %c239_i32 dim 1 : vector<4x256xf32>, i32 -> vector<4x256xf32>
    %c8 = arith.constant 8 : index
    %c0_9 = arith.constant 0 : index
    %13 = vector.load %arg13[%c8, %c0_9] : memref<24x256xf32, #tpu.memory_space<vmem>>, vector<4x256xf32>
    tpu.vector_store %arg13[%c8, %c0_9], %12 {strides = array<i32>} : memref<24x256xf32, #tpu.memory_space<vmem>>, vector<4x256xf32>,
    %c225_i32 = arith.constant 225 : i32
    %14 = tpu.dynamic_rotate %7 by %c225_i32 dim 1 : vector<4x256xf32>, i32 -> vector<4x256xf32>
    %c12 = arith.constant 12 : index
    %c0_10 = arith.constant 0 : index
    %15 = vector.load %arg13[%c12, %c0_10] : memref<24x256xf32, #tpu.memory_space<vmem>>, vector<4x256xf32>
    tpu.vector_store %arg13[%c12, %c0_10], %14 {strides = array<i32>} : memref<24x256xf32, #tpu.memory_space<vmem>>, vector<4x256xf32>,
    %c224_i32 = arith.constant 224 : i32
    %16 = tpu.dynamic_rotate %7 by %c224_i32 dim 1 : vector<4x256xf32>, i32 -> vector<4x256xf32>
    %c16 = arith.constant 16 : index
    %c0_11 = arith.constant 0 : index
    %17 = vector.load %arg13[%c16, %c0_11] : memref<24x256xf32, #tpu.memory_space<vmem>>, vector<4x256xf32>
    tpu.vector_store %arg13[%c16, %c0_11], %16 {strides = array<i32>} : memref<24x256xf32, #tpu.memory_space<vmem>>, vector<4x256xf32>,
    %c223_i32 = arith.constant 223 : i32
    %18 = tpu.dynamic_rotate %7 by %c223_i32 dim 1 : vector<4x256xf32>, i32 -> vector<4x256xf32>
    %c20 = arith.constant 20 : index
    %c0_12 = arith.constant 0 : index
    %19 = vector.load %arg13[%c20, %c0_12] : memref<24x256xf32, #tpu.memory_space<vmem>>, vector<4x256xf32>
    tpu.vector_store %arg13[%c20, %c0_12], %18 {strides = array<i32>} : memref<24x256xf32, #tpu.memory_space<vmem>>, vector<4x256xf32>,
    %c0_13 = arith.constant 0 : index
    %c0_14 = arith.constant 0 : index
    %20 = vector.load %arg13[%c0_13, %c0_14] : memref<24x256xf32, #tpu.memory_space<vmem>>, vector<24x256xf32>
    %c0_15 = arith.constant 0 : index
    %c0_16 = arith.constant 0 : index
    %21 = vector.load %arg2[%c0_15, %c0_16] : memref<24x256xf32, #tpu.memory_space<vmem>>, vector<24x256xf32>
    %22 = arith.mulf %20, %21 : vector<24x256xf32>
    %23 = arith.truncf %22 : vector<24x256xf32> to vector<24x256xbf16>
    %c0_17 = arith.constant 0 : index
    %c0_18 = arith.constant 0 : index
    %24 = vector.load %arg3[%c0_17, %c0_18] : memref<16x24xbf16, #tpu.memory_space<vmem>>, vector<16x24xbf16>
    %cst = arith.constant dense<0.000000e+00> : vector<16x256xf32>
    %25 = tpu.matmul %24, %23, %cst {dimension_numbers = #tpu.dot_dimension_numbers<[1], [0], [0], [1], [0, 0, 1, 1], [], []>} : vector<16x24xbf16>, vector<24x256xbf16>, vector<16x256xf32> -> vector<16x256xf32>
    %c0_19 = arith.constant 0 : index
    %c0_20 = arith.constant 0 : index
    %26 = vector.load %arg4[%c0_19, %c0_20] : memref<16x1xf32, #tpu.memory_space<vmem>>, vector<16x1xf32>
    %27 = vector.broadcast %26 : vector<16x1xf32> to vector<16x256xf32>
    %28 = arith.addf %25, %27 : vector<16x256xf32>
    %cst_21 = arith.constant 0.000000e+00 : f32
    %29 = vector.broadcast %cst_21 : f32 to vector<16x256xf32>
    %30 = arith.maximumf %28, %29 : vector<16x256xf32>
    %31 = arith.truncf %30 : vector<16x256xf32> to vector<16x256xbf16>
    %c0_22 = arith.constant 0 : index
    %c0_23 = arith.constant 0 : index
    %32 = vector.load %arg5[%c0_22, %c0_23] : memref<4x16xbf16, #tpu.memory_space<vmem>>, vector<4x16xbf16>
    %cst_24 = arith.constant dense<0.000000e+00> : vector<4x256xf32>
    %33 = tpu.matmul %32, %31, %cst_24 {dimension_numbers = #tpu.dot_dimension_numbers<[1], [0], [0], [1], [0, 0, 1, 1], [], []>} : vector<4x16xbf16>, vector<16x256xbf16>, vector<4x256xf32> -> vector<4x256xf32>
    %c0_25 = arith.constant 0 : index
    %c0_26 = arith.constant 0 : index
    %34 = vector.load %arg6[%c0_25, %c0_26] : memref<4x1xf32, #tpu.memory_space<vmem>>, vector<4x1xf32>
    %35 = vector.broadcast %34 : vector<4x1xf32> to vector<4x256xf32>
    %36 = arith.addf %33, %35 : vector<4x256xf32>
    %c0_27 = arith.constant 0 : index
    %c0_28 = arith.constant 0 : index
    %37 = vector.load %arg7[%c0_27, %c0_28] : memref<4x16xbf16, #tpu.memory_space<vmem>>, vector<4x16xbf16>
    %cst_29 = arith.constant dense<0.000000e+00> : vector<4x256xf32>
    %38 = tpu.matmul %37, %31, %cst_29 {dimension_numbers = #tpu.dot_dimension_numbers<[1], [0], [0], [1], [0, 0, 1, 1], [], []>} : vector<4x16xbf16>, vector<16x256xbf16>, vector<4x256xf32> -> vector<4x256xf32>
    %c0_30 = arith.constant 0 : index
    %c0_31 = arith.constant 0 : index
    %39 = vector.load %arg8[%c0_30, %c0_31] : memref<4x1xf32, #tpu.memory_space<vmem>>, vector<4x1xf32>
    %40 = vector.broadcast %39 : vector<4x1xf32> to vector<4x256xf32>
    %41 = arith.addf %38, %40 : vector<4x256xf32>
    %cst_32 = arith.constant 2.000000e+00 : f32
    %42 = vector.broadcast %cst_32 : f32 to vector<4x256xf32>
    %43 = arith.addf %41, %42 : vector<4x256xf32>
    %cst_33 = arith.constant 0.000000e+00 : f32
    %44 = vector.broadcast %cst_33 : f32 to vector<4x256xf32>
    %45 = arith.minimumf %43, %44 : vector<4x256xf32>
    %46 = math.absf %43 : vector<4x256xf32>
    %cst_34 = arith.constant 0.000000e+00 : f32
    %47 = vector.broadcast %cst_34 : f32 to vector<4x256xf32>
    %48 = arith.subf %47, %46 : vector<4x256xf32>
    %49 = math.exp %48 : vector<4x256xf32>
    %cst_35 = arith.constant 1.000000e+00 : f32
    %50 = vector.broadcast %cst_35 : f32 to vector<4x256xf32>
    %51 = arith.addf %50, %49 : vector<4x256xf32>
    %52 = math.log %51 : vector<4x256xf32>
    %53 = arith.subf %45, %52 : vector<4x256xf32>
    %54 = math.exp %53 : vector<4x256xf32>
    %55 = arith.mulf %54, %7 : vector<4x256xf32>
    %56 = arith.addf %55, %36 : vector<4x256xf32>
    %c0_36 = arith.constant 0 : index
    %c0_37 = arith.constant 0 : index
    %c0_38 = arith.constant 0 : index
    %57 = vector.load %arg11[%c0_36, %c0_37, %c0_38] : memref<1x4x256xf32, #tpu.memory_space<vmem>>, vector<1x4x256xf32>
    %58 = vector.shape_cast %57 : vector<1x4x256xf32> to vector<4x256xf32>
    %59 = vector.shape_cast %56 : vector<4x256xf32> to vector<1x4x256xf32>
    tpu.vector_store %arg11[%c0_36, %c0_37, %c0_38], %59 {strides = array<i32>} : memref<1x4x256xf32, #tpu.memory_space<vmem>>, vector<1x4x256xf32>,
    %cst_39 = arith.constant dense<0.000000e+00> : vector<4xf32>
    %60 = vector.multi_reduction <add>, %56, %cst_39 [1] : vector<4x256xf32> to vector<4xf32>
    %61 = vector.shape_cast %60 : vector<4xf32> to vector<4x1xf32>
    %c0_40 = arith.constant 0 : index
    %c0_41 = arith.constant 0 : index
    %c0_42 = arith.constant 0 : index
    %62 = vector.load %arg12[%c0_40, %c0_41, %c0_42] : memref<1x4x3xf32, #tpu.memory_space<vmem>>, vector<1x4x1xf32>
    %63 = vector.shape_cast %62 : vector<1x4x1xf32> to vector<4x1xf32>
    %64 = vector.shape_cast %61 : vector<4x1xf32> to vector<1x4x1xf32>
    tpu.vector_store %arg12[%c0_40, %c0_41, %c0_42], %64 {strides = array<i32>} : memref<1x4x3xf32, #tpu.memory_space<vmem>>, vector<1x4x1xf32>,
    %65 = arith.mulf %56, %56 : vector<4x256xf32>
    %cst_43 = arith.constant dense<0.000000e+00> : vector<4xf32>
    %66 = vector.multi_reduction <add>, %65, %cst_43 [1] : vector<4x256xf32> to vector<4xf32>
    %67 = vector.shape_cast %66 : vector<4xf32> to vector<4x1xf32>
    %c0_44 = arith.constant 0 : index
    %c0_45 = arith.constant 0 : index
    %c1 = arith.constant 1 : index
    %68 = vector.load %arg12[%c0_44, %c0_45, %c1] : memref<1x4x3xf32, #tpu.memory_space<vmem>>, vector<1x4x1xf32>
    %69 = vector.shape_cast %68 : vector<1x4x1xf32> to vector<4x1xf32>
    %70 = vector.shape_cast %67 : vector<4x1xf32> to vector<1x4x1xf32>
    tpu.vector_store %arg12[%c0_44, %c0_45, %c1], %70 {strides = array<i32>} : memref<1x4x3xf32, #tpu.memory_space<vmem>>, vector<1x4x1xf32>,
    %cst_46 = arith.constant dense<0.000000e+00> : vector<4xf32>
    %71 = vector.multi_reduction <add>, %53, %cst_46 [1] : vector<4x256xf32> to vector<4xf32>
    %72 = vector.shape_cast %71 : vector<4xf32> to vector<4x1xf32>
    %c0_47 = arith.constant 0 : index
    %c0_48 = arith.constant 0 : index
    %c2 = arith.constant 2 : index
    %73 = vector.load %arg12[%c0_47, %c0_48, %c2] : memref<1x4x3xf32, #tpu.memory_space<vmem>>, vector<1x4x1xf32>
    %74 = vector.shape_cast %73 : vector<1x4x1xf32> to vector<4x1xf32>
    %75 = vector.shape_cast %72 : vector<4x1xf32> to vector<1x4x1xf32>
    tpu.vector_store %arg12[%c0_47, %c0_48, %c2], %75 {strides = array<i32>} : memref<1x4x3xf32, #tpu.memory_space<vmem>>, vector<1x4x1xf32>,
    return
  }
  func.func @transform_0(%arg0: i32) -> (i32, i32, i32) {
    %c0_i32 = arith.constant 0 : i32
    %c0_i32_0 = arith.constant 0 : i32
    %c0_i32_1 = arith.constant 0 : i32
    return %arg0, %c0_i32, %c0_i32_0 : i32, i32, i32
  }
  func.func @transform_1(%arg0: i32) -> (i32, i32) {
    %c0_i32 = arith.constant 0 : i32
    %c0_i32_0 = arith.constant 0 : i32
    %c0_i32_1 = arith.constant 0 : i32
    return %c0_i32, %c0_i32_0 : i32, i32
  }
  func.func @transform_2(%arg0: i32) -> (i32, i32) {
    %c0_i32 = arith.constant 0 : i32
    %c0_i32_0 = arith.constant 0 : i32
    %c0_i32_1 = arith.constant 0 : i32
    return %c0_i32, %c0_i32_0 : i32, i32
  }
  func.func @transform_3(%arg0: i32) -> (i32, i32) {
    %c0_i32 = arith.constant 0 : i32
    %c0_i32_0 = arith.constant 0 : i32
    %c0_i32_1 = arith.constant 0 : i32
    return %c0_i32, %c0_i32_0 : i32, i32
  }
  func.func @transform_4(%arg0: i32) -> (i32, i32) {
    %c0_i32 = arith.constant 0 : i32
    %c0_i32_0 = arith.constant 0 : i32
    %c0_i32_1 = arith.constant 0 : i32
    return %c0_i32, %c0_i32_0 : i32, i32
  }
  func.func @transform_5(%arg0: i32) -> (i32, i32) {
    %c0_i32 = arith.constant 0 : i32
    %c0_i32_0 = arith.constant 0 : i32
    %c0_i32_1 = arith.constant 0 : i32
    return %c0_i32, %c0_i32_0 : i32, i32
  }
  func.func @transform_6(%arg0: i32) -> (i32, i32) {
    %c0_i32 = arith.constant 0 : i32
    %c0_i32_0 = arith.constant 0 : i32
    %c0_i32_1 = arith.constant 0 : i32
    return %c0_i32, %c0_i32_0 : i32, i32
  }
  func.func @transform_7(%arg0: i32) -> (i32, i32) {
    %c0_i32 = arith.constant 0 : i32
    %c0_i32_0 = arith.constant 0 : i32
    %c0_i32_1 = arith.constant 0 : i32
    return %c0_i32, %c0_i32_0 : i32, i32
  }
  func.func @transform_8(%arg0: i32) -> (i32, i32) {
    %c0_i32 = arith.constant 0 : i32
    %c0_i32_0 = arith.constant 0 : i32
    %c0_i32_1 = arith.constant 0 : i32
    return %c0_i32, %c0_i32_0 : i32, i32
  }
  func.func @transform_9(%arg0: i32) -> (i32, i32) {
    %c0_i32 = arith.constant 0 : i32
    %c0_i32_0 = arith.constant 0 : i32
    %c0_i32_1 = arith.constant 0 : i32
    return %c0_i32, %c0_i32_0 : i32, i32
  }
  func.func @transform_10(%arg0: i32) -> (i32, i32, i32) {
    %c0_i32 = arith.constant 0 : i32
    %c0_i32_0 = arith.constant 0 : i32
    %c0_i32_1 = arith.constant 0 : i32
    return %arg0, %c0_i32, %c0_i32_0 : i32, i32, i32
  }
  func.func @transform_11(%arg0: i32) -> (i32, i32, i32) {
    %c0_i32 = arith.constant 0 : i32
    %c0_i32_0 = arith.constant 0 : i32
    %c0_i32_1 = arith.constant 0 : i32
    return %arg0, %c0_i32, %c0_i32_0 : i32, i32, i32
  }
}

module attributes {stable_mosaic.version = 11 : i64} {
  func.func @kernel(%arg0: i32, %arg1: memref<1x4x256xf32, #tpu.memory_space<vmem>>, %arg2: memref<24x256xf32, #tpu.memory_space<vmem>>, %arg3: memref<16x24xbf16, #tpu.memory_space<vmem>>, %arg4: memref<16x1xf32, #tpu.memory_space<vmem>>, %arg5: memref<4x16xbf16, #tpu.memory_space<vmem>>, %arg6: memref<4x1xf32, #tpu.memory_space<vmem>>, %arg7: memref<4x16xbf16, #tpu.memory_space<vmem>>, %arg8: memref<4x1xf32, #tpu.memory_space<vmem>>, %arg9: memref<4x1xf32, #tpu.memory_space<vmem>>, %arg10: memref<4x1xf32, #tpu.memory_space<vmem>>, %arg11: memref<1x4x256xf32, #tpu.memory_space<vmem>>, %arg12: memref<1x4x3xf32, #tpu.memory_space<vmem>>, %arg13: memref<24x256xf32, #tpu.memory_space<vmem>>) attributes {dimension_semantics = [#tpu.dimension_semantics<parallel>], iteration_bounds = array<i64: 2>, scalar_prefetch = 0 : i64, scratch_operands = 1 : i64, tpu.core_type = #tpu.core_type<tc>, window_params = [{transform_indices = @transform_0, window_bounds = array<i64: 1, 4, 256>}, {pipeline_mode = #tpu.pipeline_mode<synchronous>, transform_indices = @transform_1, window_bounds = array<i64: 24, 256>}, {pipeline_mode = #tpu.pipeline_mode<synchronous>, transform_indices = @transform_2, window_bounds = array<i64: 16, 24>}, {pipeline_mode = #tpu.pipeline_mode<synchronous>, transform_indices = @transform_3, window_bounds = array<i64: 16, 1>}, {pipeline_mode = #tpu.pipeline_mode<synchronous>, transform_indices = @transform_4, window_bounds = array<i64: 4, 16>}, {pipeline_mode = #tpu.pipeline_mode<synchronous>, transform_indices = @transform_5, window_bounds = array<i64: 4, 1>}, {pipeline_mode = #tpu.pipeline_mode<synchronous>, transform_indices = @transform_6, window_bounds = array<i64: 4, 16>}, {pipeline_mode = #tpu.pipeline_mode<synchronous>, transform_indices = @transform_7, window_bounds = array<i64: 4, 1>}, {pipeline_mode = #tpu.pipeline_mode<synchronous>, transform_indices = @transform_8, window_bounds = array<i64: 4, 1>}, {pipeline_mode = #tpu.pipeline_mode<synchronous>, transform_indices = @transform_9, window_bounds = array<i64: 4, 1>}, {transform_indices = @transform_10, window_bounds = array<i64: 1, 4, 256>}, {transform_indices = @transform_11, window_bounds = array<i64: 1, 4, 3>}]} {
    %c0 = arith.constant 0 : index
    %c0_0 = arith.constant 0 : index
    %c0_1 = arith.constant 0 : index
    %0 = vector.load %arg1[%c0, %c0_0, %c0_1] : memref<1x4x256xf32, #tpu.memory_space<vmem>>, vector<1x4x256xf32>
    %1 = vector.shape_cast %0 : vector<1x4x256xf32> to vector<4x256xf32>
    %c0_2 = arith.constant 0 : index
    %c0_3 = arith.constant 0 : index
    %2 = vector.load %arg9[%c0_2, %c0_3] : memref<4x1xf32, #tpu.memory_space<vmem>>, vector<4x1xf32>
    %3 = vector.broadcast %2 : vector<4x1xf32> to vector<4x256xf32>
    %4 = arith.mulf %1, %3 : vector<4x256xf32>
    %c0_4 = arith.constant 0 : index
    %c0_5 = arith.constant 0 : index
    %5 = vector.load %arg10[%c0_4, %c0_5] : memref<4x1xf32, #tpu.memory_space<vmem>>, vector<4x1xf32>
    %6 = vector.broadcast %5 : vector<4x1xf32> to vector<4x256xf32>
    %7 = arith.addf %4, %6 : vector<4x256xf32>
    %c15_i32 = arith.constant 15 : i32
    %8 = tpu.dynamic_rotate %7 by %c15_i32 dim 1 : vector<4x256xf32>, i32 -> vector<4x256xf32>
    %c0_6 = arith.constant 0 : index
    %c0_7 = arith.constant 0 : index
    %9 = vector.load %arg13[%c0_6, %c0_7] : memref<24x256xf32, #tpu.memory_space<vmem>>, vector<4x256xf32>
    tpu.vector_store %arg13[%c0_6, %c0_7], %8 {strides = array<i32>} : memref<24x256xf32, #tpu.memory_space<vmem>>, vector<4x256xf32>,
    %c14_i32 = arith.constant 14 : i32
    %10 = tpu.dynamic_rotate %7 by %c14_i32 dim 1 : vector<4x256xf32>, i32 -> vector<4x256xf32>
    %c4 = arith.constant 4 : index
    %c0_8 = arith.constant 0 : index
    %11 = vector.load %arg13[%c4, %c0_8] : memref<24x256xf32, #tpu.memory_space<vmem>>, vector<4x256xf32>
    tpu.vector_store %arg13[%c4, %c0_8], %10 {strides = array<i32>} : memref<24x256xf32, #tpu.memory_space<vmem>>, vector<4x256xf32>,
    %c255_i32 = arith.constant 255 : i32
    %12 = tpu.dynamic_rotate %7 by %c255_i32 dim 1 : vector<4x256xf32>, i32 -> vector<4x256xf32>
    %c8 = arith.constant 8 : index
    %c0_9 = arith.constant 0 : index
    %13 = vector.load %arg13[%c8, %c0_9] : memref<24x256xf32, #tpu.memory_space<vmem>>, vector<4x256xf32>
    tpu.vector_store %arg13[%c8, %c0_9], %12 {strides = array<i32>} : memref<24x256xf32, #tpu.memory_space<vmem>>, vector<4x256xf32>,
    %c254_i32 = arith.constant 254 : i32
    %14 = tpu.dynamic_rotate %7 by %c254_i32 dim 1 : vector<4x256xf32>, i32 -> vector<4x256xf32>
    %c12 = arith.constant 12 : index
    %c0_10 = arith.constant 0 : index
    %15 = vector.load %arg13[%c12, %c0_10] : memref<24x256xf32, #tpu.memory_space<vmem>>, vector<4x256xf32>
    tpu.vector_store %arg13[%c12, %c0_10], %14 {strides = array<i32>} : memref<24x256xf32, #tpu.memory_space<vmem>>, vector<4x256xf32>,
    %c239_i32 = arith.constant 239 : i32
    %16 = tpu.dynamic_rotate %7 by %c239_i32 dim 1 : vector<4x256xf32>, i32 -> vector<4x256xf32>
    %c16 = arith.constant 16 : index
    %c0_11 = arith.constant 0 : index
    %17 = vector.load %arg13[%c16, %c0_11] : memref<24x256xf32, #tpu.memory_space<vmem>>, vector<4x256xf32>
    tpu.vector_store %arg13[%c16, %c0_11], %16 {strides = array<i32>} : memref<24x256xf32, #tpu.memory_space<vmem>>, vector<4x256xf32>,
    %c238_i32 = arith.constant 238 : i32
    %18 = tpu.dynamic_rotate %7 by %c238_i32 dim 1 : vector<4x256xf32>, i32 -> vector<4x256xf32>
    %c20 = arith.constant 20 : index
    %c0_12 = arith.constant 0 : index
    %19 = vector.load %arg13[%c20, %c0_12] : memref<24x256xf32, #tpu.memory_space<vmem>>, vector<4x256xf32>
    tpu.vector_store %arg13[%c20, %c0_12], %18 {strides = array<i32>} : memref<24x256xf32, #tpu.memory_space<vmem>>, vector<4x256xf32>,
    %c0_13 = arith.constant 0 : index
    %c0_14 = arith.constant 0 : index
    %20 = vector.load %arg13[%c0_13, %c0_14] : memref<24x256xf32, #tpu.memory_space<vmem>>, vector<24x256xf32>
    %c0_15 = arith.constant 0 : index
    %c0_16 = arith.constant 0 : index
    %21 = vector.load %arg2[%c0_15, %c0_16] : memref<24x256xf32, #tpu.memory_space<vmem>>, vector<24x256xf32>
    %22 = arith.mulf %20, %21 : vector<24x256xf32>
    %23 = arith.truncf %22 : vector<24x256xf32> to vector<24x256xbf16>
    %c0_17 = arith.constant 0 : index
    %c0_18 = arith.constant 0 : index
    %24 = vector.load %arg3[%c0_17, %c0_18] : memref<16x24xbf16, #tpu.memory_space<vmem>>, vector<16x24xbf16>
    %cst = arith.constant dense<0.000000e+00> : vector<16x256xf32>
    %25 = tpu.matmul %24, %23, %cst {dimension_numbers = #tpu.dot_dimension_numbers<[1], [0], [0], [1], [0, 0, 1, 1], [], []>} : vector<16x24xbf16>, vector<24x256xbf16>, vector<16x256xf32> -> vector<16x256xf32>
    %c0_19 = arith.constant 0 : index
    %c0_20 = arith.constant 0 : index
    %26 = vector.load %arg4[%c0_19, %c0_20] : memref<16x1xf32, #tpu.memory_space<vmem>>, vector<16x1xf32>
    %27 = vector.broadcast %26 : vector<16x1xf32> to vector<16x256xf32>
    %28 = arith.addf %25, %27 : vector<16x256xf32>
    %cst_21 = arith.constant 0.000000e+00 : f32
    %29 = vector.broadcast %cst_21 : f32 to vector<16x256xf32>
    %30 = arith.maximumf %28, %29 : vector<16x256xf32>
    %31 = arith.truncf %30 : vector<16x256xf32> to vector<16x256xbf16>
    %c0_22 = arith.constant 0 : index
    %c0_23 = arith.constant 0 : index
    %32 = vector.load %arg5[%c0_22, %c0_23] : memref<4x16xbf16, #tpu.memory_space<vmem>>, vector<4x16xbf16>
    %cst_24 = arith.constant dense<0.000000e+00> : vector<4x256xf32>
    %33 = tpu.matmul %32, %31, %cst_24 {dimension_numbers = #tpu.dot_dimension_numbers<[1], [0], [0], [1], [0, 0, 1, 1], [], []>} : vector<4x16xbf16>, vector<16x256xbf16>, vector<4x256xf32> -> vector<4x256xf32>
    %c0_25 = arith.constant 0 : index
    %c0_26 = arith.constant 0 : index
    %34 = vector.load %arg6[%c0_25, %c0_26] : memref<4x1xf32, #tpu.memory_space<vmem>>, vector<4x1xf32>
    %35 = vector.broadcast %34 : vector<4x1xf32> to vector<4x256xf32>
    %36 = arith.addf %33, %35 : vector<4x256xf32>
    %c0_27 = arith.constant 0 : index
    %c0_28 = arith.constant 0 : index
    %37 = vector.load %arg7[%c0_27, %c0_28] : memref<4x16xbf16, #tpu.memory_space<vmem>>, vector<4x16xbf16>
    %cst_29 = arith.constant dense<0.000000e+00> : vector<4x256xf32>
    %38 = tpu.matmul %37, %31, %cst_29 {dimension_numbers = #tpu.dot_dimension_numbers<[1], [0], [0], [1], [0, 0, 1, 1], [], []>} : vector<4x16xbf16>, vector<16x256xbf16>, vector<4x256xf32> -> vector<4x256xf32>
    %c0_30 = arith.constant 0 : index
    %c0_31 = arith.constant 0 : index
    %39 = vector.load %arg8[%c0_30, %c0_31] : memref<4x1xf32, #tpu.memory_space<vmem>>, vector<4x1xf32>
    %40 = vector.broadcast %39 : vector<4x1xf32> to vector<4x256xf32>
    %41 = arith.addf %38, %40 : vector<4x256xf32>
    %cst_32 = arith.constant 2.000000e+00 : f32
    %42 = vector.broadcast %cst_32 : f32 to vector<4x256xf32>
    %43 = arith.addf %41, %42 : vector<4x256xf32>
    %cst_33 = arith.constant 0.000000e+00 : f32
    %44 = vector.broadcast %cst_33 : f32 to vector<4x256xf32>
    %45 = arith.minimumf %43, %44 : vector<4x256xf32>
    %46 = math.absf %43 : vector<4x256xf32>
    %cst_34 = arith.constant 0.000000e+00 : f32
    %47 = vector.broadcast %cst_34 : f32 to vector<4x256xf32>
    %48 = arith.subf %47, %46 : vector<4x256xf32>
    %49 = math.exp %48 : vector<4x256xf32>
    %cst_35 = arith.constant 1.000000e+00 : f32
    %50 = vector.broadcast %cst_35 : f32 to vector<4x256xf32>
    %51 = arith.addf %50, %49 : vector<4x256xf32>
    %52 = math.log %51 : vector<4x256xf32>
    %53 = arith.subf %45, %52 : vector<4x256xf32>
    %54 = math.exp %53 : vector<4x256xf32>
    %55 = arith.mulf %54, %7 : vector<4x256xf32>
    %56 = arith.addf %55, %36 : vector<4x256xf32>
    %c0_36 = arith.constant 0 : index
    %c0_37 = arith.constant 0 : index
    %c0_38 = arith.constant 0 : index
    %57 = vector.load %arg11[%c0_36, %c0_37, %c0_38] : memref<1x4x256xf32, #tpu.memory_space<vmem>>, vector<1x4x256xf32>
    %58 = vector.shape_cast %57 : vector<1x4x256xf32> to vector<4x256xf32>
    %59 = vector.shape_cast %56 : vector<4x256xf32> to vector<1x4x256xf32>
    tpu.vector_store %arg11[%c0_36, %c0_37, %c0_38], %59 {strides = array<i32>} : memref<1x4x256xf32, #tpu.memory_space<vmem>>, vector<1x4x256xf32>,
    %cst_39 = arith.constant dense<0.000000e+00> : vector<4xf32>
    %60 = vector.multi_reduction <add>, %56, %cst_39 [1] : vector<4x256xf32> to vector<4xf32>
    %61 = vector.shape_cast %60 : vector<4xf32> to vector<4x1xf32>
    %c0_40 = arith.constant 0 : index
    %c0_41 = arith.constant 0 : index
    %c0_42 = arith.constant 0 : index
    %62 = vector.load %arg12[%c0_40, %c0_41, %c0_42] : memref<1x4x3xf32, #tpu.memory_space<vmem>>, vector<1x4x1xf32>
    %63 = vector.shape_cast %62 : vector<1x4x1xf32> to vector<4x1xf32>
    %64 = vector.shape_cast %61 : vector<4x1xf32> to vector<1x4x1xf32>
    tpu.vector_store %arg12[%c0_40, %c0_41, %c0_42], %64 {strides = array<i32>} : memref<1x4x3xf32, #tpu.memory_space<vmem>>, vector<1x4x1xf32>,
    %65 = arith.mulf %56, %56 : vector<4x256xf32>
    %cst_43 = arith.constant dense<0.000000e+00> : vector<4xf32>
    %66 = vector.multi_reduction <add>, %65, %cst_43 [1] : vector<4x256xf32> to vector<4xf32>
    %67 = vector.shape_cast %66 : vector<4xf32> to vector<4x1xf32>
    %c0_44 = arith.constant 0 : index
    %c0_45 = arith.constant 0 : index
    %c1 = arith.constant 1 : index
    %68 = vector.load %arg12[%c0_44, %c0_45, %c1] : memref<1x4x3xf32, #tpu.memory_space<vmem>>, vector<1x4x1xf32>
    %69 = vector.shape_cast %68 : vector<1x4x1xf32> to vector<4x1xf32>
    %70 = vector.shape_cast %67 : vector<4x1xf32> to vector<1x4x1xf32>
    tpu.vector_store %arg12[%c0_44, %c0_45, %c1], %70 {strides = array<i32>} : memref<1x4x3xf32, #tpu.memory_space<vmem>>, vector<1x4x1xf32>,
    %cst_46 = arith.constant dense<0.000000e+00> : vector<4xf32>
    %71 = vector.multi_reduction <add>, %53, %cst_46 [1] : vector<4x256xf32> to vector<4xf32>
    %72 = vector.shape_cast %71 : vector<4xf32> to vector<4x1xf32>
    %c0_47 = arith.constant 0 : index
    %c0_48 = arith.constant 0 : index
    %c2 = arith.constant 2 : index
    %73 = vector.load %arg12[%c0_47, %c0_48, %c2] : memref<1x4x3xf32, #tpu.memory_space<vmem>>, vector<1x4x1xf32>
    %74 = vector.shape_cast %73 : vector<1x4x1xf32> to vector<4x1xf32>
    %75 = vector.shape_cast %72 : vector<4x1xf32> to vector<1x4x1xf32>
    tpu.vector_store %arg12[%c0_47, %c0_48, %c2], %75 {strides = array<i32>} : memref<1x4x3xf32, #tpu.memory_space<vmem>>, vector<1x4x1xf32>,
    return
  }
  func.func @transform_0(%arg0: i32) -> (i32, i32, i32) {
    %c0_i32 = arith.constant 0 : i32
    %c0_i32_0 = arith.constant 0 : i32
    %c0_i32_1 = arith.constant 0 : i32
    return %arg0, %c0_i32, %c0_i32_0 : i32, i32, i32
  }
  func.func @transform_1(%arg0: i32) -> (i32, i32) {
    %c0_i32 = arith.constant 0 : i32
    %c0_i32_0 = arith.constant 0 : i32
    %c0_i32_1 = arith.constant 0 : i32
    return %c0_i32, %c0_i32_0 : i32, i32
  }
  func.func @transform_2(%arg0: i32) -> (i32, i32) {
    %c0_i32 = arith.constant 0 : i32
    %c0_i32_0 = arith.constant 0 : i32
    %c0_i32_1 = arith.constant 0 : i32
    return %c0_i32, %c0_i32_0 : i32, i32
  }
  func.func @transform_3(%arg0: i32) -> (i32, i32) {
    %c0_i32 = arith.constant 0 : i32
    %c0_i32_0 = arith.constant 0 : i32
    %c0_i32_1 = arith.constant 0 : i32
    return %c0_i32, %c0_i32_0 : i32, i32
  }
  func.func @transform_4(%arg0: i32) -> (i32, i32) {
    %c0_i32 = arith.constant 0 : i32
    %c0_i32_0 = arith.constant 0 : i32
    %c0_i32_1 = arith.constant 0 : i32
    return %c0_i32, %c0_i32_0 : i32, i32
  }
  func.func @transform_5(%arg0: i32) -> (i32, i32) {
    %c0_i32 = arith.constant 0 : i32
    %c0_i32_0 = arith.constant 0 : i32
    %c0_i32_1 = arith.constant 0 : i32
    return %c0_i32, %c0_i32_0 : i32, i32
  }
  func.func @transform_6(%arg0: i32) -> (i32, i32) {
    %c0_i32 = arith.constant 0 : i32
    %c0_i32_0 = arith.constant 0 : i32
    %c0_i32_1 = arith.constant 0 : i32
    return %c0_i32, %c0_i32_0 : i32, i32
  }
  func.func @transform_7(%arg0: i32) -> (i32, i32) {
    %c0_i32 = arith.constant 0 : i32
    %c0_i32_0 = arith.constant 0 : i32
    %c0_i32_1 = arith.constant 0 : i32
    return %c0_i32, %c0_i32_0 : i32, i32
  }
  func.func @transform_8(%arg0: i32) -> (i32, i32) {
    %c0_i32 = arith.constant 0 : i32
    %c0_i32_0 = arith.constant 0 : i32
    %c0_i32_1 = arith.constant 0 : i32
    return %c0_i32, %c0_i32_0 : i32, i32
  }
  func.func @transform_9(%arg0: i32) -> (i32, i32) {
    %c0_i32 = arith.constant 0 : i32
    %c0_i32_0 = arith.constant 0 : i32
    %c0_i32_1 = arith.constant 0 : i32
    return %c0_i32, %c0_i32_0 : i32, i32
  }
  func.func @transform_10(%arg0: i32) -> (i32, i32, i32) {
    %c0_i32 = arith.constant 0 : i32
    %c0_i32_0 = arith.constant 0 : i32
    %c0_i32_1 = arith.constant 0 : i32
    return %arg0, %c0_i32, %c0_i32_0 : i32, i32, i32
  }
  func.func @transform_11(%arg0: i32) -> (i32, i32, i32) {
    %c0_i32 = arith.constant 0 : i32
    %c0_i32_0 = arith.constant 0 : i32
    %c0_i32_1 = arith.constant 0 : i32
    return %arg0, %c0_i32, %c0_i32_0 : i32, i32, i32
  }
}

module attributes {stable_mosaic.version = 11 : i64} {
  func.func @kernel(%arg0: i32, %arg1: memref<1x4x256xf32, #tpu.memory_space<vmem>>, %arg2: memref<24x256xf32, #tpu.memory_space<vmem>>, %arg3: memref<16x24xbf16, #tpu.memory_space<vmem>>, %arg4: memref<16x1xf32, #tpu.memory_space<vmem>>, %arg5: memref<4x16xbf16, #tpu.memory_space<vmem>>, %arg6: memref<4x1xf32, #tpu.memory_space<vmem>>, %arg7: memref<4x16xbf16, #tpu.memory_space<vmem>>, %arg8: memref<4x1xf32, #tpu.memory_space<vmem>>, %arg9: memref<4x1xf32, #tpu.memory_space<vmem>>, %arg10: memref<4x1xf32, #tpu.memory_space<vmem>>, %arg11: memref<1x4x256xf32, #tpu.memory_space<vmem>>, %arg12: memref<1x4x3xf32, #tpu.memory_space<vmem>>, %arg13: memref<24x256xf32, #tpu.memory_space<vmem>>) attributes {dimension_semantics = [#tpu.dimension_semantics<parallel>], iteration_bounds = array<i64: 2>, scalar_prefetch = 0 : i64, scratch_operands = 1 : i64, tpu.core_type = #tpu.core_type<tc>, window_params = [{transform_indices = @transform_0, window_bounds = array<i64: 1, 4, 256>}, {pipeline_mode = #tpu.pipeline_mode<synchronous>, transform_indices = @transform_1, window_bounds = array<i64: 24, 256>}, {pipeline_mode = #tpu.pipeline_mode<synchronous>, transform_indices = @transform_2, window_bounds = array<i64: 16, 24>}, {pipeline_mode = #tpu.pipeline_mode<synchronous>, transform_indices = @transform_3, window_bounds = array<i64: 16, 1>}, {pipeline_mode = #tpu.pipeline_mode<synchronous>, transform_indices = @transform_4, window_bounds = array<i64: 4, 16>}, {pipeline_mode = #tpu.pipeline_mode<synchronous>, transform_indices = @transform_5, window_bounds = array<i64: 4, 1>}, {pipeline_mode = #tpu.pipeline_mode<synchronous>, transform_indices = @transform_6, window_bounds = array<i64: 4, 16>}, {pipeline_mode = #tpu.pipeline_mode<synchronous>, transform_indices = @transform_7, window_bounds = array<i64: 4, 1>}, {pipeline_mode = #tpu.pipeline_mode<synchronous>, transform_indices = @transform_8, window_bounds = array<i64: 4, 1>}, {pipeline_mode = #tpu.pipeline_mode<synchronous>, transform_indices = @transform_9, window_bounds = array<i64: 4, 1>}, {transform_indices = @transform_10, window_bounds = array<i64: 1, 4, 256>}, {transform_indices = @transform_11, window_bounds = array<i64: 1, 4, 3>}]} {
    %c0 = arith.constant 0 : index
    %c0_0 = arith.constant 0 : index
    %c0_1 = arith.constant 0 : index
    %0 = vector.load %arg1[%c0, %c0_0, %c0_1] : memref<1x4x256xf32, #tpu.memory_space<vmem>>, vector<1x4x256xf32>
    %1 = vector.shape_cast %0 : vector<1x4x256xf32> to vector<4x256xf32>
    %c0_2 = arith.constant 0 : index
    %c0_3 = arith.constant 0 : index
    %2 = vector.load %arg9[%c0_2, %c0_3] : memref<4x1xf32, #tpu.memory_space<vmem>>, vector<4x1xf32>
    %3 = vector.broadcast %2 : vector<4x1xf32> to vector<4x256xf32>
    %4 = arith.mulf %1, %3 : vector<4x256xf32>
    %c0_4 = arith.constant 0 : index
    %c0_5 = arith.constant 0 : index
    %5 = vector.load %arg10[%c0_4, %c0_5] : memref<4x1xf32, #tpu.memory_space<vmem>>, vector<4x1xf32>
    %6 = vector.broadcast %5 : vector<4x1xf32> to vector<4x256xf32>
    %7 = arith.addf %4, %6 : vector<4x256xf32>
    %c18_i32 = arith.constant 18 : i32
    %8 = tpu.dynamic_rotate %7 by %c18_i32 dim 1 : vector<4x256xf32>, i32 -> vector<4x256xf32>
    %c0_6 = arith.constant 0 : index
    %c0_7 = arith.constant 0 : index
    %9 = vector.load %arg13[%c0_6, %c0_7] : memref<24x256xf32, #tpu.memory_space<vmem>>, vector<4x256xf32>
    tpu.vector_store %arg13[%c0_6, %c0_7], %8 {strides = array<i32>} : memref<24x256xf32, #tpu.memory_space<vmem>>, vector<4x256xf32>,
    %c17_i32 = arith.constant 17 : i32
    %10 = tpu.dynamic_rotate %7 by %c17_i32 dim 1 : vector<4x256xf32>, i32 -> vector<4x256xf32>
    %c4 = arith.constant 4 : index
    %c0_8 = arith.constant 0 : index
    %11 = vector.load %arg13[%c4, %c0_8] : memref<24x256xf32, #tpu.memory_space<vmem>>, vector<4x256xf32>
    tpu.vector_store %arg13[%c4, %c0_8], %10 {strides = array<i32>} : memref<24x256xf32, #tpu.memory_space<vmem>>, vector<4x256xf32>,
    %c2_i32 = arith.constant 2 : i32
    %12 = tpu.dynamic_rotate %7 by %c2_i32 dim 1 : vector<4x256xf32>, i32 -> vector<4x256xf32>
    %c8 = arith.constant 8 : index
    %c0_9 = arith.constant 0 : index
    %13 = vector.load %arg13[%c8, %c0_9] : memref<24x256xf32, #tpu.memory_space<vmem>>, vector<4x256xf32>
    tpu.vector_store %arg13[%c8, %c0_9], %12 {strides = array<i32>} : memref<24x256xf32, #tpu.memory_space<vmem>>, vector<4x256xf32>,
    %c1_i32 = arith.constant 1 : i32
    %14 = tpu.dynamic_rotate %7 by %c1_i32 dim 1 : vector<4x256xf32>, i32 -> vector<4x256xf32>
    %c12 = arith.constant 12 : index
    %c0_10 = arith.constant 0 : index
    %15 = vector.load %arg13[%c12, %c0_10] : memref<24x256xf32, #tpu.memory_space<vmem>>, vector<4x256xf32>
    tpu.vector_store %arg13[%c12, %c0_10], %14 {strides = array<i32>} : memref<24x256xf32, #tpu.memory_space<vmem>>, vector<4x256xf32>,
    %c242_i32 = arith.constant 242 : i32
    %16 = tpu.dynamic_rotate %7 by %c242_i32 dim 1 : vector<4x256xf32>, i32 -> vector<4x256xf32>
    %c16 = arith.constant 16 : index
    %c0_11 = arith.constant 0 : index
    %17 = vector.load %arg13[%c16, %c0_11] : memref<24x256xf32, #tpu.memory_space<vmem>>, vector<4x256xf32>
    tpu.vector_store %arg13[%c16, %c0_11], %16 {strides = array<i32>} : memref<24x256xf32, #tpu.memory_space<vmem>>, vector<4x256xf32>,
    %c241_i32 = arith.constant 241 : i32
    %18 = tpu.dynamic_rotate %7 by %c241_i32 dim 1 : vector<4x256xf32>, i32 -> vector<4x256xf32>
    %c20 = arith.constant 20 : index
    %c0_12 = arith.constant 0 : index
    %19 = vector.load %arg13[%c20, %c0_12] : memref<24x256xf32, #tpu.memory_space<vmem>>, vector<4x256xf32>
    tpu.vector_store %arg13[%c20, %c0_12], %18 {strides = array<i32>} : memref<24x256xf32, #tpu.memory_space<vmem>>, vector<4x256xf32>,
    %c0_13 = arith.constant 0 : index
    %c0_14 = arith.constant 0 : index
    %20 = vector.load %arg13[%c0_13, %c0_14] : memref<24x256xf32, #tpu.memory_space<vmem>>, vector<24x256xf32>
    %c0_15 = arith.constant 0 : index
    %c0_16 = arith.constant 0 : index
    %21 = vector.load %arg2[%c0_15, %c0_16] : memref<24x256xf32, #tpu.memory_space<vmem>>, vector<24x256xf32>
    %22 = arith.mulf %20, %21 : vector<24x256xf32>
    %23 = arith.truncf %22 : vector<24x256xf32> to vector<24x256xbf16>
    %c0_17 = arith.constant 0 : index
    %c0_18 = arith.constant 0 : index
    %24 = vector.load %arg3[%c0_17, %c0_18] : memref<16x24xbf16, #tpu.memory_space<vmem>>, vector<16x24xbf16>
    %cst = arith.constant dense<0.000000e+00> : vector<16x256xf32>
    %25 = tpu.matmul %24, %23, %cst {dimension_numbers = #tpu.dot_dimension_numbers<[1], [0], [0], [1], [0, 0, 1, 1], [], []>} : vector<16x24xbf16>, vector<24x256xbf16>, vector<16x256xf32> -> vector<16x256xf32>
    %c0_19 = arith.constant 0 : index
    %c0_20 = arith.constant 0 : index
    %26 = vector.load %arg4[%c0_19, %c0_20] : memref<16x1xf32, #tpu.memory_space<vmem>>, vector<16x1xf32>
    %27 = vector.broadcast %26 : vector<16x1xf32> to vector<16x256xf32>
    %28 = arith.addf %25, %27 : vector<16x256xf32>
    %cst_21 = arith.constant 0.000000e+00 : f32
    %29 = vector.broadcast %cst_21 : f32 to vector<16x256xf32>
    %30 = arith.maximumf %28, %29 : vector<16x256xf32>
    %31 = arith.truncf %30 : vector<16x256xf32> to vector<16x256xbf16>
    %c0_22 = arith.constant 0 : index
    %c0_23 = arith.constant 0 : index
    %32 = vector.load %arg5[%c0_22, %c0_23] : memref<4x16xbf16, #tpu.memory_space<vmem>>, vector<4x16xbf16>
    %cst_24 = arith.constant dense<0.000000e+00> : vector<4x256xf32>
    %33 = tpu.matmul %32, %31, %cst_24 {dimension_numbers = #tpu.dot_dimension_numbers<[1], [0], [0], [1], [0, 0, 1, 1], [], []>} : vector<4x16xbf16>, vector<16x256xbf16>, vector<4x256xf32> -> vector<4x256xf32>
    %c0_25 = arith.constant 0 : index
    %c0_26 = arith.constant 0 : index
    %34 = vector.load %arg6[%c0_25, %c0_26] : memref<4x1xf32, #tpu.memory_space<vmem>>, vector<4x1xf32>
    %35 = vector.broadcast %34 : vector<4x1xf32> to vector<4x256xf32>
    %36 = arith.addf %33, %35 : vector<4x256xf32>
    %c0_27 = arith.constant 0 : index
    %c0_28 = arith.constant 0 : index
    %37 = vector.load %arg7[%c0_27, %c0_28] : memref<4x16xbf16, #tpu.memory_space<vmem>>, vector<4x16xbf16>
    %cst_29 = arith.constant dense<0.000000e+00> : vector<4x256xf32>
    %38 = tpu.matmul %37, %31, %cst_29 {dimension_numbers = #tpu.dot_dimension_numbers<[1], [0], [0], [1], [0, 0, 1, 1], [], []>} : vector<4x16xbf16>, vector<16x256xbf16>, vector<4x256xf32> -> vector<4x256xf32>
    %c0_30 = arith.constant 0 : index
    %c0_31 = arith.constant 0 : index
    %39 = vector.load %arg8[%c0_30, %c0_31] : memref<4x1xf32, #tpu.memory_space<vmem>>, vector<4x1xf32>
    %40 = vector.broadcast %39 : vector<4x1xf32> to vector<4x256xf32>
    %41 = arith.addf %38, %40 : vector<4x256xf32>
    %cst_32 = arith.constant 2.000000e+00 : f32
    %42 = vector.broadcast %cst_32 : f32 to vector<4x256xf32>
    %43 = arith.addf %41, %42 : vector<4x256xf32>
    %cst_33 = arith.constant 0.000000e+00 : f32
    %44 = vector.broadcast %cst_33 : f32 to vector<4x256xf32>
    %45 = arith.minimumf %43, %44 : vector<4x256xf32>
    %46 = math.absf %43 : vector<4x256xf32>
    %cst_34 = arith.constant 0.000000e+00 : f32
    %47 = vector.broadcast %cst_34 : f32 to vector<4x256xf32>
    %48 = arith.subf %47, %46 : vector<4x256xf32>
    %49 = math.exp %48 : vector<4x256xf32>
    %cst_35 = arith.constant 1.000000e+00 : f32
    %50 = vector.broadcast %cst_35 : f32 to vector<4x256xf32>
    %51 = arith.addf %50, %49 : vector<4x256xf32>
    %52 = math.log %51 : vector<4x256xf32>
    %53 = arith.subf %45, %52 : vector<4x256xf32>
    %54 = math.exp %53 : vector<4x256xf32>
    %55 = arith.mulf %54, %7 : vector<4x256xf32>
    %56 = arith.addf %55, %36 : vector<4x256xf32>
    %c0_36 = arith.constant 0 : index
    %c0_37 = arith.constant 0 : index
    %c0_38 = arith.constant 0 : index
    %57 = vector.load %arg11[%c0_36, %c0_37, %c0_38] : memref<1x4x256xf32, #tpu.memory_space<vmem>>, vector<1x4x256xf32>
    %58 = vector.shape_cast %57 : vector<1x4x256xf32> to vector<4x256xf32>
    %59 = vector.shape_cast %56 : vector<4x256xf32> to vector<1x4x256xf32>
    tpu.vector_store %arg11[%c0_36, %c0_37, %c0_38], %59 {strides = array<i32>} : memref<1x4x256xf32, #tpu.memory_space<vmem>>, vector<1x4x256xf32>,
    %cst_39 = arith.constant dense<0.000000e+00> : vector<4xf32>
    %60 = vector.multi_reduction <add>, %56, %cst_39 [1] : vector<4x256xf32> to vector<4xf32>
    %61 = vector.shape_cast %60 : vector<4xf32> to vector<4x1xf32>
    %c0_40 = arith.constant 0 : index
    %c0_41 = arith.constant 0 : index
    %c0_42 = arith.constant 0 : index
    %62 = vector.load %arg12[%c0_40, %c0_41, %c0_42] : memref<1x4x3xf32, #tpu.memory_space<vmem>>, vector<1x4x1xf32>
    %63 = vector.shape_cast %62 : vector<1x4x1xf32> to vector<4x1xf32>
    %64 = vector.shape_cast %61 : vector<4x1xf32> to vector<1x4x1xf32>
    tpu.vector_store %arg12[%c0_40, %c0_41, %c0_42], %64 {strides = array<i32>} : memref<1x4x3xf32, #tpu.memory_space<vmem>>, vector<1x4x1xf32>,
    %65 = arith.mulf %56, %56 : vector<4x256xf32>
    %cst_43 = arith.constant dense<0.000000e+00> : vector<4xf32>
    %66 = vector.multi_reduction <add>, %65, %cst_43 [1] : vector<4x256xf32> to vector<4xf32>
    %67 = vector.shape_cast %66 : vector<4xf32> to vector<4x1xf32>
    %c0_44 = arith.constant 0 : index
    %c0_45 = arith.constant 0 : index
    %c1 = arith.constant 1 : index
    %68 = vector.load %arg12[%c0_44, %c0_45, %c1] : memref<1x4x3xf32, #tpu.memory_space<vmem>>, vector<1x4x1xf32>
    %69 = vector.shape_cast %68 : vector<1x4x1xf32> to vector<4x1xf32>
    %70 = vector.shape_cast %67 : vector<4x1xf32> to vector<1x4x1xf32>
    tpu.vector_store %arg12[%c0_44, %c0_45, %c1], %70 {strides = array<i32>} : memref<1x4x3xf32, #tpu.memory_space<vmem>>, vector<1x4x1xf32>,
    %cst_46 = arith.constant dense<0.000000e+00> : vector<4xf32>
    %71 = vector.multi_reduction <add>, %53, %cst_46 [1] : vector<4x256xf32> to vector<4xf32>
    %72 = vector.shape_cast %71 : vector<4xf32> to vector<4x1xf32>
    %c0_47 = arith.constant 0 : index
    %c0_48 = arith.constant 0 : index
    %c2 = arith.constant 2 : index
    %73 = vector.load %arg12[%c0_47, %c0_48, %c2] : memref<1x4x3xf32, #tpu.memory_space<vmem>>, vector<1x4x1xf32>
    %74 = vector.shape_cast %73 : vector<1x4x1xf32> to vector<4x1xf32>
    %75 = vector.shape_cast %72 : vector<4x1xf32> to vector<1x4x1xf32>
    tpu.vector_store %arg12[%c0_47, %c0_48, %c2], %75 {strides = array<i32>} : memref<1x4x3xf32, #tpu.memory_space<vmem>>, vector<1x4x1xf32>,
    return
  }
  func.func @transform_0(%arg0: i32) -> (i32, i32, i32) {
    %c0_i32 = arith.constant 0 : i32
    %c0_i32_0 = arith.constant 0 : i32
    %c0_i32_1 = arith.constant 0 : i32
    return %arg0, %c0_i32, %c0_i32_0 : i32, i32, i32
  }
  func.func @transform_1(%arg0: i32) -> (i32, i32) {
    %c0_i32 = arith.constant 0 : i32
    %c0_i32_0 = arith.constant 0 : i32
    %c0_i32_1 = arith.constant 0 : i32
    return %c0_i32, %c0_i32_0 : i32, i32
  }
  func.func @transform_2(%arg0: i32) -> (i32, i32) {
    %c0_i32 = arith.constant 0 : i32
    %c0_i32_0 = arith.constant 0 : i32
    %c0_i32_1 = arith.constant 0 : i32
    return %c0_i32, %c0_i32_0 : i32, i32
  }
  func.func @transform_3(%arg0: i32) -> (i32, i32) {
    %c0_i32 = arith.constant 0 : i32
    %c0_i32_0 = arith.constant 0 : i32
    %c0_i32_1 = arith.constant 0 : i32
    return %c0_i32, %c0_i32_0 : i32, i32
  }
  func.func @transform_4(%arg0: i32) -> (i32, i32) {
    %c0_i32 = arith.constant 0 : i32
    %c0_i32_0 = arith.constant 0 : i32
    %c0_i32_1 = arith.constant 0 : i32
    return %c0_i32, %c0_i32_0 : i32, i32
  }
  func.func @transform_5(%arg0: i32) -> (i32, i32) {
    %c0_i32 = arith.constant 0 : i32
    %c0_i32_0 = arith.constant 0 : i32
    %c0_i32_1 = arith.constant 0 : i32
    return %c0_i32, %c0_i32_0 : i32, i32
  }
  func.func @transform_6(%arg0: i32) -> (i32, i32) {
    %c0_i32 = arith.constant 0 : i32
    %c0_i32_0 = arith.constant 0 : i32
    %c0_i32_1 = arith.constant 0 : i32
    return %c0_i32, %c0_i32_0 : i32, i32
  }
  func.func @transform_7(%arg0: i32) -> (i32, i32) {
    %c0_i32 = arith.constant 0 : i32
    %c0_i32_0 = arith.constant 0 : i32
    %c0_i32_1 = arith.constant 0 : i32
    return %c0_i32, %c0_i32_0 : i32, i32
  }
  func.func @transform_8(%arg0: i32) -> (i32, i32) {
    %c0_i32 = arith.constant 0 : i32
    %c0_i32_0 = arith.constant 0 : i32
    %c0_i32_1 = arith.constant 0 : i32
    return %c0_i32, %c0_i32_0 : i32, i32
  }
  func.func @transform_9(%arg0: i32) -> (i32, i32) {
    %c0_i32 = arith.constant 0 : i32
    %c0_i32_0 = arith.constant 0 : i32
    %c0_i32_1 = arith.constant 0 : i32
    return %c0_i32, %c0_i32_0 : i32, i32
  }
  func.func @transform_10(%arg0: i32) -> (i32, i32, i32) {
    %c0_i32 = arith.constant 0 : i32
    %c0_i32_0 = arith.constant 0 : i32
    %c0_i32_1 = arith.constant 0 : i32
    return %arg0, %c0_i32, %c0_i32_0 : i32, i32, i32
  }
  func.func @transform_11(%arg0: i32) -> (i32, i32, i32) {
    %c0_i32 = arith.constant 0 : i32
    %c0_i32_0 = arith.constant 0 : i32
    %c0_i32_1 = arith.constant 0 : i32
    return %arg0, %c0_i32, %c0_i32_0 : i32, i32, i32
  }
}

module attributes {stable_mosaic.version = 11 : i64} {
  func.func @_actnorm_kernel(%arg0: i32, %arg1: memref<1x4x256xf32, #tpu.memory_space<vmem>>, %arg2: memref<4x1xf32, #tpu.memory_space<vmem>>, %arg3: memref<4x1xf32, #tpu.memory_space<vmem>>, %arg4: memref<1x4x256xf32, #tpu.memory_space<vmem>>) attributes {dimension_semantics = [#tpu.dimension_semantics<parallel>], iteration_bounds = array<i64: 2>, scalar_prefetch = 0 : i64, scratch_operands = 0 : i64, tpu.core_type = #tpu.core_type<tc>, window_params = [{transform_indices = @transform_0, window_bounds = array<i64: 1, 4, 256>}, {pipeline_mode = #tpu.pipeline_mode<synchronous>, transform_indices = @transform_1, window_bounds = array<i64: 4, 1>}, {pipeline_mode = #tpu.pipeline_mode<synchronous>, transform_indices = @transform_2, window_bounds = array<i64: 4, 1>}, {transform_indices = @transform_3, window_bounds = array<i64: 1, 4, 256>}]} {
    %c0 = arith.constant 0 : index
    %c0_0 = arith.constant 0 : index
    %c0_1 = arith.constant 0 : index
    %0 = vector.load %arg1[%c0, %c0_0, %c0_1] : memref<1x4x256xf32, #tpu.memory_space<vmem>>, vector<1x4x256xf32>
    %1 = vector.shape_cast %0 : vector<1x4x256xf32> to vector<4x256xf32>
    %c0_2 = arith.constant 0 : index
    %c0_3 = arith.constant 0 : index
    %2 = vector.load %arg2[%c0_2, %c0_3] : memref<4x1xf32, #tpu.memory_space<vmem>>, vector<4x1xf32>
    %3 = vector.broadcast %2 : vector<4x1xf32> to vector<4x256xf32>
    %4 = arith.mulf %1, %3 : vector<4x256xf32>
    %c0_4 = arith.constant 0 : index
    %c0_5 = arith.constant 0 : index
    %5 = vector.load %arg3[%c0_4, %c0_5] : memref<4x1xf32, #tpu.memory_space<vmem>>, vector<4x1xf32>
    %6 = vector.broadcast %5 : vector<4x1xf32> to vector<4x256xf32>
    %7 = arith.addf %4, %6 : vector<4x256xf32>
    %c0_6 = arith.constant 0 : index
    %c0_7 = arith.constant 0 : index
    %c0_8 = arith.constant 0 : index
    %8 = vector.load %arg4[%c0_6, %c0_7, %c0_8] : memref<1x4x256xf32, #tpu.memory_space<vmem>>, vector<1x4x256xf32>
    %9 = vector.shape_cast %8 : vector<1x4x256xf32> to vector<4x256xf32>
    %10 = vector.shape_cast %7 : vector<4x256xf32> to vector<1x4x256xf32>
    tpu.vector_store %arg4[%c0_6, %c0_7, %c0_8], %10 {strides = array<i32>} : memref<1x4x256xf32, #tpu.memory_space<vmem>>, vector<1x4x256xf32>,
    return
  }
  func.func @transform_0(%arg0: i32) -> (i32, i32, i32) {
    %c0_i32 = arith.constant 0 : i32
    %c0_i32_0 = arith.constant 0 : i32
    %c0_i32_1 = arith.constant 0 : i32
    return %arg0, %c0_i32, %c0_i32_0 : i32, i32, i32
  }
  func.func @transform_1(%arg0: i32) -> (i32, i32) {
    %c0_i32 = arith.constant 0 : i32
    %c0_i32_0 = arith.constant 0 : i32
    %c0_i32_1 = arith.constant 0 : i32
    return %c0_i32, %c0_i32_0 : i32, i32
  }
  func.func @transform_2(%arg0: i32) -> (i32, i32) {
    %c0_i32 = arith.constant 0 : i32
    %c0_i32_0 = arith.constant 0 : i32
    %c0_i32_1 = arith.constant 0 : i32
    return %c0_i32, %c0_i32_0 : i32, i32
  }
  func.func @transform_3(%arg0: i32) -> (i32, i32, i32) {
    %c0_i32 = arith.constant 0 : i32
    %c0_i32_0 = arith.constant 0 : i32
    %c0_i32_1 = arith.constant 0 : i32
    return %arg0, %c0_i32, %c0_i32_0 : i32, i32, i32
  }
}

</mosaic_0001>

<llo_original>
// kernel: _lambda_.6
$region0: #{_lambda_.6}
  #allocation0 [shape = 'u32[]', space=smem, size = 0x4, offset = 0x4, fixed_abs, tag = 'smem constant byte address 0x4 - core index']
  #allocation1 [shape = 'u32[72,128]{1,0:T(1,128)}', space=vmem, size = 0x9000, scoped, tag = 'internal scratch']
  #allocation2 [shape = 'f32[24,256]{1,0:T(8,128)}', space=vmem, size = 0x6000, scoped, tag = 'scratch operand']
  %s0 = inlined_call_operand.vmem [shape: f32[2,4,256], index: 0, kind: input, shape index: {}]
  %s1 = inlined_call_operand.vmem [shape: f32[24,256], index: 1, kind: input, shape index: {}]
  %s2 = inlined_call_operand.hbm [shape: bf16[16,24], index: 2, kind: input, shape index: {}]
  %s3 = inlined_call_operand.hbm [shape: f32[16,1], index: 3, kind: input, shape index: {}]
  %s4 = inlined_call_operand.hbm [shape: bf16[4,16], index: 4, kind: input, shape index: {}]
  %s5 = inlined_call_operand.hbm [shape: f32[4,1], index: 5, kind: input, shape index: {}]
  %s6 = inlined_call_operand.hbm [shape: bf16[4,16], index: 6, kind: input, shape index: {}]
  %s7 = inlined_call_operand.hbm [shape: f32[4,1], index: 7, kind: input, shape index: {}]
  %s8 = inlined_call_operand.vmem [shape: f32[4,1], index: 8, kind: input, shape index: {}]
  %s9 = inlined_call_operand.vmem [shape: f32[4,1], index: 9, kind: input, shape index: {}]
  %s10 = inlined_call_operand.vmem [shape: f32[2,4,256], index: 10, kind: output, shape index: {0}]
  %s11 = inlined_call_operand.vmem [shape: f32[2,4,3], index: 11, kind: output, shape index: {1}]
  %12 = xla_tuple %s10, %s11
  %s13 = sld [smem:[#allocation0]]
  $region105: #{_lambda_.6} parent=0
    _
  %s15 = ssub.s32 1, %s13
  %s16 = scalar_select 0, %s15, %s13
  $region1: #{_lambda_.6} parent=0
    #allocation3 [shape = 'u8[4096]{0}', space=vmem, size = 0x1000, scoped, tag = 'input window, operand 2, single buffered']
    #allocation4 [shape = 's32[2]{0}', space=sflag, size = 0x8, scoped, tag = 'scoped memory for _lambda_.6']
    #allocation5 [shape = 'u8[8192]{0}', space=vmem, size = 0x2000, scoped, tag = 'input window, operand 3, single buffered']
    #allocation6 [shape = 's32[1]{0}', space=sflag, size = 0x4, scoped, tag = 'scoped memory for _lambda_.6']
    #allocation7 [shape = 'u8[1024]{0}', space=vmem, size = 0x400, scoped, tag = 'input window, operand 4, single buffered']
    #allocation8 [shape = 'u8[2048]{0}', space=vmem, size = 0x800, scoped, tag = 'input window, operand 5, single buffered']
    #allocation9 [shape = 's32[1]{0}', space=sflag, size = 0x4, scoped, tag = 'scoped memory for _lambda_.6']
    #allocation10 [shape = 'u8[1024]{0}', space=vmem, size = 0x400, scoped, tag = 'input window, operand 6, single buffered']
    #allocation11 [shape = 'u8[2048]{0}', space=vmem, size = 0x800, scoped, tag = 'input window, operand 7, single buffered']
    #allocation12 [shape = 's32[1]{0}', space=sflag, size = 0x4, scoped, tag = 'scoped memory for _lambda_.6']
    %17 = vsyncpa [#allocation4], 0
    %18 = vsyncpa [#allocation6], 0
    %19 = vsyncpa [#allocation9], 0
    %20 = vsyncpa [#allocation12], 0
    loop: start=0, step=1, limit=4
    $region2: #{_lambda_.6} parent=1 // loop_pre_header
      _
    $region3: #{_lambda_.6} parent=1 // loop_header
      %s22 = sphi 0, %s26
      %p23 = scmp.ge.s32.totalorder %s22, 4
      %s32 = sphi 0, %s34
      %s35 = sphi 0, %s32
      %s36 = sphi 0, %s35
      %s52 = sphi 0, %s36
      %s56 = sphi 0, %s56
      %s58 = sphi 0, %s56
      %s59 = sphi 0, %s58
      %s73 = sphi 0, %s59
      %s77 = sphi 0, %s77
      %s79 = sphi 0, %s77
      %s80 = sphi 0, %s79
      %s94 = sphi 0, %s80
      %s98 = sphi 0, %s98
      %s100 = sphi 0, %s98
      %s101 = sphi 0, %s100
      %s115 = sphi 0, %s101
      %s119 = sphi 0, %s119
      %s121 = sphi 0, %s119
      %s122 = sphi 0, %s121
      %s136 = sphi 0, %s122
      %s140 = sphi 0, %s140
      %s142 = sphi 0, %s140
      %s143 = sphi 0, %s142
      %s157 = sphi 0, %s143
      %s161 = sphi 0, %s161
      %s163 = sphi 0, %s161
      %s164 = sphi 0, %s163
      %s178 = sphi 0, %s164
      %s182 = sphi 0, %s182
      %s184 = sphi 0, %s182
      %s185 = sphi 0, %s184
      %s199 = sphi 0, %s185
      %s203 = sphi 0, %s203
      %s205 = sphi 0, %s203
      %s206 = sphi 0, %s205
      %s220 = sphi 0, %s206
      %s224 = sphi 0, %s224
      %s226 = sphi 0, %s224
      %s227 = sphi 0, %s226
      %s241 = sphi 0, %s227
      %s247 = sphi 0, %s249
      %s250 = sphi 0, %s247
      %s251 = sphi 0, %s250
      %s267 = sphi 0, %s251
      %s273 = sphi 0, %s275
      %s276 = sphi 0, %s273
      %s277 = sphi 0, %s276
      %s293 = sphi 0, %s277
    $region4: #{_lambda_.6} parent=1 // loop_header_branch
      %25 = sbr.rel (%p23) target = $region8
    $region5: #{_lambda_.6} parent=1 // loop_body
      %s27 = ssub.s32 %s22, 1
      %s28 = ssub.s32 %s22, 2
      %s29 = sadd.s32 %s22, 1
      %s30 = ssub.s32 %s22, %s29
      %p31 = scmp.eq.s32.totalorder %s30, 0
      %s33 = sadd.s32 %s32, 1
      %s34 = scalar_select %p31, %s32, %s33
      %p37 = pneg %p31
      %p38 = scmp.eq.s32.totalorder %s22, 1
      %p39 = por %p37, %p38
      %p40 = scmp.ne.s32.totalorder %s32, %s35
      %p41 = scmp.eq.s32.totalorder %s22, 0
      %p42 = por %p40, %p41
      %p43 = scmp.ne.s32.totalorder %s32, %s35
      %p44 = scmp.eq.s32.totalorder %s27, 1
      %p45 = por %p43, %p44
      %p46 = scmp.ne.s32.totalorder %s35, %s36
      %p47 = scmp.eq.s32.totalorder %s27, 0
      %p48 = por %p46, %p47
      %p49 = scmp.ne.s32.totalorder %s35, %s36
      %p50 = scmp.eq.s32.totalorder %s28, 1
      %p51 = por %p49, %p50
      %p53 = scmp.ne.s32.totalorder %s36, %s52
      %p54 = scmp.eq.s32.totalorder %s28, 0
      %p55 = por %p53, %p54
      %s57 = sadd.s32 %s56, 1
      %p60 = scmp.eq.s32.totalorder %s22, 1
      %p61 = scmp.ne.s32.totalorder %s56, %s58
      %p62 = scmp.eq.s32.totalorder %s22, 0
      %p63 = por %p61, %p62
      %p64 = scmp.ne.s32.totalorder %s56, %s58
      %p65 = scmp.eq.s32.totalorder %s27, 1
      %p66 = por %p64, %p65
      %p67 = scmp.ne.s32.totalorder %s58, %s59
      %p68 = scmp.eq.s32.totalorder %s27, 0
      %p69 = por %p67, %p68
      %p70 = scmp.ne.s32.totalorder %s58, %s59
      %p71 = scmp.eq.s32.totalorder %s28, 1
      %p72 = por %p70, %p71
      %p74 = scmp.ne.s32.totalorder %s59, %s73
      %p75 = scmp.eq.s32.totalorder %s28, 0
      %p76 = por %p74, %p75
      %s78 = sadd.s32 %s77, 1
      %p81 = scmp.eq.s32.totalorder %s22, 1
      %p82 = scmp.ne.s32.totalorder %s77, %s79
      %p83 = scmp.eq.s32.totalorder %s22, 0
      %p84 = por %p82, %p83
      %p85 = scmp.ne.s32.totalorder %s77, %s79
      %p86 = scmp.eq.s32.totalorder %s27, 1
      %p87 = por %p85, %p86
      %p88 = scmp.ne.s32.totalorder %s79, %s80
      %p89 = scmp.eq.s32.totalorder %s27, 0
      %p90 = por %p88, %p89
      %p91 = scmp.ne.s32.totalorder %s79, %s80
      %p92 = scmp.eq.s32.totalorder %s28, 1
      %p93 = por %p91, %p92
      %p95 = scmp.ne.s32.totalorder %s80, %s94
      %p96 = scmp.eq.s32.totalorder %s28, 0
      %p97 = por %p95, %p96
      %s99 = sadd.s32 %s98, 1
      %p102 = scmp.eq.s32.totalorder %s22, 1
      %p103 = scmp.ne.s32.totalorder %s98, %s100
      %p104 = scmp.eq.s32.totalorder %s22, 0
      %p105 = por %p103, %p104
      %p106 = scmp.ne.s32.totalorder %s98, %s100
      %p107 = scmp.eq.s32.totalorder %s27, 1
      %p108 = por %p106, %p107
      %p109 = scmp.ne.s32.totalorder %s100, %s101
      %p110 = scmp.eq.s32.totalorder %s27, 0
      %p111 = por %p109, %p110
      %p112 = scmp.ne.s32.totalorder %s100, %s101
      %p113 = scmp.eq.s32.totalorder %s28, 1
      %p114 = por %p112, %p113
      %p116 = scmp.ne.s32.totalorder %s101, %s115
      %p117 = scmp.eq.s32.totalorder %s28, 0
      %p118 = por %p116, %p117
      %s120 = sadd.s32 %s119, 1
      %p123 = scmp.eq.s32.totalorder %s22, 1
      %p124 = scmp.ne.s32.totalorder %s119, %s121
      %p125 = scmp.eq.s32.totalorder %s22, 0
      %p126 = por %p124, %p125
      %p127 = scmp.ne.s32.totalorder %s119, %s121
      %p128 = scmp.eq.s32.totalorder %s27, 1
      %p129 = por %p127, %p128
      %p130 = scmp.ne.s32.totalorder %s121, %s122
      %p131 = scmp.eq.s32.totalorder %s27, 0
      %p132 = por %p130, %p131
      %p133 = scmp.ne.s32.totalorder %s121, %s122
      %p134 = scmp.eq.s32.totalorder %s28, 1
      %p135 = por %p133, %p134
      %p137 = scmp.ne.s32.totalorder %s122, %s136
      %p138 = scmp.eq.s32.totalorder %s28, 0
      %p139 = por %p137, %p138
      %s141 = sadd.s32 %s140, 1
      %p144 = scmp.eq.s32.totalorder %s22, 1
      %p145 = scmp.ne.s32.totalorder %s140, %s142
      %p146 = scmp.eq.s32.totalorder %s22, 0
      %p147 = por %p145, %p146
      %p148 = scmp.ne.s32.totalorder %s140, %s142
      %p149 = scmp.eq.s32.totalorder %s27, 1
      %p150 = por %p148, %p149
      %p151 = scmp.ne.s32.totalorder %s142, %s143
      %p152 = scmp.eq.s32.totalorder %s27, 0
      %p153 = por %p151, %p152
      %p154 = scmp.ne.s32.totalorder %s142, %s143
      %p155 = scmp.eq.s32.totalorder %s28, 1
      %p156 = por %p154, %p155
      %p158 = scmp.ne.s32.totalorder %s143, %s157
      %p159 = scmp.eq.s32.totalorder %s28, 0
      %p160 = por %p158, %p159
      %s162 = sadd.s32 %s161, 1
      %p165 = scmp.eq.s32.totalorder %s22, 1
      %p166 = scmp.ne.s32.totalorder %s161, %s163
      %p167 = scmp.eq.s32.totalorder %s22, 0
      %p168 = por %p166, %p167
      %p169 = scmp.ne.s32.totalorder %s161, %s163
      %p170 = scmp.eq.s32.totalorder %s27, 1
      %p171 = por %p169, %p170
      %p172 = scmp.ne.s32.totalorder %s163, %s164
      %p173 = scmp.eq.s32.totalorder %s27, 0
      %p174 = por %p172, %p173
      %p175 = scmp.ne.s32.totalorder %s163, %s164
      %p176 = scmp.eq.s32.totalorder %s28, 1
      %p177 = por %p175, %p176
      %p179 = scmp.ne.s32.totalorder %s164, %s178
      %p180 = scmp.eq.s32.totalorder %s28, 0
      %p181 = por %p179, %p180
      %s183 = sadd.s32 %s182, 1
      %p186 = scmp.eq.s32.totalorder %s22, 1
      %p187 = scmp.ne.s32.totalorder %s182, %s184
      %p188 = scmp.eq.s32.totalorder %s22, 0
      %p189 = por %p187, %p188
      %p190 = scmp.ne.s32.totalorder %s182, %s184
      %p191 = scmp.eq.s32.totalorder %s27, 1
      %p192 = por %p190, %p191
      %p193 = scmp.ne.s32.totalorder %s184, %s185
      %p194 = scmp.eq.s32.totalorder %s27, 0
      %p195 = por %p193, %p194
      %p196 = scmp.ne.s32.totalorder %s184, %s185
      %p197 = scmp.eq.s32.totalorder %s28, 1
      %p198 = por %p196, %p197
      %p200 = scmp.ne.s32.totalorder %s185, %s199
      %p201 = scmp.eq.s32.totalorder %s28, 0
      %p202 = por %p200, %p201
      %s204 = sadd.s32 %s203, 1
      %p207 = scmp.eq.s32.totalorder %s22, 1
      %p208 = scmp.ne.s32.totalorder %s203, %s205
      %p209 = scmp.eq.s32.totalorder %s22, 0
      %p210 = por %p208, %p209
      %p211 = scmp.ne.s32.totalorder %s203, %s205
      %p212 = scmp.eq.s32.totalorder %s27, 1
      %p213 = por %p211, %p212
      %p214 = scmp.ne.s32.totalorder %s205, %s206
      %p215 = scmp.eq.s32.totalorder %s27, 0
      %p216 = por %p214, %p215
      %p217 = scmp.ne.s32.totalorder %s205, %s206
      %p218 = scmp.eq.s32.totalorder %s28, 1
      %p219 = por %p217, %p218
      %p221 = scmp.ne.s32.totalorder %s206, %s220
      %p222 = scmp.eq.s32.totalorder %s28, 0
      %p223 = por %p221, %p222
      %s225 = sadd.s32 %s224, 1
      %p228 = scmp.eq.s32.totalorder %s22, 1
      %p229 = scmp.ne.s32.totalorder %s224, %s226
      %p230 = scmp.eq.s32.totalorder %s22, 0
      %p231 = por %p229, %p230
      %p232 = scmp.ne.s32.totalorder %s224, %s226
      %p233 = scmp.eq.s32.totalorder %s27, 1
      %p234 = por %p232, %p233
      %p235 = scmp.ne.s32.totalorder %s226, %s227
      %p236 = scmp.eq.s32.totalorder %s27, 0
      %p237 = por %p235, %p236
      %p238 = scmp.ne.s32.totalorder %s226, %s227
      %p239 = scmp.eq.s32.totalorder %s28, 1
      %p240 = por %p238, %p239
      %p242 = scmp.ne.s32.totalorder %s227, %s241
      %p243 = scmp.eq.s32.totalorder %s28, 0
      %p244 = por %p242, %p243
      %s245 = ssub.s32 %s22, %s29
      %p246 = scmp.eq.s32.totalorder %s245, 0
      %s248 = sadd.s32 %s247, 1
      %s249 = scalar_select %p246, %s247, %s248
      %p252 = pneg %p246
      %p253 = scmp.eq.s32.totalorder %s22, 1
      %p254 = por %p252, %p253
      %p255 = scmp.ne.s32.totalorder %s247, %s250
      %p256 = scmp.eq.s32.totalorder %s22, 0
      %p257 = por %p255, %p256
      %p258 = scmp.ne.s32.totalorder %s247, %s250
      %p259 = scmp.eq.s32.totalorder %s27, 1
      %p260 = por %p258, %p259
      %p261 = scmp.ne.s32.totalorder %s250, %s251
      %p262 = scmp.eq.s32.totalorder %s27, 0
      %p263 = por %p261, %p262
      %p264 = scmp.ne.s32.totalorder %s250, %s251
      %p265 = scmp.eq.s32.totalorder %s28, 1
      %p266 = por %p264, %p265
      %p268 = scmp.ne.s32.totalorder %s251, %s267
      %p269 = scmp.eq.s32.totalorder %s28, 0
      %p270 = por %p268, %p269
      %s271 = ssub.s32 %s22, %s29
      %p272 = scmp.eq.s32.totalorder %s271, 0
      %s274 = sadd.s32 %s273, 1
      %s275 = scalar_select %p272, %s273, %s274
      %p278 = pneg %p272
      %p279 = scmp.eq.s32.totalorder %s22, 1
      %p280 = por %p278, %p279
      %p281 = scmp.ne.s32.totalorder %s273, %s276
      %p282 = scmp.eq.s32.totalorder %s22, 0
      %p283 = por %p281, %p282
      %p284 = scmp.ne.s32.totalorder %s273, %s276
      %p285 = scmp.eq.s32.totalorder %s27, 1
      %p286 = por %p284, %p285
      %p287 = scmp.ne.s32.totalorder %s276, %s277
      %p288 = scmp.eq.s32.totalorder %s27, 0
      %p289 = por %p287, %p288
      %p290 = scmp.ne.s32.totalorder %s276, %s277
      %p291 = scmp.eq.s32.totalorder %s28, 1
      %p292 = por %p290, %p291
      %p294 = scmp.ne.s32.totalorder %s277, %s293
      %p295 = scmp.eq.s32.totalorder %s28, 0
      %p296 = por %p294, %p295
      %p297 = scmp.le.s32.totalorder 1, %s22
      %p298 = scmp.lt.s32.totalorder %s22, 3
      %p299 = pnand %p297, %p298
      %p300 = pneg %p299
      // Predicated region
      $region9: #{_lambda_.6} parent=5 // pred_check
        _
      $region10: #{_lambda_.6} parent=5 // pred_check_branch
        %302 = sbr.rel (%p299) target = $region12
      $region11: #{_lambda_.6} parent=5 // pred_region
        %s303 = ssub.s32 %s22, 1
        // Predicated region
        $region13: #{_lambda_.6} parent=11 // pred_check
          %p304 = pneg %p69
        $region14: #{_lambda_.6} parent=11 // pred_check_branch
          %306 = sbr.rel (%p304) target = $region16
        $region15: #{_lambda_.6} parent=11 // pred_region
          _
        $region16: #{_lambda_.6} parent=11 // pred_fallthru
          _
        // Predicated region
        $region17: #{_lambda_.6} parent=11 // pred_check
          %p307 = pneg %p90
        $region18: #{_lambda_.6} parent=11 // pred_check_branch
          %309 = sbr.rel (%p307) target = $region20
        $region19: #{_lambda_.6} parent=11 // pred_region
          %311 = vsyncadd [#allocation4], 0
          %s312 = sshll.u32 %s2, 4
          %s313 = int_to_ptr.hbm [resolvable:$true] %s312
          %s314 = sshll.u32 [#allocation3], 4
          %s315 = int_to_ptr.vmem [resolvable:$true] %s314
          %320 = dma.hbm_to_vmem [thread:$0]  %s313, 128, %s315, [#allocation4], 64, 64, 4
        $region20: #{_lambda_.6} parent=11 // pred_fallthru
          _
        // Predicated region
        $region21: #{_lambda_.6} parent=11 // pred_check
          %p321 = pneg %p111
        $region22: #{_lambda_.6} parent=11 // pred_check_branch
          %323 = sbr.rel (%p321) target = $region24
        $region23: #{_lambda_.6} parent=11 // pred_region
          %325 = vsyncadd [#allocation6], 0
          %s326 = sshll.u32 %s3, 4
          %s327 = int_to_ptr.hbm [resolvable:$true] %s326
          %s328 = sshll.u32 [#allocation5], 4
          %s329 = int_to_ptr.vmem [resolvable:$true] %s328
          %334 = dma.hbm_to_vmem [thread:$0]  %s327, 256, %s329, [#allocation6], 128, 128, 8
        $region24: #{_lambda_.6} parent=11 // pred_fallthru
          _
        // Predicated region
        $region25: #{_lambda_.6} parent=11 // pred_check
          %p335 = pneg %p132
        $region26: #{_lambda_.6} parent=11 // pred_check_branch
          %337 = sbr.rel (%p335) target = $region28
        $region27: #{_lambda_.6} parent=11 // pred_region
          %339 = vsyncadd [#allocation6], 0
          %s341 = sshll.u32 %s4, 4
          %s342 = int_to_ptr.hbm [resolvable:$true] %s341
          %s343 = sshll.u32 [#allocation7], 4
          %s344 = int_to_ptr.vmem [resolvable:$true] %s343
          %346 = dma.hbm_to_vmem [thread:$0]  %s342, 32, %s344, [#allocation6]
        $region28: #{_lambda_.6} parent=11 // pred_fallthru
          _
        // Predicated region
        $region29: #{_lambda_.6} parent=11 // pred_check
          %p347 = pneg %p153
        $region30: #{_lambda_.6} parent=11 // pred_check_branch
          %349 = sbr.rel (%p347) target = $region32
        $region31: #{_lambda_.6} parent=11 // pred_region
          %351 = vsyncadd [#allocation9], 0
          %s353 = sshll.u32 %s5, 4
          %s354 = int_to_ptr.hbm [resolvable:$true] %s353
          %s355 = sshll.u32 [#allocation8], 4
          %s356 = int_to_ptr.vmem [resolvable:$true] %s355
          %358 = dma.hbm_to_vmem [thread:$0]  %s354, 64, %s356, [#allocation9]
        $region32: #{_lambda_.6} parent=11 // pred_fallthru
          _
        // Predicated region
        $region33: #{_lambda_.6} parent=11 // pred_check
          %p359 = pneg %p174
        $region34: #{_lambda_.6} parent=11 // pred_check_branch
          %361 = sbr.rel (%p359) target = $region36
        $region35: #{_lambda_.6} parent=11 // pred_region
          %363 = vsyncadd [#allocation9], 0
          %s365 = sshll.u32 %s6, 4
          %s366 = int_to_ptr.hbm [resolvable:$true] %s365
          %s367 = sshll.u32 [#allocation10], 4
          %s368 = int_to_ptr.vmem [resolvable:$true] %s367
          %370 = dma.hbm_to_vmem [thread:$0]  %s366, 32, %s368, [#allocation9]
        $region36: #{_lambda_.6} parent=11 // pred_fallthru
          _
        // Predicated region
        $region37: #{_lambda_.6} parent=11 // pred_check
          %p371 = pneg %p195
        $region38: #{_lambda_.6} parent=11 // pred_check_branch
          %373 = sbr.rel (%p371) target = $region40
        $region39: #{_lambda_.6} parent=11 // pred_region
          %375 = vsyncadd [#allocation12], 0
          %s377 = sshll.u32 %s7, 4
          %s378 = int_to_ptr.hbm [resolvable:$true] %s377
          %s379 = sshll.u32 [#allocation11], 4
          %s380 = int_to_ptr.vmem [resolvable:$true] %s379
          %382 = dma.hbm_to_vmem [thread:$0]  %s378, 64, %s380, [#allocation12]
        $region40: #{_lambda_.6} parent=11 // pred_fallthru
          _
        // Predicated region
        $region41: #{_lambda_.6} parent=11 // pred_check
          %p383 = pneg %p216
        $region42: #{_lambda_.6} parent=11 // pred_check_branch
          %385 = sbr.rel (%p383) target = $region44
        $region43: #{_lambda_.6} parent=11 // pred_region
          _
        $region44: #{_lambda_.6} parent=11 // pred_fallthru
          _
        // Predicated region
        $region45: #{_lambda_.6} parent=11 // pred_check
          %p386 = pneg %p237
        $region46: #{_lambda_.6} parent=11 // pred_check_branch
          %388 = sbr.rel (%p386) target = $region48
        $region47: #{_lambda_.6} parent=11 // pred_region
          _
        $region48: #{_lambda_.6} parent=11 // pred_fallthru
          _
      $region12: #{_lambda_.6} parent=5 // pred_fallthru
        _
      %p389 = scmp.lt.s32.totalorder %s22, 2
      // Predicated region
      $region49: #{_lambda_.6} parent=5 // pred_check
        %p390 = pneg %p389
      $region50: #{_lambda_.6} parent=5 // pred_check_branch
        %392 = sbr.rel (%p390) target = $region52
      $region51: #{_lambda_.6} parent=5 // pred_region
        // Predicated region
        $region53: #{_lambda_.6} parent=51 // pred_check
          %p393 = pneg %p42
        $region54: #{_lambda_.6} parent=51 // pred_check_branch
          %395 = sbr.rel (%p393) target = $region56
        $region55: #{_lambda_.6} parent=51 // pred_region
          %p396 = scmp.lt.s32.totalorder %s22, 1
          %s397 = scalar_select %p396, %s22, 1
          %s398 = smul.addr %s397, 2
          %s399 = smul.addr %s398, 4
          %s400 = scalar_lea.vmem %s0, %s399
        $region56: #{_lambda_.6} parent=51 // pred_fallthru
          _
      $region52: #{_lambda_.6} parent=5 // pred_fallthru
        _
      %p401 = scmp.le.s32.totalorder 1, %s22
      %p402 = scmp.lt.s32.totalorder %s22, 3
      %p403 = pnand %p401, %p402
      %p404 = pneg %p403
      // Predicated region
      $region57: #{_lambda_.6} parent=5 // pred_check
        _
      $region58: #{_lambda_.6} parent=5 // pred_check_branch
        %406 = sbr.rel (%p403) target = $region60
      $region59: #{_lambda_.6} parent=5 // pred_region
        %s407 = ssub.s32 %s22, 1
        // Predicated region
        $region61: #{_lambda_.6} parent=59 // pred_check
          %p408 = pneg %p90
        $region62: #{_lambda_.6} parent=59 // pred_check_branch
          %410 = sbr.rel (%p408) target = $region64
        $region63: #{_lambda_.6} parent=59 // pred_region
          %412 = dma.done [#allocation4], 128
        $region64: #{_lambda_.6} parent=59 // pred_fallthru
          _
        // Predicated region
        $region65: #{_lambda_.6} parent=59 // pred_check
          %p413 = pneg %p111
        $region66: #{_lambda_.6} parent=59 // pred_check_branch
          %415 = sbr.rel (%p413) target = $region68
        $region67: #{_lambda_.6} parent=59 // pred_region
          %417 = dma.done [#allocation6], 256
        $region68: #{_lambda_.6} parent=59 // pred_fallthru
          _
        // Predicated region
        $region69: #{_lambda_.6} parent=59 // pred_check
          %p418 = pneg %p132
        $region70: #{_lambda_.6} parent=59 // pred_check_branch
          %420 = sbr.rel (%p418) target = $region72
        $region71: #{_lambda_.6} parent=59 // pred_region
          %422 = dma.done [#allocation6], 32
        $region72: #{_lambda_.6} parent=59 // pred_fallthru
          _
        // Predicated region
        $region73: #{_lambda_.6} parent=59 // pred_check
          %p423 = pneg %p153
        $region74: #{_lambda_.6} parent=59 // pred_check_branch
          %425 = sbr.rel (%p423) target = $region76
        $region75: #{_lambda_.6} parent=59 // pred_region
          %427 = dma.done [#allocation9], 64
        $region76: #{_lambda_.6} parent=59 // pred_fallthru
          _
        // Predicated region
        $region77: #{_lambda_.6} parent=59 // pred_check
          %p428 = pneg %p174
        $region78: #{_lambda_.6} parent=59 // pred_check_branch
          %430 = sbr.rel (%p428) target = $region80
        $region79: #{_lambda_.6} parent=59 // pred_region
          %432 = dma.done [#allocation9], 32
        $region80: #{_lambda_.6} parent=59 // pred_fallthru
          _
        // Predicated region
        $region81: #{_lambda_.6} parent=59 // pred_check
          %p433 = pneg %p195
        $region82: #{_lambda_.6} parent=59 // pred_check_branch
          %435 = sbr.rel (%p433) target = $region84
        $region83: #{_lambda_.6} parent=59 // pred_region
          %437 = dma.done [#allocation12], 64
        $region84: #{_lambda_.6} parent=59 // pred_fallthru
          _
        %p438 = scmp.lt.s32.totalorder %s27, 1
        %s439 = scalar_select %p438, %s27, 1
        %s440 = smul.addr %s439, 2
        %s441 = smul.addr %s440, 4
        %s442 = scalar_lea.vmem %s0, %s441
        %p443 = pneg %p48
        %p444 = pneg %p45
        %p445 = pneg %p69
        %p446 = pneg %p66
        %p447 = pneg %p90
        %p448 = pneg %p87
        %p449 = pneg %p111
        %p450 = pneg %p108
        %p451 = pneg %p132
        %p452 = pneg %p129
        %p453 = pneg %p153
        %p454 = pneg %p150
        %p455 = pneg %p174
        %p456 = pneg %p171
        %p457 = pneg %p195
        %p458 = pneg %p192
        %p459 = pneg %p216
        %p460 = pneg %p213
        %p461 = pneg %p237
        %p462 = pneg %p234
        %p463 = pneg %p263
        %p464 = pneg %p260
        %p465 = scmp.lt.s32.totalorder %s27, 1
        %s466 = scalar_select %p465, %s27, 1
        %s467 = smul.addr %s466, 2
        %s468 = smul.addr %s467, 4
        %s469 = scalar_lea.vmem %s10, %s468
        %p470 = pneg %p289
        %p471 = pneg %p286
        %p472 = scmp.lt.s32.totalorder %s27, 1
        %s473 = scalar_select %p472, %s27, 1
        %s474 = smul.addr %s473, 4
        %s475 = scalar_lea.vmem %s11, %s474
        %p476 = scmp.lt.s32.totalorder %s27, 1
        %s477 = scalar_select %p476, %s27, 1
        %s478 = smul.addr %s477, 2
        %s479 = smul.addr %s478, 4
        %s480 = scalar_lea.vmem %s0, %s479
        %p481 = scmp.lt.s32.totalorder %s27, 1
        %s482 = scalar_select %p481, %s27, 1
        %s483 = smul.addr %s482, 2
        %s484 = smul.addr %s483, 4
        %s485 = scalar_lea.vmem %s10, %s484
        %p486 = scmp.lt.s32.totalorder %s27, 1
        %s487 = scalar_select %p486, %s27, 1
        %s488 = smul.addr %s487, 4
        %s489 = scalar_lea.vmem %s11, %s488
        %v491 = vld [vmem:[%s480] sm:$0xff]
        %v492 = vld [vmem:[%s8] sm:$0xf]
        %494 = vset.pattern.permute.xlu0 0
        %495 = vperm.xlu0 %494, %v492
        %v496 = vpop.permute.xlu0 %495
        %v498 = vunpack.c.l.s4 839922192
        %v499 = vunpack.c.0.s8 %v498
        %v500 = vperm.slane %v496, %v499
        %v502 = vmul.f32 %v491, %v500
        %v503 = vld [vmem:[%s9] sm:$0xf]
        %505 = vset.pattern.permute.xlu0 0
        %506 = vperm.xlu0 %505, %v503
        %v507 = vpop.permute.xlu0 %506
        %v509 = vunpack.c.l.s4 839922192
        %v510 = vunpack.c.0.s8 %v509
        %v511 = vperm.slane %v507, %v510
        %v513 = vadd.f32 %v502, %v511
        %515 = vst [vmem:[#allocation1] ss:$2 sm:$0xff] %v513
        %v516 = vld.sshfl [vmem:[#allocation1] sm:$0xff pattern:$0x75316420]
        %v517 = vld.sshfl [vmem:[#allocation1 + $0x8] sm:$0xff pattern:$0x75316420]
        %520 = vrot.lane.b32.xlu0 %v516, 113
        %v521 = vpop.permute.xlu0 %520
        %522 = vrot.lane.b32.xlu0 %v517, 113
        %v523 = vpop.permute.xlu0 %522
        %v524 = vlaneseq
        %v525 = vand.u32 %v524, 127
        %vm526 = vcmp.lt.s32.totalorder %v525, 113
        %v527 = vsel %vm526, %v521, %v523
        %v528 = vsel %vm526, %v523, %v521
        %529 = vst [vmem:[#allocation2] sm:$0xf] %v527
        %530 = vst [vmem:[#allocation2 + $0x8] sm:$0xf] %v528
        %531 = vst [vmem:[#allocation1] ss:$2 sm:$0xff] %v513
        %v532 = vld.sshfl [vmem:[#allocation1] sm:$0xff pattern:$0x75316420]
        %v533 = vld.sshfl [vmem:[#allocation1 + $0x8] sm:$0xff pattern:$0x75316420]
        %536 = vrot.lane.b32.xlu0 %v532, 112
        %v537 = vpop.permute.xlu0 %536
        %538 = vrot.lane.b32.xlu0 %v533, 112
        %v539 = vpop.permute.xlu0 %538
        %vm540 = vcmp.lt.s32.totalorder %v525, 112
        %v541 = vsel %vm540, %v537, %v539
        %v542 = vsel %vm540, %v539, %v537
        %v545 = vrot.slane %v541, 4
        %v546 = vrot.slane %v542, 4
        %549 = vst [vmem:[#allocation2] sm:$0xf0] %v545
        %550 = vst [vmem:[#allocation2 + $0x8] sm:$0xf0] %v546
        %551 = vst [vmem:[#allocation1] ss:$2 sm:$0xff] %v513
        %v552 = vld.sshfl [vmem:[#allocation1] sm:$0xff pattern:$0x75316420]
        %v553 = vld.sshfl [vmem:[#allocation1 + $0x8] sm:$0xff pattern:$0x75316420]
        %556 = vrot.lane.b32.xlu0 %v552, 111
        %v557 = vpop.permute.xlu0 %556
        %558 = vrot.lane.b32.xlu0 %v553, 111
        %v559 = vpop.permute.xlu0 %558
        %vm560 = vcmp.lt.s32.totalorder %v525, 111
        %v561 = vsel %vm560, %v557, %v559
        %v562 = vsel %vm560, %v559, %v557
        %563 = vst [vmem:[#allocation2 + $0x10] sm:$0xf] %v561
        %564 = vst [vmem:[#allocation2 + $0x18] sm:$0xf] %v562
        %565 = vst [vmem:[#allocation1] ss:$2 sm:$0xff] %v513
        %v566 = vld.sshfl [vmem:[#allocation1] sm:$0xff pattern:$0x75316420]
        %v567 = vld.sshfl [vmem:[#allocation1 + $0x8] sm:$0xff pattern:$0x75316420]
        %570 = vrot.lane.b32.xlu0 %v566, 97
        %v571 = vpop.permute.xlu0 %570
        %572 = vrot.lane.b32.xlu0 %v567, 97
        %v573 = vpop.permute.xlu0 %572
        %vm574 = vcmp.lt.s32.totalorder %v525, 97
        %v575 = vsel %vm574, %v571, %v573
        %v576 = vsel %vm574, %v573, %v571
        %v579 = vrot.slane %v575, 4
        %v580 = vrot.slane %v576, 4
        %583 = vst [vmem:[#allocation2 + $0x10] sm:$0xf0] %v579
        %584 = vst [vmem:[#allocation2 + $0x18] sm:$0xf0] %v580
        %585 = vst [vmem:[#allocation1] ss:$2 sm:$0xff] %v513
        %v586 = vld.sshfl [vmem:[#allocation1] sm:$0xff pattern:$0x75316420]
        %v587 = vld.sshfl [vmem:[#allocation1 + $0x8] sm:$0xff pattern:$0x75316420]
        %590 = vrot.lane.b32.xlu0 %v586, 96
        %v591 = vpop.permute.xlu0 %590
        %592 = vrot.lane.b32.xlu0 %v587, 96
        %v593 = vpop.permute.xlu0 %592
        %vm594 = vcmp.lt.s32.totalorder %v525, 96
        %v595 = vsel %vm594, %v591, %v593
        %v596 = vsel %vm594, %v593, %v591
        %597 = vst [vmem:[#allocation2 + $0x20] sm:$0xf] %v595
        %598 = vst [vmem:[#allocation2 + $0x28] sm:$0xf] %v596
        %599 = vst [vmem:[#allocation1] ss:$2 sm:$0xff] %v513
        %v600 = vld.sshfl [vmem:[#allocation1] sm:$0xff pattern:$0x75316420]
        %v601 = vld.sshfl [vmem:[#allocation1 + $0x8] sm:$0xff pattern:$0x75316420]
        %604 = vrot.lane.b32.xlu0 %v600, 95
        %v605 = vpop.permute.xlu0 %604
        %606 = vrot.lane.b32.xlu0 %v601, 95
        %v607 = vpop.permute.xlu0 %606
        %vm608 = vcmp.lt.s32.totalorder %v525, 95
        %v609 = vsel %vm608, %v605, %v607
        %v610 = vsel %vm608, %v607, %v605
        %v613 = vrot.slane %v609, 4
        %v614 = vrot.slane %v610, 4
        %617 = vst [vmem:[#allocation2 + $0x20] sm:$0xf0] %v613
        %618 = vst [vmem:[#allocation2 + $0x28] sm:$0xf0] %v614
        %v619 = vld [vmem:[#allocation2] sm:$0xff]
        %v620 = vld [vmem:[#allocation2 + $0x8] sm:$0xff]
        %v621 = vld [vmem:[#allocation2 + $0x10] sm:$0xff]
        %v622 = vld [vmem:[#allocation2 + $0x18] sm:$0xff]
        %v623 = vld [vmem:[#allocation2 + $0x20] sm:$0xff]
        %v624 = vld [vmem:[#allocation2 + $0x28] sm:$0xff]
        %v625 = vld [vmem:[%s1] sm:$0xff]
        %v626 = vld [vmem:[%s1 + $0x8] sm:$0xff]
        %v627 = vld [vmem:[%s1 + $0x10] sm:$0xff]
        %v628 = vld [vmem:[%s1 + $0x18] sm:$0xff]
        %v629 = vld [vmem:[%s1 + $0x20] sm:$0xff]
        %v630 = vld [vmem:[%s1 + $0x28] sm:$0xff]
        %v631 = vmul.f32 %v619, %v625
        %v632 = vmul.f32 %v620, %v626
        %v633 = vmul.f32 %v621, %v627
        %v634 = vmul.f32 %v622, %v628
        %v635 = vmul.f32 %v623, %v629
        %v636 = vmul.f32 %v624, %v630
        %v637 = vpack.c.bf16 %v633, %v631
        %v638 = vpack.c.bf16 %v634, %v632
        %v639 = vpack.c.bf16 %v635, %v635
        %v640 = vpack.c.bf16 %v636, %v636
        %v641 = vld [vmem:[#allocation3] sm:$0xf]
        %v642 = vld [vmem:[#allocation3 + $0x4] sm:$0xf]
        %v643 = vld [vmem:[#allocation5] sm:$0xff]
        %v644 = vld [vmem:[#allocation5 + $0x8] sm:$0xff]
        %646 = vset.pattern.permute.xlu0 0
        %647 = vperm.xlu0 %646, %v643
        %v648 = vpop.permute.xlu0 %647
        %651 = vset.pattern.permute.xlu0 0
        %652 = vperm.xlu0 %651, %v644
        %v653 = vpop.permute.xlu0 %652
        %v657 = vunpack.c.l.b16 %v641
        %v658 = vunpack.c.l.b16 %v642
        %v659 = vpack.c.b16 %v658, %v657
        %vm660 = vcmask 195584
        %v662 = vsel %vm660, %v659, 0
        %vm664 = vcmask 1043456
        %v666 = vsel %vm664, %v639, 0
        %v669 = vsel %vm664, %v640, 0
        %671 = vmatpush.bf16.msra.mxu0 0
        %672 = vmatpush.bf16.msra.mxu0 0
        %673 = vmatpush.bf16.msra.mxu0 0
        %674 = vmatpush.bf16.msra.mxu0 0
        %675 = vmatpush.bf16.msra.mxu0 0
        %676 = vmatpush.bf16.msra.mxu0 0
        %677 = vmatpush.bf16.msra.mxu0 %v666
        %678 = vmatpush.bf16.msra.mxu0 %v637
        %679 = vmatmul.bf16.gmra.mxu0 %v662
        %v680 = vpop.f32.mrf.mxu0
        %v681 = vadd.f32 %v648, %v680
        %v682 = vpop.f32.mrf.mxu0
        %v683 = vadd.f32 %v653, %v682
        %684 = vdwg.mxu0
        %685 = vmatpush.bf16.msra.mxu0 0
        %686 = vmatpush.bf16.msra.mxu0 0
        %687 = vmatpush.bf16.msra.mxu0 0
        %688 = vmatpush.bf16.msra.mxu0 0
        %689 = vmatpush.bf16.msra.mxu0 0
        %690 = vmatpush.bf16.msra.mxu0 0
        %691 = vmatpush.bf16.msra.mxu0 %v669
        %692 = vmatpush.bf16.msra.mxu0 %v638
        %693 = vmatmul.bf16.gmra.mxu0 %v662
        %v694 = vpop.f32.mrf.mxu0
        %v695 = vadd.f32 %v648, %v694
        %v696 = vpop.f32.mrf.mxu0
        %v697 = vadd.f32 %v653, %v696
        %698 = vdwg.mxu0
        %v699 = vmax.f32 %v681, 0.0
        %v700 = vmax.f32 %v695, 0.0
        %v701 = vmax.f32 %v683, 0.0
        %v702 = vmax.f32 %v697, 0.0
        %v703 = vpack.c.bf16 %v701, %v699
        %v704 = vpack.c.bf16 %v702, %v700
        %v705 = vld [vmem:[#allocation7] sm:$0x3]
        %v706 = vld [vmem:[#allocation8] sm:$0xf]
        %708 = vset.pattern.permute.xlu0 0
        %709 = vperm.xlu0 %708, %v706
        %v710 = vpop.permute.xlu0 %709
        %vm712 = vcmask 130048
        %v714 = vsel %vm712, %v705, 0
        %716 = vmatpush.bf16.msra.mxu0 0
        %717 = vmatpush.bf16.msra.mxu0 0
        %718 = vmatpush.bf16.msra.mxu0 0
        %719 = vmatpush.bf16.msra.mxu0 0
        %720 = vmatpush.bf16.msra.mxu0 0
        %721 = vmatpush.bf16.msra.mxu0 0
        %722 = vmatpush.bf16.msra.mxu0 0
        %723 = vmatpush.bf16.msra.mxu0 %v703
        %724 = vmatmul.bf16.gmra.mxu0 %v714
        %v725 = vpop.f32.mrf.mxu0
        %v726 = vadd.f32 %v710, %v725
        %v727 = vpop.f32.mrf.mxu0
        %728 = vdwg.mxu0
        %729 = vmatpush.bf16.msra.mxu0 0
        %730 = vmatpush.bf16.msra.mxu0 0
        %731 = vmatpush.bf16.msra.mxu0 0
        %732 = vmatpush.bf16.msra.mxu0 0
        %733 = vmatpush.bf16.msra.mxu0 0
        %734 = vmatpush.bf16.msra.mxu0 0
        %735 = vmatpush.bf16.msra.mxu0 0
        %736 = vmatpush.bf16.msra.mxu0 %v704
        %737 = vmatmul.bf16.gmra.mxu0 %v714
        %v738 = vpop.f32.mrf.mxu0
        %v739 = vadd.f32 %v710, %v738
        %v740 = vpop.f32.mrf.mxu0
        %741 = vdwg.mxu0
        %v742 = vld [vmem:[#allocation10] sm:$0x3]
        %v743 = vld [vmem:[#allocation11] sm:$0xf]
        %745 = vset.pattern.permute.xlu0 0
        %746 = vperm.xlu0 %745, %v743
        %v747 = vpop.permute.xlu0 %746
        %v750 = vsel %vm712, %v742, 0
        %752 = vmatpush.bf16.msra.mxu0 0
        %753 = vmatpush.bf16.msra.mxu0 0
        %754 = vmatpush.bf16.msra.mxu0 0
        %755 = vmatpush.bf16.msra.mxu0 0
        %756 = vmatpush.bf16.msra.mxu0 0
        %757 = vmatpush.bf16.msra.mxu0 0
        %758 = vmatpush.bf16.msra.mxu0 0
        %759 = vmatpush.bf16.msra.mxu0 %v703
        %760 = vmatmul.bf16.gmra.mxu0 %v750
        %v761 = vpop.f32.mrf.mxu0
        %v762 = vadd.f32 %v747, %v761
        %v763 = vpop.f32.mrf.mxu0
        %764 = vdwg.mxu0
        %765 = vmatpush.bf16.msra.mxu0 0
        %766 = vmatpush.bf16.msra.mxu0 0
        %767 = vmatpush.bf16.msra.mxu0 0
        %768 = vmatpush.bf16.msra.mxu0 0
        %769 = vmatpush.bf16.msra.mxu0 0
        %770 = vmatpush.bf16.msra.mxu0 0
        %771 = vmatpush.bf16.msra.mxu0 0
        %772 = vmatpush.bf16.msra.mxu0 %v704
        %773 = vmatmul.bf16.gmra.mxu0 %v750
        %v774 = vpop.f32.mrf.mxu0
        %v775 = vadd.f32 %v747, %v774
        %v776 = vpop.f32.mrf.mxu0
        %777 = vdwg.mxu0
        %v778 = vadd.f32 %v762, 2.0
        %v779 = vadd.f32 %v775, 2.0
        %v780 = vmin.f32 %v778, 0.0
        %v781 = vmin.f32 %v779, 0.0
        %v782 = vand.u32 2147483647, %v778
        %v783 = vand.u32 2147483647, %v779
        %v784 = vsub.f32 0.0, %v782
        %v785 = vsub.f32 0.0, %v783
        %v786 = vmul.f32 %v784, 1.442695
        %v787 = vpow.pop %v786
        %v788 = vmul.f32 %v785, 1.442695
        %v789 = vpow.pop %v788
        %v790 = vadd.f32 %v787, 1.0
        %v791 = vadd.f32 %v789, 1.0
        %v792 = vlog2.pop %v790
        %v793 = vmul.f32 %v792, 0.6931472
        %v794 = vlog2.pop %v791
        %v795 = vmul.f32 %v794, 0.6931472
        %v796 = vsub.f32 %v780, %v793
        %v797 = vsub.f32 %v781, %v795
        %v798 = vmul.f32 %v796, 1.442695
        %v799 = vpow.pop %v798
        %v800 = vmul.f32 %v797, 1.442695
        %v801 = vpow.pop %v800
        %802 = vst [vmem:[#allocation1] ss:$2 sm:$0xff] %v513
        %v803 = vld.sshfl [vmem:[#allocation1] sm:$0xff pattern:$0x75316420]
        %v804 = vld.sshfl [vmem:[#allocation1 + $0x8] sm:$0xff pattern:$0x75316420]
        %v807 = vmul.f32 %v799, %v803
        %v808 = vmul.f32 %v801, %v804
        %v809 = vadd.f32 %v807, %v726
        %v810 = vadd.f32 %v808, %v739
        %v813 = vrot.slane %v810, 4
        %v814 = vsel %vm664, %v809, %v813
        %816 = vst [vmem:[%s485] sm:$0xff] %v814
        %v817 = vsel %vm664, %v809, 0.0
        %v818 = vsel %vm664, %v810, 0.0
        %v819 = vadd.f32 %v817, %v818
        %820 = vadd.xlane.f32.xlu0 %v819
        %v821 = vpop.xlane.xlu0 %820
        %vm822 = vcmask 3072
        %823 = vst.msk [vmem:[%s489] sm:$0xf] %vm822, %v821
        %v824 = vmul.f32 %v809, %v809
        %v825 = vmul.f32 %v810, %v810
        %v826 = vsel %vm664, %v824, 0.0
        %v827 = vsel %vm664, %v825, 0.0
        %v828 = vadd.f32 %v826, %v827
        %829 = vadd.xlane.f32.xlu0 %v828
        %v830 = vpop.xlane.xlu0 %829
        %vm831 = vcmask 11272
        %832 = vst.msk [vmem:[%s489] sm:$0xf] %vm831, %v830
        %v833 = vsel %vm664, %v796, 0.0
        %v834 = vsel %vm664, %v797, 0.0
        %v835 = vadd.f32 %v833, %v834
        %836 = vadd.xlane.f32.xlu0 %v835
        %v837 = vpop.xlane.xlu0 %836
        %vm838 = vcmask 19472
        %839 = vst.msk [vmem:[%s489] sm:$0xf] %vm838, %v837
        %p840 = scmp.lt.s32.totalorder %s27, 1
        %s841 = scalar_select %p840, %s27, 1
        %s842 = smul.addr %s841, 2
        %s843 = smul.addr %s842, 4
        %s844 = scalar_lea.vmem %s10, %s843
        %p845 = scmp.lt.s32.totalorder %s27, 1
        %s846 = scalar_select %p845, %s27, 1
        %s847 = smul.addr %s846, 4
        %s848 = scalar_lea.vmem %s11, %s847
        // Predicated region
        $region85: #{_lambda_.6} parent=59 // pred_check
          %p849 = pneg %p260
        $region86: #{_lambda_.6} parent=59 // pred_check_branch
          %851 = sbr.rel (%p849) target = $region88
        $region87: #{_lambda_.6} parent=59 // pred_region
          _
        $region88: #{_lambda_.6} parent=59 // pred_fallthru
          _
        // Predicated region
        $region89: #{_lambda_.6} parent=59 // pred_check
          %p852 = pneg %p286
        $region90: #{_lambda_.6} parent=59 // pred_check_branch
          %854 = sbr.rel (%p852) target = $region92
        $region91: #{_lambda_.6} parent=59 // pred_region
          _
        $region92: #{_lambda_.6} parent=59 // pred_fallthru
          _
      $region60: #{_lambda_.6} parent=5 // pred_fallthru
        _
      %p855 = scmp.le.s32.totalorder 2, %s22
      // Predicated region
      $region93: #{_lambda_.6} parent=5 // pred_check
        %p856 = pneg %p855
      $region94: #{_lambda_.6} parent=5 // pred_check_branch
        %858 = sbr.rel (%p856) target = $region96
      $region95: #{_lambda_.6} parent=5 // pred_region
        %s859 = ssub.s32 %s22, 2
        // Predicated region
        $region97: #{_lambda_.6} parent=95 // pred_check
          %p860 = pneg %p266
        $region98: #{_lambda_.6} parent=95 // pred_check_branch
          %862 = sbr.rel (%p860) target = $region100
        $region99: #{_lambda_.6} parent=95 // pred_region
          %p863 = scmp.lt.s32.totalorder %s28, 1
          %s864 = scalar_select %p863, %s28, 1
          %s865 = smul.addr %s864, 2
          %s866 = smul.addr %s865, 4
          %s867 = scalar_lea.vmem %s10, %s866
        $region100: #{_lambda_.6} parent=95 // pred_fallthru
          _
        // Predicated region
        $region101: #{_lambda_.6} parent=95 // pred_check
          %p868 = pneg %p292
        $region102: #{_lambda_.6} parent=95 // pred_check_branch
          %870 = sbr.rel (%p868) target = $region104
        $region103: #{_lambda_.6} parent=95 // pred_region
          %p871 = scmp.lt.s32.totalorder %s28, 1
          %s872 = scalar_select %p871, %s28, 1
          %s873 = smul.addr %s872, 4
          %s874 = scalar_lea.vmem %s11, %s873
        $region104: #{_lambda_.6} parent=95 // pred_fallthru
          _
      $region96: #{_lambda_.6} parent=5 // pred_fallthru
        _
    $region6: #{_lambda_.6} parent=1 // loop_footer
      %s26 = sadd.s32 1, %s22
    $region7: #{_lambda_.6} parent=1 // loop_footer_branch
      %21 = sbr.rel target = $region3
    $region8: #{_lambda_.6} parent=1 // loop_exit
      _
    %875 = vsyncpa [#allocation4], 1
    %s876 = scalar_lea.sflag [#allocation4], 1
    %877 = vsyncpa %s876, 1
    %878 = vsyncpa [#allocation6], 1
    %879 = vsyncpa [#allocation9], 1
    %880 = vsyncpa [#allocation12], 1

// kernel: _lambda_.5
$region0: #{_lambda_.5}
  #allocation0 [shape = 'u32[]', space=smem, size = 0x4, offset = 0x4, fixed_abs, tag = 'smem constant byte address 0x4 - core index']
  #allocation1 [shape = 'u32[72,128]{1,0:T(1,128)}', space=vmem, size = 0x9000, scoped, tag = 'internal scratch']
  #allocation2 [shape = 'f32[24,256]{1,0:T(8,128)}', space=vmem, size = 0x6000, scoped, tag = 'scratch operand']
  %s0 = inlined_call_operand.vmem [shape: f32[2,4,256], index: 0, kind: input, shape index: {}]
  %s1 = inlined_call_operand.vmem [shape: f32[24,256], index: 1, kind: input, shape index: {}]
  %s2 = inlined_call_operand.hbm [shape: bf16[16,24], index: 2, kind: input, shape index: {}]
  %s3 = inlined_call_operand.vmem [shape: f32[16,1], index: 3, kind: input, shape index: {}]
  %s4 = inlined_call_operand.vmem [shape: bf16[4,16], index: 4, kind: input, shape index: {}]
  %s5 = inlined_call_operand.hbm [shape: f32[4,1], index: 5, kind: input, shape index: {}]
  %s6 = inlined_call_operand.hbm [shape: bf16[4,16], index: 6, kind: input, shape index: {}]
  %s7 = inlined_call_operand.hbm [shape: f32[4,1], index: 7, kind: input, shape index: {}]
  %s8 = inlined_call_operand.vmem [shape: f32[4,1], index: 8, kind: input, shape index: {}]
  %s9 = inlined_call_operand.vmem [shape: f32[4,1], index: 9, kind: input, shape index: {}]
  %s10 = inlined_call_operand.vmem [shape: f32[2,4,256], index: 10, kind: output, shape index: {0}]
  %s11 = inlined_call_operand.vmem [shape: f32[2,4,3], index: 11, kind: output, shape index: {1}]
  %12 = xla_tuple %s10, %s11
  %s13 = sld [smem:[#allocation0]]
  $region97: #{_lambda_.5} parent=0
    _
  %s15 = ssub.s32 1, %s13
  %s16 = scalar_select 0, %s15, %s13
  $region1: #{_lambda_.5} parent=0
    #allocation3 [shape = 'u8[4096]{0}', space=vmem, size = 0x1000, scoped, tag = 'input window, operand 2, single buffered']
    #allocation4 [shape = 's32[2]{0}', space=sflag, size = 0x8, scoped, tag = 'scoped memory for _lambda_.5']
    #allocation5 [shape = 'u8[2048]{0}', space=vmem, size = 0x800, scoped, tag = 'input window, operand 5, single buffered']
    #allocation6 [shape = 's32[1]{0}', space=sflag, size = 0x4, scoped, tag = 'scoped memory for _lambda_.5']
    #allocation7 [shape = 'u8[1024]{0}', space=vmem, size = 0x400, scoped, tag = 'input window, operand 6, single buffered']
    #allocation8 [shape = 'u8[2048]{0}', space=vmem, size = 0x800, scoped, tag = 'input window, operand 7, single buffered']
    #allocation9 [shape = 's32[1]{0}', space=sflag, size = 0x4, scoped, tag = 'scoped memory for _lambda_.5']
    %17 = vsyncpa [#allocation4], 0
    %18 = vsyncpa [#allocation6], 0
    %19 = vsyncpa [#allocation9], 0
    loop: start=0, step=1, limit=4
    $region2: #{_lambda_.5} parent=1 // loop_pre_header
      _
    $region3: #{_lambda_.5} parent=1 // loop_header
      %s21 = sphi 0, %s25
      %p22 = scmp.ge.s32.totalorder %s21, 4
      %s31 = sphi 0, %s33
      %s34 = sphi 0, %s31
      %s35 = sphi 0, %s34
      %s51 = sphi 0, %s35
      %s55 = sphi 0, %s55
      %s57 = sphi 0, %s55
      %s58 = sphi 0, %s57
      %s72 = sphi 0, %s58
      %s76 = sphi 0, %s76
      %s78 = sphi 0, %s76
      %s79 = sphi 0, %s78
      %s93 = sphi 0, %s79
      %s97 = sphi 0, %s97
      %s99 = sphi 0, %s97
      %s100 = sphi 0, %s99
      %s114 = sphi 0, %s100
      %s118 = sphi 0, %s118
      %s120 = sphi 0, %s118
      %s121 = sphi 0, %s120
      %s135 = sphi 0, %s121
      %s139 = sphi 0, %s139
      %s141 = sphi 0, %s139
      %s142 = sphi 0, %s141
      %s156 = sphi 0, %s142
      %s160 = sphi 0, %s160
      %s162 = sphi 0, %s160
      %s163 = sphi 0, %s162
      %s177 = sphi 0, %s163
      %s181 = sphi 0, %s181
      %s183 = sphi 0, %s181
      %s184 = sphi 0, %s183
      %s198 = sphi 0, %s184
      %s202 = sphi 0, %s202
      %s204 = sphi 0, %s202
      %s205 = sphi 0, %s204
      %s219 = sphi 0, %s205
      %s223 = sphi 0, %s223
      %s225 = sphi 0, %s223
      %s226 = sphi 0, %s225
      %s240 = sphi 0, %s226
      %s246 = sphi 0, %s248
      %s249 = sphi 0, %s246
      %s250 = sphi 0, %s249
      %s266 = sphi 0, %s250
      %s272 = sphi 0, %s274
      %s275 = sphi 0, %s272
      %s276 = sphi 0, %s275
      %s292 = sphi 0, %s276
    $region4: #{_lambda_.5} parent=1 // loop_header_branch
      %24 = sbr.rel (%p22) target = $region8
    $region5: #{_lambda_.5} parent=1 // loop_body
      %s26 = ssub.s32 %s21, 1
      %s27 = ssub.s32 %s21, 2
      %s28 = sadd.s32 %s21, 1
      %s29 = ssub.s32 %s21, %s28
      %p30 = scmp.eq.s32.totalorder %s29, 0
      %s32 = sadd.s32 %s31, 1
      %s33 = scalar_select %p30, %s31, %s32
      %p36 = pneg %p30
      %p37 = scmp.eq.s32.totalorder %s21, 1
      %p38 = por %p36, %p37
      %p39 = scmp.ne.s32.totalorder %s31, %s34
      %p40 = scmp.eq.s32.totalorder %s21, 0
      %p41 = por %p39, %p40
      %p42 = scmp.ne.s32.totalorder %s31, %s34
      %p43 = scmp.eq.s32.totalorder %s26, 1
      %p44 = por %p42, %p43
      %p45 = scmp.ne.s32.totalorder %s34, %s35
      %p46 = scmp.eq.s32.totalorder %s26, 0
      %p47 = por %p45, %p46
      %p48 = scmp.ne.s32.totalorder %s34, %s35
      %p49 = scmp.eq.s32.totalorder %s27, 1
      %p50 = por %p48, %p49
      %p52 = scmp.ne.s32.totalorder %s35, %s51
      %p53 = scmp.eq.s32.totalorder %s27, 0
      %p54 = por %p52, %p53
      %s56 = sadd.s32 %s55, 1
      %p59 = scmp.eq.s32.totalorder %s21, 1
      %p60 = scmp.ne.s32.totalorder %s55, %s57
      %p61 = scmp.eq.s32.totalorder %s21, 0
      %p62 = por %p60, %p61
      %p63 = scmp.ne.s32.totalorder %s55, %s57
      %p64 = scmp.eq.s32.totalorder %s26, 1
      %p65 = por %p63, %p64
      %p66 = scmp.ne.s32.totalorder %s57, %s58
      %p67 = scmp.eq.s32.totalorder %s26, 0
      %p68 = por %p66, %p67
      %p69 = scmp.ne.s32.totalorder %s57, %s58
      %p70 = scmp.eq.s32.totalorder %s27, 1
      %p71 = por %p69, %p70
      %p73 = scmp.ne.s32.totalorder %s58, %s72
      %p74 = scmp.eq.s32.totalorder %s27, 0
      %p75 = por %p73, %p74
      %s77 = sadd.s32 %s76, 1
      %p80 = scmp.eq.s32.totalorder %s21, 1
      %p81 = scmp.ne.s32.totalorder %s76, %s78
      %p82 = scmp.eq.s32.totalorder %s21, 0
      %p83 = por %p81, %p82
      %p84 = scmp.ne.s32.totalorder %s76, %s78
      %p85 = scmp.eq.s32.totalorder %s26, 1
      %p86 = por %p84, %p85
      %p87 = scmp.ne.s32.totalorder %s78, %s79
      %p88 = scmp.eq.s32.totalorder %s26, 0
      %p89 = por %p87, %p88
      %p90 = scmp.ne.s32.totalorder %s78, %s79
      %p91 = scmp.eq.s32.totalorder %s27, 1
      %p92 = por %p90, %p91
      %p94 = scmp.ne.s32.totalorder %s79, %s93
      %p95 = scmp.eq.s32.totalorder %s27, 0
      %p96 = por %p94, %p95
      %s98 = sadd.s32 %s97, 1
      %p101 = scmp.eq.s32.totalorder %s21, 1
      %p102 = scmp.ne.s32.totalorder %s97, %s99
      %p103 = scmp.eq.s32.totalorder %s21, 0
      %p104 = por %p102, %p103
      %p105 = scmp.ne.s32.totalorder %s97, %s99
      %p106 = scmp.eq.s32.totalorder %s26, 1
      %p107 = por %p105, %p106
      %p108 = scmp.ne.s32.totalorder %s99, %s100
      %p109 = scmp.eq.s32.totalorder %s26, 0
      %p110 = por %p108, %p109
      %p111 = scmp.ne.s32.totalorder %s99, %s100
      %p112 = scmp.eq.s32.totalorder %s27, 1
      %p113 = por %p111, %p112
      %p115 = scmp.ne.s32.totalorder %s100, %s114
      %p116 = scmp.eq.s32.totalorder %s27, 0
      %p117 = por %p115, %p116
      %s119 = sadd.s32 %s118, 1
      %p122 = scmp.eq.s32.totalorder %s21, 1
      %p123 = scmp.ne.s32.totalorder %s118, %s120
      %p124 = scmp.eq.s32.totalorder %s21, 0
      %p125 = por %p123, %p124
      %p126 = scmp.ne.s32.totalorder %s118, %s120
      %p127 = scmp.eq.s32.totalorder %s26, 1
      %p128 = por %p126, %p127
      %p129 = scmp.ne.s32.totalorder %s120, %s121
      %p130 = scmp.eq.s32.totalorder %s26, 0
      %p131 = por %p129, %p130
      %p132 = scmp.ne.s32.totalorder %s120, %s121
      %p133 = scmp.eq.s32.totalorder %s27, 1
      %p134 = por %p132, %p133
      %p136 = scmp.ne.s32.totalorder %s121, %s135
      %p137 = scmp.eq.s32.totalorder %s27, 0
      %p138 = por %p136, %p137
      %s140 = sadd.s32 %s139, 1
      %p143 = scmp.eq.s32.totalorder %s21, 1
      %p144 = scmp.ne.s32.totalorder %s139, %s141
      %p145 = scmp.eq.s32.totalorder %s21, 0
      %p146 = por %p144, %p145
      %p147 = scmp.ne.s32.totalorder %s139, %s141
      %p148 = scmp.eq.s32.totalorder %s26, 1
      %p149 = por %p147, %p148
      %p150 = scmp.ne.s32.totalorder %s141, %s142
      %p151 = scmp.eq.s32.totalorder %s26, 0
      %p152 = por %p150, %p151
      %p153 = scmp.ne.s32.totalorder %s141, %s142
      %p154 = scmp.eq.s32.totalorder %s27, 1
      %p155 = por %p153, %p154
      %p157 = scmp.ne.s32.totalorder %s142, %s156
      %p158 = scmp.eq.s32.totalorder %s27, 0
      %p159 = por %p157, %p158
      %s161 = sadd.s32 %s160, 1
      %p164 = scmp.eq.s32.totalorder %s21, 1
      %p165 = scmp.ne.s32.totalorder %s160, %s162
      %p166 = scmp.eq.s32.totalorder %s21, 0
      %p167 = por %p165, %p166
      %p168 = scmp.ne.s32.totalorder %s160, %s162
      %p169 = scmp.eq.s32.totalorder %s26, 1
      %p170 = por %p168, %p169
      %p171 = scmp.ne.s32.totalorder %s162, %s163
      %p172 = scmp.eq.s32.totalorder %s26, 0
      %p173 = por %p171, %p172
      %p174 = scmp.ne.s32.totalorder %s162, %s163
      %p175 = scmp.eq.s32.totalorder %s27, 1
      %p176 = por %p174, %p175
      %p178 = scmp.ne.s32.totalorder %s163, %s177
      %p179 = scmp.eq.s32.totalorder %s27, 0
      %p180 = por %p178, %p179
      %s182 = sadd.s32 %s181, 1
      %p185 = scmp.eq.s32.totalorder %s21, 1
      %p186 = scmp.ne.s32.totalorder %s181, %s183
      %p187 = scmp.eq.s32.totalorder %s21, 0
      %p188 = por %p186, %p187
      %p189 = scmp.ne.s32.totalorder %s181, %s183
      %p190 = scmp.eq.s32.totalorder %s26, 1
      %p191 = por %p189, %p190
      %p192 = scmp.ne.s32.totalorder %s183, %s184
      %p193 = scmp.eq.s32.totalorder %s26, 0
      %p194 = por %p192, %p193
      %p195 = scmp.ne.s32.totalorder %s183, %s184
      %p196 = scmp.eq.s32.totalorder %s27, 1
      %p197 = por %p195, %p196
      %p199 = scmp.ne.s32.totalorder %s184, %s198
      %p200 = scmp.eq.s32.totalorder %s27, 0
      %p201 = por %p199, %p200
      %s203 = sadd.s32 %s202, 1
      %p206 = scmp.eq.s32.totalorder %s21, 1
      %p207 = scmp.ne.s32.totalorder %s202, %s204
      %p208 = scmp.eq.s32.totalorder %s21, 0
      %p209 = por %p207, %p208
      %p210 = scmp.ne.s32.totalorder %s202, %s204
      %p211 = scmp.eq.s32.totalorder %s26, 1
      %p212 = por %p210, %p211
      %p213 = scmp.ne.s32.totalorder %s204, %s205
      %p214 = scmp.eq.s32.totalorder %s26, 0
      %p215 = por %p213, %p214
      %p216 = scmp.ne.s32.totalorder %s204, %s205
      %p217 = scmp.eq.s32.totalorder %s27, 1
      %p218 = por %p216, %p217
      %p220 = scmp.ne.s32.totalorder %s205, %s219
      %p221 = scmp.eq.s32.totalorder %s27, 0
      %p222 = por %p220, %p221
      %s224 = sadd.s32 %s223, 1
      %p227 = scmp.eq.s32.totalorder %s21, 1
      %p228 = scmp.ne.s32.totalorder %s223, %s225
      %p229 = scmp.eq.s32.totalorder %s21, 0
      %p230 = por %p228, %p229
      %p231 = scmp.ne.s32.totalorder %s223, %s225
      %p232 = scmp.eq.s32.totalorder %s26, 1
      %p233 = por %p231, %p232
      %p234 = scmp.ne.s32.totalorder %s225, %s226
      %p235 = scmp.eq.s32.totalorder %s26, 0
      %p236 = por %p234, %p235
      %p237 = scmp.ne.s32.totalorder %s225, %s226
      %p238 = scmp.eq.s32.totalorder %s27, 1
      %p239 = por %p237, %p238
      %p241 = scmp.ne.s32.totalorder %s226, %s240
      %p242 = scmp.eq.s32.totalorder %s27, 0
      %p243 = por %p241, %p242
      %s244 = ssub.s32 %s21, %s28
      %p245 = scmp.eq.s32.totalorder %s244, 0
      %s247 = sadd.s32 %s246, 1
      %s248 = scalar_select %p245, %s246, %s247
      %p251 = pneg %p245
      %p252 = scmp.eq.s32.totalorder %s21, 1
      %p253 = por %p251, %p252
      %p254 = scmp.ne.s32.totalorder %s246, %s249
      %p255 = scmp.eq.s32.totalorder %s21, 0
      %p256 = por %p254, %p255
      %p257 = scmp.ne.s32.totalorder %s246, %s249
      %p258 = scmp.eq.s32.totalorder %s26, 1
      %p259 = por %p257, %p258
      %p260 = scmp.ne.s32.totalorder %s249, %s250
      %p261 = scmp.eq.s32.totalorder %s26, 0
      %p262 = por %p260, %p261
      %p263 = scmp.ne.s32.totalorder %s249, %s250
      %p264 = scmp.eq.s32.totalorder %s27, 1
      %p265 = por %p263, %p264
      %p267 = scmp.ne.s32.totalorder %s250, %s266
      %p268 = scmp.eq.s32.totalorder %s27, 0
      %p269 = por %p267, %p268
      %s270 = ssub.s32 %s21, %s28
      %p271 = scmp.eq.s32.totalorder %s270, 0
      %s273 = sadd.s32 %s272, 1
      %s274 = scalar_select %p271, %s272, %s273
      %p277 = pneg %p271
      %p278 = scmp.eq.s32.totalorder %s21, 1
      %p279 = por %p277, %p278
      %p280 = scmp.ne.s32.totalorder %s272, %s275
      %p281 = scmp.eq.s32.totalorder %s21, 0
      %p282 = por %p280, %p281
      %p283 = scmp.ne.s32.totalorder %s272, %s275
      %p284 = scmp.eq.s32.totalorder %s26, 1
      %p285 = por %p283, %p284
      %p286 = scmp.ne.s32.totalorder %s275, %s276
      %p287 = scmp.eq.s32.totalorder %s26, 0
      %p288 = por %p286, %p287
      %p289 = scmp.ne.s32.totalorder %s275, %s276
      %p290 = scmp.eq.s32.totalorder %s27, 1
      %p291 = por %p289, %p290
      %p293 = scmp.ne.s32.totalorder %s276, %s292
      %p294 = scmp.eq.s32.totalorder %s27, 0
      %p295 = por %p293, %p294
      %p296 = scmp.le.s32.totalorder 1, %s21
      %p297 = scmp.lt.s32.totalorder %s21, 3
      %p298 = pnand %p296, %p297
      %p299 = pneg %p298
      // Predicated region
      $region9: #{_lambda_.5} parent=5 // pred_check
        _
      $region10: #{_lambda_.5} parent=5 // pred_check_branch
        %301 = sbr.rel (%p298) target = $region12
      $region11: #{_lambda_.5} parent=5 // pred_region
        %s302 = ssub.s32 %s21, 1
        // Predicated region
        $region13: #{_lambda_.5} parent=11 // pred_check
          %p303 = pneg %p68
        $region14: #{_lambda_.5} parent=11 // pred_check_branch
          %305 = sbr.rel (%p303) target = $region16
        $region15: #{_lambda_.5} parent=11 // pred_region
          _
        $region16: #{_lambda_.5} parent=11 // pred_fallthru
          _
        // Predicated region
        $region17: #{_lambda_.5} parent=11 // pred_check
          %p306 = pneg %p89
        $region18: #{_lambda_.5} parent=11 // pred_check_branch
          %308 = sbr.rel (%p306) target = $region20
        $region19: #{_lambda_.5} parent=11 // pred_region
          %310 = vsyncadd [#allocation4], 0
          %s311 = sshll.u32 %s2, 4
          %s312 = int_to_ptr.hbm [resolvable:$true] %s311
          %s313 = sshll.u32 [#allocation3], 4
          %s314 = int_to_ptr.vmem [resolvable:$true] %s313
          %319 = dma.hbm_to_vmem [thread:$0]  %s312, 128, %s314, [#allocation4], 64, 64, 4
        $region20: #{_lambda_.5} parent=11 // pred_fallthru
          _
        // Predicated region
        $region21: #{_lambda_.5} parent=11 // pred_check
          %p320 = pneg %p110
        $region22: #{_lambda_.5} parent=11 // pred_check_branch
          %322 = sbr.rel (%p320) target = $region24
        $region23: #{_lambda_.5} parent=11 // pred_region
          _
        $region24: #{_lambda_.5} parent=11 // pred_fallthru
          _
        // Predicated region
        $region25: #{_lambda_.5} parent=11 // pred_check
          %p323 = pneg %p131
        $region26: #{_lambda_.5} parent=11 // pred_check_branch
          %325 = sbr.rel (%p323) target = $region28
        $region27: #{_lambda_.5} parent=11 // pred_region
          _
        $region28: #{_lambda_.5} parent=11 // pred_fallthru
          _
        // Predicated region
        $region29: #{_lambda_.5} parent=11 // pred_check
          %p326 = pneg %p152
        $region30: #{_lambda_.5} parent=11 // pred_check_branch
          %328 = sbr.rel (%p326) target = $region32
        $region31: #{_lambda_.5} parent=11 // pred_region
          %330 = vsyncadd [#allocation6], 0
          %s332 = sshll.u32 %s5, 4
          %s333 = int_to_ptr.hbm [resolvable:$true] %s332
          %s334 = sshll.u32 [#allocation5], 4
          %s335 = int_to_ptr.vmem [resolvable:$true] %s334
          %337 = dma.hbm_to_vmem [thread:$0]  %s333, 64, %s335, [#allocation6]
        $region32: #{_lambda_.5} parent=11 // pred_fallthru
          _
        // Predicated region
        $region33: #{_lambda_.5} parent=11 // pred_check
          %p338 = pneg %p173
        $region34: #{_lambda_.5} parent=11 // pred_check_branch
          %340 = sbr.rel (%p338) target = $region36
        $region35: #{_lambda_.5} parent=11 // pred_region
          %342 = vsyncadd [#allocation6], 0
          %s344 = sshll.u32 %s6, 4
          %s345 = int_to_ptr.hbm [resolvable:$true] %s344
          %s346 = sshll.u32 [#allocation7], 4
          %s347 = int_to_ptr.vmem [resolvable:$true] %s346
          %349 = dma.hbm_to_vmem [thread:$0]  %s345, 32, %s347, [#allocation6]
        $region36: #{_lambda_.5} parent=11 // pred_fallthru
          _
        // Predicated region
        $region37: #{_lambda_.5} parent=11 // pred_check
          %p350 = pneg %p194
        $region38: #{_lambda_.5} parent=11 // pred_check_branch
          %352 = sbr.rel (%p350) target = $region40
        $region39: #{_lambda_.5} parent=11 // pred_region
          %354 = vsyncadd [#allocation9], 0
          %s356 = sshll.u32 %s7, 4
          %s357 = int_to_ptr.hbm [resolvable:$true] %s356
          %s358 = sshll.u32 [#allocation8], 4
          %s359 = int_to_ptr.vmem [resolvable:$true] %s358
          %361 = dma.hbm_to_vmem [thread:$0]  %s357, 64, %s359, [#allocation9]
        $region40: #{_lambda_.5} parent=11 // pred_fallthru
          _
        // Predicated region
        $region41: #{_lambda_.5} parent=11 // pred_check
          %p362 = pneg %p215
        $region42: #{_lambda_.5} parent=11 // pred_check_branch
          %364 = sbr.rel (%p362) target = $region44
        $region43: #{_lambda_.5} parent=11 // pred_region
          _
        $region44: #{_lambda_.5} parent=11 // pred_fallthru
          _
        // Predicated region
        $region45: #{_lambda_.5} parent=11 // pred_check
          %p365 = pneg %p236
        $region46: #{_lambda_.5} parent=11 // pred_check_branch
          %367 = sbr.rel (%p365) target = $region48
        $region47: #{_lambda_.5} parent=11 // pred_region
          _
        $region48: #{_lambda_.5} parent=11 // pred_fallthru
          _
      $region12: #{_lambda_.5} parent=5 // pred_fallthru
        _
      %p368 = scmp.lt.s32.totalorder %s21, 2
      // Predicated region
      $region49: #{_lambda_.5} parent=5 // pred_check
        %p369 = pneg %p368
      $region50: #{_lambda_.5} parent=5 // pred_check_branch
        %371 = sbr.rel (%p369) target = $region52
      $region51: #{_lambda_.5} parent=5 // pred_region
        // Predicated region
        $region53: #{_lambda_.5} parent=51 // pred_check
          %p372 = pneg %p41
        $region54: #{_lambda_.5} parent=51 // pred_check_branch
          %374 = sbr.rel (%p372) target = $region56
        $region55: #{_lambda_.5} parent=51 // pred_region
          %p375 = scmp.lt.s32.totalorder %s21, 1
          %s376 = scalar_select %p375, %s21, 1
          %s377 = smul.addr %s376, 2
          %s378 = smul.addr %s377, 4
          %s379 = scalar_lea.vmem %s0, %s378
        $region56: #{_lambda_.5} parent=51 // pred_fallthru
          _
      $region52: #{_lambda_.5} parent=5 // pred_fallthru
        _
      %p380 = scmp.le.s32.totalorder 1, %s21
      %p381 = scmp.lt.s32.totalorder %s21, 3
      %p382 = pnand %p380, %p381
      %p383 = pneg %p382
      // Predicated region
      $region57: #{_lambda_.5} parent=5 // pred_check
        _
      $region58: #{_lambda_.5} parent=5 // pred_check_branch
        %385 = sbr.rel (%p382) target = $region60
      $region59: #{_lambda_.5} parent=5 // pred_region
        %s386 = ssub.s32 %s21, 1
        // Predicated region
        $region61: #{_lambda_.5} parent=59 // pred_check
          %p387 = pneg %p89
        $region62: #{_lambda_.5} parent=59 // pred_check_branch
          %389 = sbr.rel (%p387) target = $region64
        $region63: #{_lambda_.5} parent=59 // pred_region
          %391 = dma.done [#allocation4], 128
        $region64: #{_lambda_.5} parent=59 // pred_fallthru
          _
        // Predicated region
        $region65: #{_lambda_.5} parent=59 // pred_check
          %p392 = pneg %p152
        $region66: #{_lambda_.5} parent=59 // pred_check_branch
          %394 = sbr.rel (%p392) target = $region68
        $region67: #{_lambda_.5} parent=59 // pred_region
          %396 = dma.done [#allocation6], 64
        $region68: #{_lambda_.5} parent=59 // pred_fallthru
          _
        // Predicated region
        $region69: #{_lambda_.5} parent=59 // pred_check
          %p397 = pneg %p173
        $region70: #{_lambda_.5} parent=59 // pred_check_branch
          %399 = sbr.rel (%p397) target = $region72
        $region71: #{_lambda_.5} parent=59 // pred_region
          %401 = dma.done [#allocation6], 32
        $region72: #{_lambda_.5} parent=59 // pred_fallthru
          _
        // Predicated region
        $region73: #{_lambda_.5} parent=59 // pred_check
          %p402 = pneg %p194
        $region74: #{_lambda_.5} parent=59 // pred_check_branch
          %404 = sbr.rel (%p402) target = $region76
        $region75: #{_lambda_.5} parent=59 // pred_region
          %406 = dma.done [#allocation9], 64
        $region76: #{_lambda_.5} parent=59 // pred_fallthru
          _
        %p407 = scmp.lt.s32.totalorder %s26, 1
        %s408 = scalar_select %p407, %s26, 1
        %s409 = smul.addr %s408, 2
        %s410 = smul.addr %s409, 4
        %s411 = scalar_lea.vmem %s0, %s410
        %p412 = pneg %p47
        %p413 = pneg %p44
        %p414 = pneg %p68
        %p415 = pneg %p65
        %p416 = pneg %p89
        %p417 = pneg %p86
        %p418 = pneg %p110
        %p419 = pneg %p107
        %p420 = pneg %p131
        %p421 = pneg %p128
        %p422 = pneg %p152
        %p423 = pneg %p149
        %p424 = pneg %p173
        %p425 = pneg %p170
        %p426 = pneg %p194
        %p427 = pneg %p191
        %p428 = pneg %p215
        %p429 = pneg %p212
        %p430 = pneg %p236
        %p431 = pneg %p233
        %p432 = pneg %p262
        %p433 = pneg %p259
        %p434 = scmp.lt.s32.totalorder %s26, 1
        %s435 = scalar_select %p434, %s26, 1
        %s436 = smul.addr %s435, 2
        %s437 = smul.addr %s436, 4
        %s438 = scalar_lea.vmem %s10, %s437
        %p439 = pneg %p288
        %p440 = pneg %p285
        %p441 = scmp.lt.s32.totalorder %s26, 1
        %s442 = scalar_select %p441, %s26, 1
        %s443 = smul.addr %s442, 4
        %s444 = scalar_lea.vmem %s11, %s443
        %p445 = scmp.lt.s32.totalorder %s26, 1
        %s446 = scalar_select %p445, %s26, 1
        %s447 = smul.addr %s446, 2
        %s448 = smul.addr %s447, 4
        %s449 = scalar_lea.vmem %s0, %s448
        %p450 = scmp.lt.s32.totalorder %s26, 1
        %s451 = scalar_select %p450, %s26, 1
        %s452 = smul.addr %s451, 2
        %s453 = smul.addr %s452, 4
        %s454 = scalar_lea.vmem %s10, %s453
        %p455 = scmp.lt.s32.totalorder %s26, 1
        %s456 = scalar_select %p455, %s26, 1
        %s457 = smul.addr %s456, 4
        %s458 = scalar_lea.vmem %s11, %s457
        %v460 = vld [vmem:[%s449] sm:$0xff]
        %v461 = vld [vmem:[%s8] sm:$0xf]
        %463 = vset.pattern.permute.xlu0 0
        %464 = vperm.xlu0 %463, %v461
        %v465 = vpop.permute.xlu0 %464
        %v467 = vunpack.c.l.s4 839922192
        %v468 = vunpack.c.0.s8 %v467
        %v469 = vperm.slane %v465, %v468
        %v471 = vmul.f32 %v460, %v469
        %v472 = vld [vmem:[%s9] sm:$0xf]
        %474 = vset.pattern.permute.xlu0 0
        %475 = vperm.xlu0 %474, %v472
        %v476 = vpop.permute.xlu0 %475
        %v478 = vunpack.c.l.s4 839922192
        %v479 = vunpack.c.0.s8 %v478
        %v480 = vperm.slane %v476, %v479
        %v482 = vadd.f32 %v471, %v480
        %484 = vst [vmem:[#allocation1] ss:$2 sm:$0xff] %v482
        %v485 = vld.sshfl [vmem:[#allocation1] sm:$0xff pattern:$0x75316420]
        %v486 = vld.sshfl [vmem:[#allocation1 + $0x8] sm:$0xff pattern:$0x75316420]
        %489 = vrot.lane.b32.xlu0 %v485, 33
        %v490 = vpop.permute.xlu0 %489
        %491 = vrot.lane.b32.xlu0 %v486, 33
        %v492 = vpop.permute.xlu0 %491
        %v493 = vlaneseq
        %v494 = vand.u32 %v493, 127
        %vm495 = vcmp.lt.s32.totalorder %v494, 33
        %v496 = vsel %vm495, %v490, %v492
        %v497 = vsel %vm495, %v492, %v490
        %498 = vst [vmem:[#allocation2] sm:$0xf] %v497
        %499 = vst [vmem:[#allocation2 + $0x8] sm:$0xf] %v496
        %500 = vst [vmem:[#allocation1] ss:$2 sm:$0xff] %v482
        %v501 = vld.sshfl [vmem:[#allocation1] sm:$0xff pattern:$0x75316420]
        %v502 = vld.sshfl [vmem:[#allocation1 + $0x8] sm:$0xff pattern:$0x75316420]
        %505 = vrot.lane.b32.xlu0 %v501, 32
        %v506 = vpop.permute.xlu0 %505
        %507 = vrot.lane.b32.xlu0 %v502, 32
        %v508 = vpop.permute.xlu0 %507
        %vm509 = vcmp.lt.s32.totalorder %v494, 32
        %v510 = vsel %vm509, %v506, %v508
        %v511 = vsel %vm509, %v508, %v506
        %v514 = vrot.slane %v511, 4
        %v515 = vrot.slane %v510, 4
        %518 = vst [vmem:[#allocation2] sm:$0xf0] %v514
        %519 = vst [vmem:[#allocation2 + $0x8] sm:$0xf0] %v515
        %520 = vst [vmem:[#allocation1] ss:$2 sm:$0xff] %v482
        %v521 = vld.sshfl [vmem:[#allocation1] sm:$0xff pattern:$0x75316420]
        %v522 = vld.sshfl [vmem:[#allocation1 + $0x8] sm:$0xff pattern:$0x75316420]
        %525 = vrot.lane.b32.xlu0 %v521, 31
        %v526 = vpop.permute.xlu0 %525
        %527 = vrot.lane.b32.xlu0 %v522, 31
        %v528 = vpop.permute.xlu0 %527
        %vm529 = vcmp.lt.s32.totalorder %v494, 31
        %v530 = vsel %vm529, %v526, %v528
        %v531 = vsel %vm529, %v528, %v526
        %532 = vst [vmem:[#allocation2 + $0x10] sm:$0xf] %v531
        %533 = vst [vmem:[#allocation2 + $0x18] sm:$0xf] %v530
        %534 = vst [vmem:[#allocation1] ss:$2 sm:$0xff] %v482
        %v535 = vld.sshfl [vmem:[#allocation1] sm:$0xff pattern:$0x75316420]
        %v536 = vld.sshfl [vmem:[#allocation1 + $0x8] sm:$0xff pattern:$0x75316420]
        %539 = vrot.lane.b32.xlu0 %v535, 17
        %v540 = vpop.permute.xlu0 %539
        %541 = vrot.lane.b32.xlu0 %v536, 17
        %v542 = vpop.permute.xlu0 %541
        %vm543 = vcmp.lt.s32.totalorder %v494, 17
        %v544 = vsel %vm543, %v540, %v542
        %v545 = vsel %vm543, %v542, %v540
        %v548 = vrot.slane %v545, 4
        %v549 = vrot.slane %v544, 4
        %552 = vst [vmem:[#allocation2 + $0x10] sm:$0xf0] %v548
        %553 = vst [vmem:[#allocation2 + $0x18] sm:$0xf0] %v549
        %554 = vst [vmem:[#allocation1] ss:$2 sm:$0xff] %v482
        %v555 = vld.sshfl [vmem:[#allocation1] sm:$0xff pattern:$0x75316420]
        %v556 = vld.sshfl [vmem:[#allocation1 + $0x8] sm:$0xff pattern:$0x75316420]
        %559 = vrot.lane.b32.xlu0 %v555, 16
        %v560 = vpop.permute.xlu0 %559
        %561 = vrot.lane.b32.xlu0 %v556, 16
        %v562 = vpop.permute.xlu0 %561
        %vm563 = vcmp.lt.s32.totalorder %v494, 16
        %v564 = vsel %vm563, %v560, %v562
        %v565 = vsel %vm563, %v562, %v560
        %566 = vst [vmem:[#allocation2 + $0x20] sm:$0xf] %v565
        %567 = vst [vmem:[#allocation2 + $0x28] sm:$0xf] %v564
        %568 = vst [vmem:[#allocation1] ss:$2 sm:$0xff] %v482
        %v569 = vld.sshfl [vmem:[#allocation1] sm:$0xff pattern:$0x75316420]
        %v570 = vld.sshfl [vmem:[#allocation1 + $0x8] sm:$0xff pattern:$0x75316420]
        %573 = vrot.lane.b32.xlu0 %v569, 15
        %v574 = vpop.permute.xlu0 %573
        %575 = vrot.lane.b32.xlu0 %v570, 15
        %v576 = vpop.permute.xlu0 %575
        %vm577 = vcmp.lt.s32.totalorder %v494, 15
        %v578 = vsel %vm577, %v574, %v576
        %v579 = vsel %vm577, %v576, %v574
        %v582 = vrot.slane %v579, 4
        %v583 = vrot.slane %v578, 4
        %586 = vst [vmem:[#allocation2 + $0x20] sm:$0xf0] %v582
        %587 = vst [vmem:[#allocation2 + $0x28] sm:$0xf0] %v583
        %v588 = vld [vmem:[#allocation2] sm:$0xff]
        %v589 = vld [vmem:[#allocation2 + $0x8] sm:$0xff]
        %v590 = vld [vmem:[#allocation2 + $0x10] sm:$0xff]
        %v591 = vld [vmem:[#allocation2 + $0x18] sm:$0xff]
        %v592 = vld [vmem:[#allocation2 + $0x20] sm:$0xff]
        %v593 = vld [vmem:[#allocation2 + $0x28] sm:$0xff]
        %v594 = vld [vmem:[%s1] sm:$0xff]
        %v595 = vld [vmem:[%s1 + $0x8] sm:$0xff]
        %v596 = vld [vmem:[%s1 + $0x10] sm:$0xff]
        %v597 = vld [vmem:[%s1 + $0x18] sm:$0xff]
        %v598 = vld [vmem:[%s1 + $0x20] sm:$0xff]
        %v599 = vld [vmem:[%s1 + $0x28] sm:$0xff]
        %v600 = vmul.f32 %v588, %v594
        %v601 = vmul.f32 %v589, %v595
        %v602 = vmul.f32 %v590, %v596
        %v603 = vmul.f32 %v591, %v597
        %v604 = vmul.f32 %v592, %v598
        %v605 = vmul.f32 %v593, %v599
        %v606 = vpack.c.bf16 %v602, %v600
        %v607 = vpack.c.bf16 %v603, %v601
        %v608 = vpack.c.bf16 %v604, %v604
        %v609 = vpack.c.bf16 %v605, %v605
        %v610 = vld [vmem:[#allocation3] sm:$0xf]
        %v611 = vld [vmem:[#allocation3 + $0x4] sm:$0xf]
        %v612 = vld [vmem:[%s3] sm:$0xff]
        %v613 = vld [vmem:[%s3 + $0x8] sm:$0xff]
        %615 = vset.pattern.permute.xlu0 0
        %616 = vperm.xlu0 %615, %v612
        %v617 = vpop.permute.xlu0 %616
        %620 = vset.pattern.permute.xlu0 0
        %621 = vperm.xlu0 %620, %v613
        %v622 = vpop.permute.xlu0 %621
        %v626 = vunpack.c.l.b16 %v610
        %v627 = vunpack.c.l.b16 %v611
        %v628 = vpack.c.b16 %v627, %v626
        %vm629 = vcmask 195584
        %v631 = vsel %vm629, %v628, 0
        %vm633 = vcmask 1043456
        %v635 = vsel %vm633, %v608, 0
        %v638 = vsel %vm633, %v609, 0
        %640 = vmatpush.bf16.msra.mxu0 0
        %641 = vmatpush.bf16.msra.mxu0 0
        %642 = vmatpush.bf16.msra.mxu0 0
        %643 = vmatpush.bf16.msra.mxu0 0
        %644 = vmatpush.bf16.msra.mxu0 0
        %645 = vmatpush.bf16.msra.mxu0 0
        %646 = vmatpush.bf16.msra.mxu0 %v635
        %647 = vmatpush.bf16.msra.mxu0 %v606
        %648 = vmatmul.bf16.gmra.mxu0 %v631
        %v649 = vpop.f32.mrf.mxu0
        %v650 = vadd.f32 %v617, %v649
        %v651 = vpop.f32.mrf.mxu0
        %v652 = vadd.f32 %v622, %v651
        %653 = vdwg.mxu0
        %654 = vmatpush.bf16.msra.mxu0 0
        %655 = vmatpush.bf16.msra.mxu0 0
        %656 = vmatpush.bf16.msra.mxu0 0
        %657 = vmatpush.bf16.msra.mxu0 0
        %658 = vmatpush.bf16.msra.mxu0 0
        %659 = vmatpush.bf16.msra.mxu0 0
        %660 = vmatpush.bf16.msra.mxu0 %v638
        %661 = vmatpush.bf16.msra.mxu0 %v607
        %662 = vmatmul.bf16.gmra.mxu0 %v631
        %v663 = vpop.f32.mrf.mxu0
        %v664 = vadd.f32 %v617, %v663
        %v665 = vpop.f32.mrf.mxu0
        %v666 = vadd.f32 %v622, %v665
        %667 = vdwg.mxu0
        %v668 = vmax.f32 %v650, 0.0
        %v669 = vmax.f32 %v664, 0.0
        %v670 = vmax.f32 %v652, 0.0
        %v671 = vmax.f32 %v666, 0.0
        %v672 = vpack.c.bf16 %v670, %v668
        %v673 = vpack.c.bf16 %v671, %v669
        %v674 = vld [vmem:[%s4] sm:$0x3]
        %v675 = vld [vmem:[#allocation5] sm:$0xf]
        %677 = vset.pattern.permute.xlu0 0
        %678 = vperm.xlu0 %677, %v675
        %v679 = vpop.permute.xlu0 %678
        %vm681 = vcmask 130048
        %v683 = vsel %vm681, %v674, 0
        %685 = vmatpush.bf16.msra.mxu0 0
        %686 = vmatpush.bf16.msra.mxu0 0
        %687 = vmatpush.bf16.msra.mxu0 0
        %688 = vmatpush.bf16.msra.mxu0 0
        %689 = vmatpush.bf16.msra.mxu0 0
        %690 = vmatpush.bf16.msra.mxu0 0
        %691 = vmatpush.bf16.msra.mxu0 0
        %692 = vmatpush.bf16.msra.mxu0 %v672
        %693 = vmatmul.bf16.gmra.mxu0 %v683
        %v694 = vpop.f32.mrf.mxu0
        %v695 = vadd.f32 %v679, %v694
        %v696 = vpop.f32.mrf.mxu0
        %697 = vdwg.mxu0
        %698 = vmatpush.bf16.msra.mxu0 0
        %699 = vmatpush.bf16.msra.mxu0 0
        %700 = vmatpush.bf16.msra.mxu0 0
        %701 = vmatpush.bf16.msra.mxu0 0
        %702 = vmatpush.bf16.msra.mxu0 0
        %703 = vmatpush.bf16.msra.mxu0 0
        %704 = vmatpush.bf16.msra.mxu0 0
        %705 = vmatpush.bf16.msra.mxu0 %v673
        %706 = vmatmul.bf16.gmra.mxu0 %v683
        %v707 = vpop.f32.mrf.mxu0
        %v708 = vadd.f32 %v679, %v707
        %v709 = vpop.f32.mrf.mxu0
        %710 = vdwg.mxu0
        %v711 = vld [vmem:[#allocation7] sm:$0x3]
        %v712 = vld [vmem:[#allocation8] sm:$0xf]
        %714 = vset.pattern.permute.xlu0 0
        %715 = vperm.xlu0 %714, %v712
        %v716 = vpop.permute.xlu0 %715
        %v719 = vsel %vm681, %v711, 0
        %721 = vmatpush.bf16.msra.mxu0 0
        %722 = vmatpush.bf16.msra.mxu0 0
        %723 = vmatpush.bf16.msra.mxu0 0
        %724 = vmatpush.bf16.msra.mxu0 0
        %725 = vmatpush.bf16.msra.mxu0 0
        %726 = vmatpush.bf16.msra.mxu0 0
        %727 = vmatpush.bf16.msra.mxu0 0
        %728 = vmatpush.bf16.msra.mxu0 %v672
        %729 = vmatmul.bf16.gmra.mxu0 %v719
        %v730 = vpop.f32.mrf.mxu0
        %v731 = vadd.f32 %v716, %v730
        %v732 = vpop.f32.mrf.mxu0
        %733 = vdwg.mxu0
        %734 = vmatpush.bf16.msra.mxu0 0
        %735 = vmatpush.bf16.msra.mxu0 0
        %736 = vmatpush.bf16.msra.mxu0 0
        %737 = vmatpush.bf16.msra.mxu0 0
        %738 = vmatpush.bf16.msra.mxu0 0
        %739 = vmatpush.bf16.msra.mxu0 0
        %740 = vmatpush.bf16.msra.mxu0 0
        %741 = vmatpush.bf16.msra.mxu0 %v673
        %742 = vmatmul.bf16.gmra.mxu0 %v719
        %v743 = vpop.f32.mrf.mxu0
        %v744 = vadd.f32 %v716, %v743
        %v745 = vpop.f32.mrf.mxu0
        %746 = vdwg.mxu0
        %v747 = vadd.f32 %v731, 2.0
        %v748 = vadd.f32 %v744, 2.0
        %v749 = vmin.f32 %v747, 0.0
        %v750 = vmin.f32 %v748, 0.0
        %v751 = vand.u32 2147483647, %v747
        %v752 = vand.u32 2147483647, %v748
        %v753 = vsub.f32 0.0, %v751
        %v754 = vsub.f32 0.0, %v752
        %v755 = vmul.f32 %v753, 1.442695
        %v756 = vpow.pop %v755
        %v757 = vmul.f32 %v754, 1.442695
        %v758 = vpow.pop %v757
        %v759 = vadd.f32 %v756, 1.0
        %v760 = vadd.f32 %v758, 1.0
        %v761 = vlog2.pop %v759
        %v762 = vmul.f32 %v761, 0.6931472
        %v763 = vlog2.pop %v760
        %v764 = vmul.f32 %v763, 0.6931472
        %v765 = vsub.f32 %v749, %v762
        %v766 = vsub.f32 %v750, %v764
        %v767 = vmul.f32 %v765, 1.442695
        %v768 = vpow.pop %v767
        %v769 = vmul.f32 %v766, 1.442695
        %v770 = vpow.pop %v769
        %771 = vst [vmem:[#allocation1] ss:$2 sm:$0xff] %v482
        %v772 = vld.sshfl [vmem:[#allocation1] sm:$0xff pattern:$0x75316420]
        %v773 = vld.sshfl [vmem:[#allocation1 + $0x8] sm:$0xff pattern:$0x75316420]
        %v776 = vmul.f32 %v768, %v772
        %v777 = vmul.f32 %v770, %v773
        %v778 = vadd.f32 %v776, %v695
        %v779 = vadd.f32 %v777, %v708
        %v782 = vrot.slane %v779, 4
        %v783 = vsel %vm633, %v778, %v782
        %785 = vst [vmem:[%s454] sm:$0xff] %v783
        %v786 = vsel %vm633, %v778, 0.0
        %v787 = vsel %vm633, %v779, 0.0
        %v788 = vadd.f32 %v786, %v787
        %789 = vadd.xlane.f32.xlu0 %v788
        %v790 = vpop.xlane.xlu0 %789
        %vm791 = vcmask 3072
        %792 = vst.msk [vmem:[%s458] sm:$0xf] %vm791, %v790
        %v793 = vmul.f32 %v778, %v778
        %v794 = vmul.f32 %v779, %v779
        %v795 = vsel %vm633, %v793, 0.0
        %v796 = vsel %vm633, %v794, 0.0
        %v797 = vadd.f32 %v795, %v796
        %798 = vadd.xlane.f32.xlu0 %v797
        %v799 = vpop.xlane.xlu0 %798
        %vm800 = vcmask 11272
        %801 = vst.msk [vmem:[%s458] sm:$0xf] %vm800, %v799
        %v802 = vsel %vm633, %v765, 0.0
        %v803 = vsel %vm633, %v766, 0.0
        %v804 = vadd.f32 %v802, %v803
        %805 = vadd.xlane.f32.xlu0 %v804
        %v806 = vpop.xlane.xlu0 %805
        %vm807 = vcmask 19472
        %808 = vst.msk [vmem:[%s458] sm:$0xf] %vm807, %v806
        %p809 = scmp.lt.s32.totalorder %s26, 1
        %s810 = scalar_select %p809, %s26, 1
        %s811 = smul.addr %s810, 2
        %s812 = smul.addr %s811, 4
        %s813 = scalar_lea.vmem %s10, %s812
        %p814 = scmp.lt.s32.totalorder %s26, 1
        %s815 = scalar_select %p814, %s26, 1
        %s816 = smul.addr %s815, 4
        %s817 = scalar_lea.vmem %s11, %s816
        // Predicated region
        $region77: #{_lambda_.5} parent=59 // pred_check
          %p818 = pneg %p259
        $region78: #{_lambda_.5} parent=59 // pred_check_branch
          %820 = sbr.rel (%p818) target = $region80
        $region79: #{_lambda_.5} parent=59 // pred_region
          _
        $region80: #{_lambda_.5} parent=59 // pred_fallthru
          _
        // Predicated region
        $region81: #{_lambda_.5} parent=59 // pred_check
          %p821 = pneg %p285
        $region82: #{_lambda_.5} parent=59 // pred_check_branch
          %823 = sbr.rel (%p821) target = $region84
        $region83: #{_lambda_.5} parent=59 // pred_region
          _
        $region84: #{_lambda_.5} parent=59 // pred_fallthru
          _
      $region60: #{_lambda_.5} parent=5 // pred_fallthru
        _
      %p824 = scmp.le.s32.totalorder 2, %s21
      // Predicated region
      $region85: #{_lambda_.5} parent=5 // pred_check
        %p825 = pneg %p824
      $region86: #{_lambda_.5} parent=5 // pred_check_branch
        %827 = sbr.rel (%p825) target = $region88
      $region87: #{_lambda_.5} parent=5 // pred_region
        %s828 = ssub.s32 %s21, 2
        // Predicated region
        $region89: #{_lambda_.5} parent=87 // pred_check
          %p829 = pneg %p265
        $region90: #{_lambda_.5} parent=87 // pred_check_branch
          %831 = sbr.rel (%p829) target = $region92
        $region91: #{_lambda_.5} parent=87 // pred_region
          %p832 = scmp.lt.s32.totalorder %s27, 1
          %s833 = scalar_select %p832, %s27, 1
          %s834 = smul.addr %s833, 2
          %s835 = smul.addr %s834, 4
          %s836 = scalar_lea.vmem %s10, %s835
        $region92: #{_lambda_.5} parent=87 // pred_fallthru
          _
        // Predicated region
        $region93: #{_lambda_.5} parent=87 // pred_check
          %p837 = pneg %p291
        $region94: #{_lambda_.5} parent=87 // pred_check_branch
          %839 = sbr.rel (%p837) target = $region96
        $region95: #{_lambda_.5} parent=87 // pred_region
          %p840 = scmp.lt.s32.totalorder %s27, 1
          %s841 = scalar_select %p840, %s27, 1
          %s842 = smul.addr %s841, 4
          %s843 = scalar_lea.vmem %s11, %s842
        $region96: #{_lambda_.5} parent=87 // pred_fallthru
          _
      $region88: #{_lambda_.5} parent=5 // pred_fallthru
        _
    $region6: #{_lambda_.5} parent=1 // loop_footer
      %s25 = sadd.s32 1, %s21
    $region7: #{_lambda_.5} parent=1 // loop_footer_branch
      %20 = sbr.rel target = $region3
    $region8: #{_lambda_.5} parent=1 // loop_exit
      _
    %844 = vsyncpa [#allocation4], 1
    %s845 = scalar_lea.sflag [#allocation4], 1
    %846 = vsyncpa %s845, 1
    %847 = vsyncpa [#allocation6], 1
    %848 = vsyncpa [#allocation9], 1

// kernel: _lambda_.8
$region0: #{_lambda_.8}
  #allocation0 [shape = 'u32[]', space=smem, size = 0x4, offset = 0x4, fixed_abs, tag = 'smem constant byte address 0x4 - core index']
  #allocation1 [shape = 'u32[72,128]{1,0:T(1,128)}', space=vmem, size = 0x9000, scoped, tag = 'internal scratch']
  #allocation2 [shape = 'f32[24,256]{1,0:T(8,128)}', space=vmem, size = 0x6000, scoped, tag = 'scratch operand']
  %s0 = inlined_call_operand.vmem [shape: f32[2,4,256], index: 0, kind: input, shape index: {}]
  %s1 = inlined_call_operand.vmem [shape: f32[24,256], index: 1, kind: input, shape index: {}]
  %s2 = inlined_call_operand.vmem [shape: bf16[16,24], index: 2, kind: input, shape index: {}]
  %s3 = inlined_call_operand.vmem [shape: f32[16,1], index: 3, kind: input, shape index: {}]
  %s4 = inlined_call_operand.vmem [shape: bf16[4,16], index: 4, kind: input, shape index: {}]
  %s5 = inlined_call_operand.vmem [shape: f32[4,1], index: 5, kind: input, shape index: {}]
  %s6 = inlined_call_operand.hbm [shape: bf16[4,16], index: 6, kind: input, shape index: {}]
  %s7 = inlined_call_operand.hbm [shape: f32[4,1], index: 7, kind: input, shape index: {}]
  %s8 = inlined_call_operand.vmem [shape: f32[4,1], index: 8, kind: input, shape index: {}]
  %s9 = inlined_call_operand.vmem [shape: f32[4,1], index: 9, kind: input, shape index: {}]
  %s10 = inlined_call_operand.vmem [shape: f32[2,4,256], index: 10, kind: output, shape index: {0}]
  %s11 = inlined_call_operand.vmem [shape: f32[2,4,3], index: 11, kind: output, shape index: {1}]
  %12 = xla_tuple %s10, %s11
  %s13 = sld [smem:[#allocation0]]
  $region89: #{_lambda_.8} parent=0
    _
  %s15 = ssub.s32 1, %s13
  %s16 = scalar_select 0, %s15, %s13
  $region1: #{_lambda_.8} parent=0
    #allocation3 [shape = 'u8[1024]{0}', space=vmem, size = 0x400, scoped, tag = 'input window, operand 6, single buffered']
    #allocation4 [shape = 's32[2]{0}', space=sflag, size = 0x8, scoped, tag = 'scoped memory for _lambda_.8']
    #allocation5 [shape = 'u8[2048]{0}', space=vmem, size = 0x800, scoped, tag = 'input window, operand 7, single buffered']
    #allocation6 [shape = 's32[1]{0}', space=sflag, size = 0x4, scoped, tag = 'scoped memory for _lambda_.8']
    %17 = vsyncpa [#allocation4], 0
    %18 = vsyncpa [#allocation6], 0
    loop: start=0, step=1, limit=4
    $region2: #{_lambda_.8} parent=1 // loop_pre_header
      _
    $region3: #{_lambda_.8} parent=1 // loop_header
      %s20 = sphi 0, %s24
      %p21 = scmp.ge.s32.totalorder %s20, 4
      %s30 = sphi 0, %s32
      %s33 = sphi 0, %s30
      %s34 = sphi 0, %s33
      %s50 = sphi 0, %s34
      %s54 = sphi 0, %s54
      %s56 = sphi 0, %s54
      %s57 = sphi 0, %s56
      %s71 = sphi 0, %s57
      %s75 = sphi 0, %s75
      %s77 = sphi 0, %s75
      %s78 = sphi 0, %s77
      %s92 = sphi 0, %s78
      %s96 = sphi 0, %s96
      %s98 = sphi 0, %s96
      %s99 = sphi 0, %s98
      %s113 = sphi 0, %s99
      %s117 = sphi 0, %s117
      %s119 = sphi 0, %s117
      %s120 = sphi 0, %s119
      %s134 = sphi 0, %s120
      %s138 = sphi 0, %s138
      %s140 = sphi 0, %s138
      %s141 = sphi 0, %s140
      %s155 = sphi 0, %s141
      %s159 = sphi 0, %s159
      %s161 = sphi 0, %s159
      %s162 = sphi 0, %s161
      %s176 = sphi 0, %s162
      %s180 = sphi 0, %s180
      %s182 = sphi 0, %s180
      %s183 = sphi 0, %s182
      %s197 = sphi 0, %s183
      %s201 = sphi 0, %s201
      %s203 = sphi 0, %s201
      %s204 = sphi 0, %s203
      %s218 = sphi 0, %s204
      %s222 = sphi 0, %s222
      %s224 = sphi 0, %s222
      %s225 = sphi 0, %s224
      %s239 = sphi 0, %s225
      %s245 = sphi 0, %s247
      %s248 = sphi 0, %s245
      %s249 = sphi 0, %s248
      %s265 = sphi 0, %s249
      %s271 = sphi 0, %s273
      %s274 = sphi 0, %s271
      %s275 = sphi 0, %s274
      %s291 = sphi 0, %s275
    $region4: #{_lambda_.8} parent=1 // loop_header_branch
      %23 = sbr.rel (%p21) target = $region8
    $region5: #{_lambda_.8} parent=1 // loop_body
      %s25 = ssub.s32 %s20, 1
      %s26 = ssub.s32 %s20, 2
      %s27 = sadd.s32 %s20, 1
      %s28 = ssub.s32 %s20, %s27
      %p29 = scmp.eq.s32.totalorder %s28, 0
      %s31 = sadd.s32 %s30, 1
      %s32 = scalar_select %p29, %s30, %s31
      %p35 = pneg %p29
      %p36 = scmp.eq.s32.totalorder %s20, 1
      %p37 = por %p35, %p36
      %p38 = scmp.ne.s32.totalorder %s30, %s33
      %p39 = scmp.eq.s32.totalorder %s20, 0
      %p40 = por %p38, %p39
      %p41 = scmp.ne.s32.totalorder %s30, %s33
      %p42 = scmp.eq.s32.totalorder %s25, 1
      %p43 = por %p41, %p42
      %p44 = scmp.ne.s32.totalorder %s33, %s34
      %p45 = scmp.eq.s32.totalorder %s25, 0
      %p46 = por %p44, %p45
      %p47 = scmp.ne.s32.totalorder %s33, %s34
      %p48 = scmp.eq.s32.totalorder %s26, 1
      %p49 = por %p47, %p48
      %p51 = scmp.ne.s32.totalorder %s34, %s50
      %p52 = scmp.eq.s32.totalorder %s26, 0
      %p53 = por %p51, %p52
      %s55 = sadd.s32 %s54, 1
      %p58 = scmp.eq.s32.totalorder %s20, 1
      %p59 = scmp.ne.s32.totalorder %s54, %s56
      %p60 = scmp.eq.s32.totalorder %s20, 0
      %p61 = por %p59, %p60
      %p62 = scmp.ne.s32.totalorder %s54, %s56
      %p63 = scmp.eq.s32.totalorder %s25, 1
      %p64 = por %p62, %p63
      %p65 = scmp.ne.s32.totalorder %s56, %s57
      %p66 = scmp.eq.s32.totalorder %s25, 0
      %p67 = por %p65, %p66
      %p68 = scmp.ne.s32.totalorder %s56, %s57
      %p69 = scmp.eq.s32.totalorder %s26, 1
      %p70 = por %p68, %p69
      %p72 = scmp.ne.s32.totalorder %s57, %s71
      %p73 = scmp.eq.s32.totalorder %s26, 0
      %p74 = por %p72, %p73
      %s76 = sadd.s32 %s75, 1
      %p79 = scmp.eq.s32.totalorder %s20, 1
      %p80 = scmp.ne.s32.totalorder %s75, %s77
      %p81 = scmp.eq.s32.totalorder %s20, 0
      %p82 = por %p80, %p81
      %p83 = scmp.ne.s32.totalorder %s75, %s77
      %p84 = scmp.eq.s32.totalorder %s25, 1
      %p85 = por %p83, %p84
      %p86 = scmp.ne.s32.totalorder %s77, %s78
      %p87 = scmp.eq.s32.totalorder %s25, 0
      %p88 = por %p86, %p87
      %p89 = scmp.ne.s32.totalorder %s77, %s78
      %p90 = scmp.eq.s32.totalorder %s26, 1
      %p91 = por %p89, %p90
      %p93 = scmp.ne.s32.totalorder %s78, %s92
      %p94 = scmp.eq.s32.totalorder %s26, 0
      %p95 = por %p93, %p94
      %s97 = sadd.s32 %s96, 1
      %p100 = scmp.eq.s32.totalorder %s20, 1
      %p101 = scmp.ne.s32.totalorder %s96, %s98
      %p102 = scmp.eq.s32.totalorder %s20, 0
      %p103 = por %p101, %p102
      %p104 = scmp.ne.s32.totalorder %s96, %s98
      %p105 = scmp.eq.s32.totalorder %s25, 1
      %p106 = por %p104, %p105
      %p107 = scmp.ne.s32.totalorder %s98, %s99
      %p108 = scmp.eq.s32.totalorder %s25, 0
      %p109 = por %p107, %p108
      %p110 = scmp.ne.s32.totalorder %s98, %s99
      %p111 = scmp.eq.s32.totalorder %s26, 1
      %p112 = por %p110, %p111
      %p114 = scmp.ne.s32.totalorder %s99, %s113
      %p115 = scmp.eq.s32.totalorder %s26, 0
      %p116 = por %p114, %p115
      %s118 = sadd.s32 %s117, 1
      %p121 = scmp.eq.s32.totalorder %s20, 1
      %p122 = scmp.ne.s32.totalorder %s117, %s119
      %p123 = scmp.eq.s32.totalorder %s20, 0
      %p124 = por %p122, %p123
      %p125 = scmp.ne.s32.totalorder %s117, %s119
      %p126 = scmp.eq.s32.totalorder %s25, 1
      %p127 = por %p125, %p126
      %p128 = scmp.ne.s32.totalorder %s119, %s120
      %p129 = scmp.eq.s32.totalorder %s25, 0
      %p130 = por %p128, %p129
      %p131 = scmp.ne.s32.totalorder %s119, %s120
      %p132 = scmp.eq.s32.totalorder %s26, 1
      %p133 = por %p131, %p132
      %p135 = scmp.ne.s32.totalorder %s120, %s134
      %p136 = scmp.eq.s32.totalorder %s26, 0
      %p137 = por %p135, %p136
      %s139 = sadd.s32 %s138, 1
      %p142 = scmp.eq.s32.totalorder %s20, 1
      %p143 = scmp.ne.s32.totalorder %s138, %s140
      %p144 = scmp.eq.s32.totalorder %s20, 0
      %p145 = por %p143, %p144
      %p146 = scmp.ne.s32.totalorder %s138, %s140
      %p147 = scmp.eq.s32.totalorder %s25, 1
      %p148 = por %p146, %p147
      %p149 = scmp.ne.s32.totalorder %s140, %s141
      %p150 = scmp.eq.s32.totalorder %s25, 0
      %p151 = por %p149, %p150
      %p152 = scmp.ne.s32.totalorder %s140, %s141
      %p153 = scmp.eq.s32.totalorder %s26, 1
      %p154 = por %p152, %p153
      %p156 = scmp.ne.s32.totalorder %s141, %s155
      %p157 = scmp.eq.s32.totalorder %s26, 0
      %p158 = por %p156, %p157
      %s160 = sadd.s32 %s159, 1
      %p163 = scmp.eq.s32.totalorder %s20, 1
      %p164 = scmp.ne.s32.totalorder %s159, %s161
      %p165 = scmp.eq.s32.totalorder %s20, 0
      %p166 = por %p164, %p165
      %p167 = scmp.ne.s32.totalorder %s159, %s161
      %p168 = scmp.eq.s32.totalorder %s25, 1
      %p169 = por %p167, %p168
      %p170 = scmp.ne.s32.totalorder %s161, %s162
      %p171 = scmp.eq.s32.totalorder %s25, 0
      %p172 = por %p170, %p171
      %p173 = scmp.ne.s32.totalorder %s161, %s162
      %p174 = scmp.eq.s32.totalorder %s26, 1
      %p175 = por %p173, %p174
      %p177 = scmp.ne.s32.totalorder %s162, %s176
      %p178 = scmp.eq.s32.totalorder %s26, 0
      %p179 = por %p177, %p178
      %s181 = sadd.s32 %s180, 1
      %p184 = scmp.eq.s32.totalorder %s20, 1
      %p185 = scmp.ne.s32.totalorder %s180, %s182
      %p186 = scmp.eq.s32.totalorder %s20, 0
      %p187 = por %p185, %p186
      %p188 = scmp.ne.s32.totalorder %s180, %s182
      %p189 = scmp.eq.s32.totalorder %s25, 1
      %p190 = por %p188, %p189
      %p191 = scmp.ne.s32.totalorder %s182, %s183
      %p192 = scmp.eq.s32.totalorder %s25, 0
      %p193 = por %p191, %p192
      %p194 = scmp.ne.s32.totalorder %s182, %s183
      %p195 = scmp.eq.s32.totalorder %s26, 1
      %p196 = por %p194, %p195
      %p198 = scmp.ne.s32.totalorder %s183, %s197
      %p199 = scmp.eq.s32.totalorder %s26, 0
      %p200 = por %p198, %p199
      %s202 = sadd.s32 %s201, 1
      %p205 = scmp.eq.s32.totalorder %s20, 1
      %p206 = scmp.ne.s32.totalorder %s201, %s203
      %p207 = scmp.eq.s32.totalorder %s20, 0
      %p208 = por %p206, %p207
      %p209 = scmp.ne.s32.totalorder %s201, %s203
      %p210 = scmp.eq.s32.totalorder %s25, 1
      %p211 = por %p209, %p210
      %p212 = scmp.ne.s32.totalorder %s203, %s204
      %p213 = scmp.eq.s32.totalorder %s25, 0
      %p214 = por %p212, %p213
      %p215 = scmp.ne.s32.totalorder %s203, %s204
      %p216 = scmp.eq.s32.totalorder %s26, 1
      %p217 = por %p215, %p216
      %p219 = scmp.ne.s32.totalorder %s204, %s218
      %p220 = scmp.eq.s32.totalorder %s26, 0
      %p221 = por %p219, %p220
      %s223 = sadd.s32 %s222, 1
      %p226 = scmp.eq.s32.totalorder %s20, 1
      %p227 = scmp.ne.s32.totalorder %s222, %s224
      %p228 = scmp.eq.s32.totalorder %s20, 0
      %p229 = por %p227, %p228
      %p230 = scmp.ne.s32.totalorder %s222, %s224
      %p231 = scmp.eq.s32.totalorder %s25, 1
      %p232 = por %p230, %p231
      %p233 = scmp.ne.s32.totalorder %s224, %s225
      %p234 = scmp.eq.s32.totalorder %s25, 0
      %p235 = por %p233, %p234
      %p236 = scmp.ne.s32.totalorder %s224, %s225
      %p237 = scmp.eq.s32.totalorder %s26, 1
      %p238 = por %p236, %p237
      %p240 = scmp.ne.s32.totalorder %s225, %s239
      %p241 = scmp.eq.s32.totalorder %s26, 0
      %p242 = por %p240, %p241
      %s243 = ssub.s32 %s20, %s27
      %p244 = scmp.eq.s32.totalorder %s243, 0
      %s246 = sadd.s32 %s245, 1
      %s247 = scalar_select %p244, %s245, %s246
      %p250 = pneg %p244
      %p251 = scmp.eq.s32.totalorder %s20, 1
      %p252 = por %p250, %p251
      %p253 = scmp.ne.s32.totalorder %s245, %s248
      %p254 = scmp.eq.s32.totalorder %s20, 0
      %p255 = por %p253, %p254
      %p256 = scmp.ne.s32.totalorder %s245, %s248
      %p257 = scmp.eq.s32.totalorder %s25, 1
      %p258 = por %p256, %p257
      %p259 = scmp.ne.s32.totalorder %s248, %s249
      %p260 = scmp.eq.s32.totalorder %s25, 0
      %p261 = por %p259, %p260
      %p262 = scmp.ne.s32.totalorder %s248, %s249
      %p263 = scmp.eq.s32.totalorder %s26, 1
      %p264 = por %p262, %p263
      %p266 = scmp.ne.s32.totalorder %s249, %s265
      %p267 = scmp.eq.s32.totalorder %s26, 0
      %p268 = por %p266, %p267
      %s269 = ssub.s32 %s20, %s27
      %p270 = scmp.eq.s32.totalorder %s269, 0
      %s272 = sadd.s32 %s271, 1
      %s273 = scalar_select %p270, %s271, %s272
      %p276 = pneg %p270
      %p277 = scmp.eq.s32.totalorder %s20, 1
      %p278 = por %p276, %p277
      %p279 = scmp.ne.s32.totalorder %s271, %s274
      %p280 = scmp.eq.s32.totalorder %s20, 0
      %p281 = por %p279, %p280
      %p282 = scmp.ne.s32.totalorder %s271, %s274
      %p283 = scmp.eq.s32.totalorder %s25, 1
      %p284 = por %p282, %p283
      %p285 = scmp.ne.s32.totalorder %s274, %s275
      %p286 = scmp.eq.s32.totalorder %s25, 0
      %p287 = por %p285, %p286
      %p288 = scmp.ne.s32.totalorder %s274, %s275
      %p289 = scmp.eq.s32.totalorder %s26, 1
      %p290 = por %p288, %p289
      %p292 = scmp.ne.s32.totalorder %s275, %s291
      %p293 = scmp.eq.s32.totalorder %s26, 0
      %p294 = por %p292, %p293
      %p295 = scmp.le.s32.totalorder 1, %s20
      %p296 = scmp.lt.s32.totalorder %s20, 3
      %p297 = pnand %p295, %p296
      %p298 = pneg %p297
      // Predicated region
      $region9: #{_lambda_.8} parent=5 // pred_check
        _
      $region10: #{_lambda_.8} parent=5 // pred_check_branch
        %300 = sbr.rel (%p297) target = $region12
      $region11: #{_lambda_.8} parent=5 // pred_region
        %s301 = ssub.s32 %s20, 1
        // Predicated region
        $region13: #{_lambda_.8} parent=11 // pred_check
          %p302 = pneg %p67
        $region14: #{_lambda_.8} parent=11 // pred_check_branch
          %304 = sbr.rel (%p302) target = $region16
        $region15: #{_lambda_.8} parent=11 // pred_region
          _
        $region16: #{_lambda_.8} parent=11 // pred_fallthru
          _
        // Predicated region
        $region17: #{_lambda_.8} parent=11 // pred_check
          %p305 = pneg %p88
        $region18: #{_lambda_.8} parent=11 // pred_check_branch
          %307 = sbr.rel (%p305) target = $region20
        $region19: #{_lambda_.8} parent=11 // pred_region
          _
        $region20: #{_lambda_.8} parent=11 // pred_fallthru
          _
        // Predicated region
        $region21: #{_lambda_.8} parent=11 // pred_check
          %p308 = pneg %p109
        $region22: #{_lambda_.8} parent=11 // pred_check_branch
          %310 = sbr.rel (%p308) target = $region24
        $region23: #{_lambda_.8} parent=11 // pred_region
          _
        $region24: #{_lambda_.8} parent=11 // pred_fallthru
          _
        // Predicated region
        $region25: #{_lambda_.8} parent=11 // pred_check
          %p311 = pneg %p130
        $region26: #{_lambda_.8} parent=11 // pred_check_branch
          %313 = sbr.rel (%p311) target = $region28
        $region27: #{_lambda_.8} parent=11 // pred_region
          _
        $region28: #{_lambda_.8} parent=11 // pred_fallthru
          _
        // Predicated region
        $region29: #{_lambda_.8} parent=11 // pred_check
          %p314 = pneg %p151
        $region30: #{_lambda_.8} parent=11 // pred_check_branch
          %316 = sbr.rel (%p314) target = $region32
        $region31: #{_lambda_.8} parent=11 // pred_region
          _
        $region32: #{_lambda_.8} parent=11 // pred_fallthru
          _
        // Predicated region
        $region33: #{_lambda_.8} parent=11 // pred_check
          %p317 = pneg %p172
        $region34: #{_lambda_.8} parent=11 // pred_check_branch
          %319 = sbr.rel (%p317) target = $region36
        $region35: #{_lambda_.8} parent=11 // pred_region
          %321 = vsyncadd [#allocation4], 0
          %s323 = sshll.u32 %s6, 4
          %s324 = int_to_ptr.hbm [resolvable:$true] %s323
          %s325 = sshll.u32 [#allocation3], 4
          %s326 = int_to_ptr.vmem [resolvable:$true] %s325
          %328 = dma.hbm_to_vmem [thread:$0]  %s324, 32, %s326, [#allocation4]
        $region36: #{_lambda_.8} parent=11 // pred_fallthru
          _
        // Predicated region
        $region37: #{_lambda_.8} parent=11 // pred_check
          %p329 = pneg %p193
        $region38: #{_lambda_.8} parent=11 // pred_check_branch
          %331 = sbr.rel (%p329) target = $region40
        $region39: #{_lambda_.8} parent=11 // pred_region
          %333 = vsyncadd [#allocation6], 0
          %s335 = sshll.u32 %s7, 4
          %s336 = int_to_ptr.hbm [resolvable:$true] %s335
          %s337 = sshll.u32 [#allocation5], 4
          %s338 = int_to_ptr.vmem [resolvable:$true] %s337
          %340 = dma.hbm_to_vmem [thread:$0]  %s336, 64, %s338, [#allocation6]
        $region40: #{_lambda_.8} parent=11 // pred_fallthru
          _
        // Predicated region
        $region41: #{_lambda_.8} parent=11 // pred_check
          %p341 = pneg %p214
        $region42: #{_lambda_.8} parent=11 // pred_check_branch
          %343 = sbr.rel (%p341) target = $region44
        $region43: #{_lambda_.8} parent=11 // pred_region
          _
        $region44: #{_lambda_.8} parent=11 // pred_fallthru
          _
        // Predicated region
        $region45: #{_lambda_.8} parent=11 // pred_check
          %p344 = pneg %p235
        $region46: #{_lambda_.8} parent=11 // pred_check_branch
          %346 = sbr.rel (%p344) target = $region48
        $region47: #{_lambda_.8} parent=11 // pred_region
          _
        $region48: #{_lambda_.8} parent=11 // pred_fallthru
          _
      $region12: #{_lambda_.8} parent=5 // pred_fallthru
        _
      %p347 = scmp.lt.s32.totalorder %s20, 2
      // Predicated region
      $region49: #{_lambda_.8} parent=5 // pred_check
        %p348 = pneg %p347
      $region50: #{_lambda_.8} parent=5 // pred_check_branch
        %350 = sbr.rel (%p348) target = $region52
      $region51: #{_lambda_.8} parent=5 // pred_region
        // Predicated region
        $region53: #{_lambda_.8} parent=51 // pred_check
          %p351 = pneg %p40
        $region54: #{_lambda_.8} parent=51 // pred_check_branch
          %353 = sbr.rel (%p351) target = $region56
        $region55: #{_lambda_.8} parent=51 // pred_region
          %p354 = scmp.lt.s32.totalorder %s20, 1
          %s355 = scalar_select %p354, %s20, 1
          %s356 = smul.addr %s355, 2
          %s357 = smul.addr %s356, 4
          %s358 = scalar_lea.vmem %s0, %s357
        $region56: #{_lambda_.8} parent=51 // pred_fallthru
          _
      $region52: #{_lambda_.8} parent=5 // pred_fallthru
        _
      %p359 = scmp.le.s32.totalorder 1, %s20
      %p360 = scmp.lt.s32.totalorder %s20, 3
      %p361 = pnand %p359, %p360
      %p362 = pneg %p361
      // Predicated region
      $region57: #{_lambda_.8} parent=5 // pred_check
        _
      $region58: #{_lambda_.8} parent=5 // pred_check_branch
        %364 = sbr.rel (%p361) target = $region60
      $region59: #{_lambda_.8} parent=5 // pred_region
        %s365 = ssub.s32 %s20, 1
        // Predicated region
        $region61: #{_lambda_.8} parent=59 // pred_check
          %p366 = pneg %p172
        $region62: #{_lambda_.8} parent=59 // pred_check_branch
          %368 = sbr.rel (%p366) target = $region64
        $region63: #{_lambda_.8} parent=59 // pred_region
          %370 = dma.done [#allocation4], 32
        $region64: #{_lambda_.8} parent=59 // pred_fallthru
          _
        // Predicated region
        $region65: #{_lambda_.8} parent=59 // pred_check
          %p371 = pneg %p193
        $region66: #{_lambda_.8} parent=59 // pred_check_branch
          %373 = sbr.rel (%p371) target = $region68
        $region67: #{_lambda_.8} parent=59 // pred_region
          %375 = dma.done [#allocation6], 64
        $region68: #{_lambda_.8} parent=59 // pred_fallthru
          _
        %p376 = scmp.lt.s32.totalorder %s25, 1
        %s377 = scalar_select %p376, %s25, 1
        %s378 = smul.addr %s377, 2
        %s379 = smul.addr %s378, 4
        %s380 = scalar_lea.vmem %s0, %s379
        %p381 = pneg %p46
        %p382 = pneg %p43
        %p383 = pneg %p67
        %p384 = pneg %p64
        %p385 = pneg %p88
        %p386 = pneg %p85
        %p387 = pneg %p109
        %p388 = pneg %p106
        %p389 = pneg %p130
        %p390 = pneg %p127
        %p391 = pneg %p151
        %p392 = pneg %p148
        %p393 = pneg %p172
        %p394 = pneg %p169
        %p395 = pneg %p193
        %p396 = pneg %p190
        %p397 = pneg %p214
        %p398 = pneg %p211
        %p399 = pneg %p235
        %p400 = pneg %p232
        %p401 = pneg %p261
        %p402 = pneg %p258
        %p403 = scmp.lt.s32.totalorder %s25, 1
        %s404 = scalar_select %p403, %s25, 1
        %s405 = smul.addr %s404, 2
        %s406 = smul.addr %s405, 4
        %s407 = scalar_lea.vmem %s10, %s406
        %p408 = pneg %p287
        %p409 = pneg %p284
        %p410 = scmp.lt.s32.totalorder %s25, 1
        %s411 = scalar_select %p410, %s25, 1
        %s412 = smul.addr %s411, 4
        %s413 = scalar_lea.vmem %s11, %s412
        %p414 = scmp.lt.s32.totalorder %s25, 1
        %s415 = scalar_select %p414, %s25, 1
        %s416 = smul.addr %s415, 2
        %s417 = smul.addr %s416, 4
        %s418 = scalar_lea.vmem %s0, %s417
        %p419 = scmp.lt.s32.totalorder %s25, 1
        %s420 = scalar_select %p419, %s25, 1
        %s421 = smul.addr %s420, 2
        %s422 = smul.addr %s421, 4
        %s423 = scalar_lea.vmem %s10, %s422
        %p424 = scmp.lt.s32.totalorder %s25, 1
        %s425 = scalar_select %p424, %s25, 1
        %s426 = smul.addr %s425, 4
        %s427 = scalar_lea.vmem %s11, %s426
        %v429 = vld [vmem:[%s418] sm:$0xff]
        %v430 = vld [vmem:[%s8] sm:$0xf]
        %432 = vset.pattern.permute.xlu0 0
        %433 = vperm.xlu0 %432, %v430
        %v434 = vpop.permute.xlu0 %433
        %v436 = vunpack.c.l.s4 839922192
        %v437 = vunpack.c.0.s8 %v436
        %v438 = vperm.slane %v434, %v437
        %v440 = vmul.f32 %v429, %v438
        %v441 = vld [vmem:[%s9] sm:$0xf]
        %443 = vset.pattern.permute.xlu0 0
        %444 = vperm.xlu0 %443, %v441
        %v445 = vpop.permute.xlu0 %444
        %v447 = vunpack.c.l.s4 839922192
        %v448 = vunpack.c.0.s8 %v447
        %v449 = vperm.slane %v445, %v448
        %v451 = vadd.f32 %v440, %v449
        %453 = vst [vmem:[#allocation1] ss:$2 sm:$0xff] %v451
        %v454 = vld.sshfl [vmem:[#allocation1] sm:$0xff pattern:$0x75316420]
        %v455 = vld.sshfl [vmem:[#allocation1 + $0x8] sm:$0xff pattern:$0x75316420]
        %458 = vrot.lane.b32.xlu0 %v454, 15
        %v459 = vpop.permute.xlu0 %458
        %460 = vrot.lane.b32.xlu0 %v455, 15
        %v461 = vpop.permute.xlu0 %460
        %v462 = vlaneseq
        %v463 = vand.u32 %v462, 127
        %vm464 = vcmp.lt.s32.totalorder %v463, 15
        %v465 = vsel %vm464, %v459, %v461
        %v466 = vsel %vm464, %v461, %v459
        %467 = vst [vmem:[#allocation2] sm:$0xf] %v466
        %468 = vst [vmem:[#allocation2 + $0x8] sm:$0xf] %v465
        %469 = vst [vmem:[#allocation1] ss:$2 sm:$0xff] %v451
        %v470 = vld.sshfl [vmem:[#allocation1] sm:$0xff pattern:$0x75316420]
        %v471 = vld.sshfl [vmem:[#allocation1 + $0x8] sm:$0xff pattern:$0x75316420]
        %474 = vrot.lane.b32.xlu0 %v470, 14
        %v475 = vpop.permute.xlu0 %474
        %476 = vrot.lane.b32.xlu0 %v471, 14
        %v477 = vpop.permute.xlu0 %476
        %vm478 = vcmp.lt.s32.totalorder %v463, 14
        %v479 = vsel %vm478, %v475, %v477
        %v480 = vsel %vm478, %v477, %v475
        %v483 = vrot.slane %v480, 4
        %v484 = vrot.slane %v479, 4
        %487 = vst [vmem:[#allocation2] sm:$0xf0] %v483
        %488 = vst [vmem:[#allocation2 + $0x8] sm:$0xf0] %v484
        %489 = vst [vmem:[#allocation1] ss:$2 sm:$0xff] %v451
        %v490 = vld.sshfl [vmem:[#allocation1] sm:$0xff pattern:$0x75316420]
        %v491 = vld.sshfl [vmem:[#allocation1 + $0x8] sm:$0xff pattern:$0x75316420]
        %494 = vrot.lane.b32.xlu0 %v490, 127
        %v495 = vpop.permute.xlu0 %494
        %496 = vrot.lane.b32.xlu0 %v491, 127
        %v497 = vpop.permute.xlu0 %496
        %vm498 = vcmp.lt.s32.totalorder %v463, 127
        %v499 = vsel %vm498, %v495, %v497
        %v500 = vsel %vm498, %v497, %v495
        %501 = vst [vmem:[#allocation2 + $0x10] sm:$0xf] %v499
        %502 = vst [vmem:[#allocation2 + $0x18] sm:$0xf] %v500
        %503 = vst [vmem:[#allocation1] ss:$2 sm:$0xff] %v451
        %v504 = vld.sshfl [vmem:[#allocation1] sm:$0xff pattern:$0x75316420]
        %v505 = vld.sshfl [vmem:[#allocation1 + $0x8] sm:$0xff pattern:$0x75316420]
        %508 = vrot.lane.b32.xlu0 %v504, 126
        %v509 = vpop.permute.xlu0 %508
        %510 = vrot.lane.b32.xlu0 %v505, 126
        %v511 = vpop.permute.xlu0 %510
        %vm512 = vcmp.lt.s32.totalorder %v463, 126
        %v513 = vsel %vm512, %v509, %v511
        %v514 = vsel %vm512, %v511, %v509
        %v517 = vrot.slane %v513, 4
        %v518 = vrot.slane %v514, 4
        %521 = vst [vmem:[#allocation2 + $0x10] sm:$0xf0] %v517
        %522 = vst [vmem:[#allocation2 + $0x18] sm:$0xf0] %v518
        %523 = vst [vmem:[#allocation1] ss:$2 sm:$0xff] %v451
        %v524 = vld.sshfl [vmem:[#allocation1] sm:$0xff pattern:$0x75316420]
        %v525 = vld.sshfl [vmem:[#allocation1 + $0x8] sm:$0xff pattern:$0x75316420]
        %528 = vrot.lane.b32.xlu0 %v524, 111
        %v529 = vpop.permute.xlu0 %528
        %530 = vrot.lane.b32.xlu0 %v525, 111
        %v531 = vpop.permute.xlu0 %530
        %vm532 = vcmp.lt.s32.totalorder %v463, 111
        %v533 = vsel %vm532, %v529, %v531
        %v534 = vsel %vm532, %v531, %v529
        %535 = vst [vmem:[#allocation2 + $0x20] sm:$0xf] %v533
        %536 = vst [vmem:[#allocation2 + $0x28] sm:$0xf] %v534
        %537 = vst [vmem:[#allocation1] ss:$2 sm:$0xff] %v451
        %v538 = vld.sshfl [vmem:[#allocation1] sm:$0xff pattern:$0x75316420]
        %v539 = vld.sshfl [vmem:[#allocation1 + $0x8] sm:$0xff pattern:$0x75316420]
        %542 = vrot.lane.b32.xlu0 %v538, 110
        %v543 = vpop.permute.xlu0 %542
        %544 = vrot.lane.b32.xlu0 %v539, 110
        %v545 = vpop.permute.xlu0 %544
        %vm546 = vcmp.lt.s32.totalorder %v463, 110
        %v547 = vsel %vm546, %v543, %v545
        %v548 = vsel %vm546, %v545, %v543
        %v551 = vrot.slane %v547, 4
        %v552 = vrot.slane %v548, 4
        %555 = vst [vmem:[#allocation2 + $0x20] sm:$0xf0] %v551
        %556 = vst [vmem:[#allocation2 + $0x28] sm:$0xf0] %v552
        %v557 = vld [vmem:[#allocation2] sm:$0xff]
        %v558 = vld [vmem:[#allocation2 + $0x8] sm:$0xff]
        %v559 = vld [vmem:[#allocation2 + $0x10] sm:$0xff]
        %v560 = vld [vmem:[#allocation2 + $0x18] sm:$0xff]
        %v561 = vld [vmem:[#allocation2 + $0x20] sm:$0xff]
        %v562 = vld [vmem:[#allocation2 + $0x28] sm:$0xff]
        %v563 = vld [vmem:[%s1] sm:$0xff]
        %v564 = vld [vmem:[%s1 + $0x8] sm:$0xff]
        %v565 = vld [vmem:[%s1 + $0x10] sm:$0xff]
        %v566 = vld [vmem:[%s1 + $0x18] sm:$0xff]
        %v567 = vld [vmem:[%s1 + $0x20] sm:$0xff]
        %v568 = vld [vmem:[%s1 + $0x28] sm:$0xff]
        %v569 = vmul.f32 %v557, %v563
        %v570 = vmul.f32 %v558, %v564
        %v571 = vmul.f32 %v559, %v565
        %v572 = vmul.f32 %v560, %v566
        %v573 = vmul.f32 %v561, %v567
        %v574 = vmul.f32 %v562, %v568
        %v575 = vpack.c.bf16 %v571, %v569
        %v576 = vpack.c.bf16 %v572, %v570
        %v577 = vpack.c.bf16 %v573, %v573
        %v578 = vpack.c.bf16 %v574, %v574
        %v579 = vld [vmem:[%s2] sm:$0xf]
        %v580 = vld [vmem:[%s2 + $0x4] sm:$0xf]
        %v581 = vld [vmem:[%s3] sm:$0xff]
        %v582 = vld [vmem:[%s3 + $0x8] sm:$0xff]
        %584 = vset.pattern.permute.xlu0 0
        %585 = vperm.xlu0 %584, %v581
        %v586 = vpop.permute.xlu0 %585
        %589 = vset.pattern.permute.xlu0 0
        %590 = vperm.xlu0 %589, %v582
        %v591 = vpop.permute.xlu0 %590
        %v595 = vunpack.c.l.b16 %v579
        %v596 = vunpack.c.l.b16 %v580
        %v597 = vpack.c.b16 %v596, %v595
        %vm598 = vcmask 195584
        %v600 = vsel %vm598, %v597, 0
        %vm602 = vcmask 1043456
        %v604 = vsel %vm602, %v577, 0
        %v607 = vsel %vm602, %v578, 0
        %609 = vmatpush.bf16.msra.mxu0 0
        %610 = vmatpush.bf16.msra.mxu0 0
        %611 = vmatpush.bf16.msra.mxu0 0
        %612 = vmatpush.bf16.msra.mxu0 0
        %613 = vmatpush.bf16.msra.mxu0 0
        %614 = vmatpush.bf16.msra.mxu0 0
        %615 = vmatpush.bf16.msra.mxu0 %v604
        %616 = vmatpush.bf16.msra.mxu0 %v575
        %617 = vmatmul.bf16.gmra.mxu0 %v600
        %v618 = vpop.f32.mrf.mxu0
        %v619 = vadd.f32 %v586, %v618
        %v620 = vpop.f32.mrf.mxu0
        %v621 = vadd.f32 %v591, %v620
        %622 = vdwg.mxu0
        %623 = vmatpush.bf16.msra.mxu0 0
        %624 = vmatpush.bf16.msra.mxu0 0
        %625 = vmatpush.bf16.msra.mxu0 0
        %626 = vmatpush.bf16.msra.mxu0 0
        %627 = vmatpush.bf16.msra.mxu0 0
        %628 = vmatpush.bf16.msra.mxu0 0
        %629 = vmatpush.bf16.msra.mxu0 %v607
        %630 = vmatpush.bf16.msra.mxu0 %v576
        %631 = vmatmul.bf16.gmra.mxu0 %v600
        %v632 = vpop.f32.mrf.mxu0
        %v633 = vadd.f32 %v586, %v632
        %v634 = vpop.f32.mrf.mxu0
        %v635 = vadd.f32 %v591, %v634
        %636 = vdwg.mxu0
        %v637 = vmax.f32 %v619, 0.0
        %v638 = vmax.f32 %v633, 0.0
        %v639 = vmax.f32 %v621, 0.0
        %v640 = vmax.f32 %v635, 0.0
        %v641 = vpack.c.bf16 %v639, %v637
        %v642 = vpack.c.bf16 %v640, %v638
        %v643 = vld [vmem:[%s4] sm:$0x3]
        %v644 = vld [vmem:[%s5] sm:$0xf]
        %646 = vset.pattern.permute.xlu0 0
        %647 = vperm.xlu0 %646, %v644
        %v648 = vpop.permute.xlu0 %647
        %vm650 = vcmask 130048
        %v652 = vsel %vm650, %v643, 0
        %654 = vmatpush.bf16.msra.mxu0 0
        %655 = vmatpush.bf16.msra.mxu0 0
        %656 = vmatpush.bf16.msra.mxu0 0
        %657 = vmatpush.bf16.msra.mxu0 0
        %658 = vmatpush.bf16.msra.mxu0 0
        %659 = vmatpush.bf16.msra.mxu0 0
        %660 = vmatpush.bf16.msra.mxu0 0
        %661 = vmatpush.bf16.msra.mxu0 %v641
        %662 = vmatmul.bf16.gmra.mxu0 %v652
        %v663 = vpop.f32.mrf.mxu0
        %v664 = vadd.f32 %v648, %v663
        %v665 = vpop.f32.mrf.mxu0
        %666 = vdwg.mxu0
        %667 = vmatpush.bf16.msra.mxu0 0
        %668 = vmatpush.bf16.msra.mxu0 0
        %669 = vmatpush.bf16.msra.mxu0 0
        %670 = vmatpush.bf16.msra.mxu0 0
        %671 = vmatpush.bf16.msra.mxu0 0
        %672 = vmatpush.bf16.msra.mxu0 0
        %673 = vmatpush.bf16.msra.mxu0 0
        %674 = vmatpush.bf16.msra.mxu0 %v642
        %675 = vmatmul.bf16.gmra.mxu0 %v652
        %v676 = vpop.f32.mrf.mxu0
        %v677 = vadd.f32 %v648, %v676
        %v678 = vpop.f32.mrf.mxu0
        %679 = vdwg.mxu0
        %v680 = vld [vmem:[#allocation3] sm:$0x3]
        %v681 = vld [vmem:[#allocation5] sm:$0xf]
        %683 = vset.pattern.permute.xlu0 0
        %684 = vperm.xlu0 %683, %v681
        %v685 = vpop.permute.xlu0 %684
        %v688 = vsel %vm650, %v680, 0
        %690 = vmatpush.bf16.msra.mxu0 0
        %691 = vmatpush.bf16.msra.mxu0 0
        %692 = vmatpush.bf16.msra.mxu0 0
        %693 = vmatpush.bf16.msra.mxu0 0
        %694 = vmatpush.bf16.msra.mxu0 0
        %695 = vmatpush.bf16.msra.mxu0 0
        %696 = vmatpush.bf16.msra.mxu0 0
        %697 = vmatpush.bf16.msra.mxu0 %v641
        %698 = vmatmul.bf16.gmra.mxu0 %v688
        %v699 = vpop.f32.mrf.mxu0
        %v700 = vadd.f32 %v685, %v699
        %v701 = vpop.f32.mrf.mxu0
        %702 = vdwg.mxu0
        %703 = vmatpush.bf16.msra.mxu0 0
        %704 = vmatpush.bf16.msra.mxu0 0
        %705 = vmatpush.bf16.msra.mxu0 0
        %706 = vmatpush.bf16.msra.mxu0 0
        %707 = vmatpush.bf16.msra.mxu0 0
        %708 = vmatpush.bf16.msra.mxu0 0
        %709 = vmatpush.bf16.msra.mxu0 0
        %710 = vmatpush.bf16.msra.mxu0 %v642
        %711 = vmatmul.bf16.gmra.mxu0 %v688
        %v712 = vpop.f32.mrf.mxu0
        %v713 = vadd.f32 %v685, %v712
        %v714 = vpop.f32.mrf.mxu0
        %715 = vdwg.mxu0
        %v716 = vadd.f32 %v700, 2.0
        %v717 = vadd.f32 %v713, 2.0
        %v718 = vmin.f32 %v716, 0.0
        %v719 = vmin.f32 %v717, 0.0
        %v720 = vand.u32 2147483647, %v716
        %v721 = vand.u32 2147483647, %v717
        %v722 = vsub.f32 0.0, %v720
        %v723 = vsub.f32 0.0, %v721
        %v724 = vmul.f32 %v722, 1.442695
        %v725 = vpow.pop %v724
        %v726 = vmul.f32 %v723, 1.442695
        %v727 = vpow.pop %v726
        %v728 = vadd.f32 %v725, 1.0
        %v729 = vadd.f32 %v727, 1.0
        %v730 = vlog2.pop %v728
        %v731 = vmul.f32 %v730, 0.6931472
        %v732 = vlog2.pop %v729
        %v733 = vmul.f32 %v732, 0.6931472
        %v734 = vsub.f32 %v718, %v731
        %v735 = vsub.f32 %v719, %v733
        %v736 = vmul.f32 %v734, 1.442695
        %v737 = vpow.pop %v736
        %v738 = vmul.f32 %v735, 1.442695
        %v739 = vpow.pop %v738
        %740 = vst [vmem:[#allocation1] ss:$2 sm:$0xff] %v451
        %v741 = vld.sshfl [vmem:[#allocation1] sm:$0xff pattern:$0x75316420]
        %v742 = vld.sshfl [vmem:[#allocation1 + $0x8] sm:$0xff pattern:$0x75316420]
        %v745 = vmul.f32 %v737, %v741
        %v746 = vmul.f32 %v739, %v742
        %v747 = vadd.f32 %v745, %v664
        %v748 = vadd.f32 %v746, %v677
        %v751 = vrot.slane %v748, 4
        %v752 = vsel %vm602, %v747, %v751
        %754 = vst [vmem:[%s423] sm:$0xff] %v752
        %v755 = vsel %vm602, %v747, 0.0
        %v756 = vsel %vm602, %v748, 0.0
        %v757 = vadd.f32 %v755, %v756
        %758 = vadd.xlane.f32.xlu0 %v757
        %v759 = vpop.xlane.xlu0 %758
        %vm760 = vcmask 3072
        %761 = vst.msk [vmem:[%s427] sm:$0xf] %vm760, %v759
        %v762 = vmul.f32 %v747, %v747
        %v763 = vmul.f32 %v748, %v748
        %v764 = vsel %vm602, %v762, 0.0
        %v765 = vsel %vm602, %v763, 0.0
        %v766 = vadd.f32 %v764, %v765
        %767 = vadd.xlane.f32.xlu0 %v766
        %v768 = vpop.xlane.xlu0 %767
        %vm769 = vcmask 11272
        %770 = vst.msk [vmem:[%s427] sm:$0xf] %vm769, %v768
        %v771 = vsel %vm602, %v734, 0.0
        %v772 = vsel %vm602, %v735, 0.0
        %v773 = vadd.f32 %v771, %v772
        %774 = vadd.xlane.f32.xlu0 %v773
        %v775 = vpop.xlane.xlu0 %774
        %vm776 = vcmask 19472
        %777 = vst.msk [vmem:[%s427] sm:$0xf] %vm776, %v775
        %p778 = scmp.lt.s32.totalorder %s25, 1
        %s779 = scalar_select %p778, %s25, 1
        %s780 = smul.addr %s779, 2
        %s781 = smul.addr %s780, 4
        %s782 = scalar_lea.vmem %s10, %s781
        %p783 = scmp.lt.s32.totalorder %s25, 1
        %s784 = scalar_select %p783, %s25, 1
        %s785 = smul.addr %s784, 4
        %s786 = scalar_lea.vmem %s11, %s785
        // Predicated region
        $region69: #{_lambda_.8} parent=59 // pred_check
          %p787 = pneg %p258
        $region70: #{_lambda_.8} parent=59 // pred_check_branch
          %789 = sbr.rel (%p787) target = $region72
        $region71: #{_lambda_.8} parent=59 // pred_region
          _
        $region72: #{_lambda_.8} parent=59 // pred_fallthru
          _
        // Predicated region
        $region73: #{_lambda_.8} parent=59 // pred_check
          %p790 = pneg %p284
        $region74: #{_lambda_.8} parent=59 // pred_check_branch
          %792 = sbr.rel (%p790) target = $region76
        $region75: #{_lambda_.8} parent=59 // pred_region
          _
        $region76: #{_lambda_.8} parent=59 // pred_fallthru
          _
      $region60: #{_lambda_.8} parent=5 // pred_fallthru
        _
      %p793 = scmp.le.s32.totalorder 2, %s20
      // Predicated region
      $region77: #{_lambda_.8} parent=5 // pred_check
        %p794 = pneg %p793
      $region78: #{_lambda_.8} parent=5 // pred_check_branch
        %796 = sbr.rel (%p794) target = $region80
      $region79: #{_lambda_.8} parent=5 // pred_region
        %s797 = ssub.s32 %s20, 2
        // Predicated region
        $region81: #{_lambda_.8} parent=79 // pred_check
          %p798 = pneg %p264
        $region82: #{_lambda_.8} parent=79 // pred_check_branch
          %800 = sbr.rel (%p798) target = $region84
        $region83: #{_lambda_.8} parent=79 // pred_region
          %p801 = scmp.lt.s32.totalorder %s26, 1
          %s802 = scalar_select %p801, %s26, 1
          %s803 = smul.addr %s802, 2
          %s804 = smul.addr %s803, 4
          %s805 = scalar_lea.vmem %s10, %s804
        $region84: #{_lambda_.8} parent=79 // pred_fallthru
          _
        // Predicated region
        $region85: #{_lambda_.8} parent=79 // pred_check
          %p806 = pneg %p290
        $region86: #{_lambda_.8} parent=79 // pred_check_branch
          %808 = sbr.rel (%p806) target = $region88
        $region87: #{_lambda_.8} parent=79 // pred_region
          %p809 = scmp.lt.s32.totalorder %s26, 1
          %s810 = scalar_select %p809, %s26, 1
          %s811 = smul.addr %s810, 4
          %s812 = scalar_lea.vmem %s11, %s811
        $region88: #{_lambda_.8} parent=79 // pred_fallthru
          _
      $region80: #{_lambda_.8} parent=5 // pred_fallthru
        _
    $region6: #{_lambda_.8} parent=1 // loop_footer
      %s24 = sadd.s32 1, %s20
    $region7: #{_lambda_.8} parent=1 // loop_footer_branch
      %19 = sbr.rel target = $region3
    $region8: #{_lambda_.8} parent=1 // loop_exit
      _
    %813 = vsyncpa [#allocation4], 1
    %s814 = scalar_lea.sflag [#allocation4], 1
    %815 = vsyncpa %s814, 1
    %816 = vsyncpa [#allocation6], 1

// kernel: _lambda_.7
$region0: #{_lambda_.7}
  #allocation0 [shape = 'u32[]', space=smem, size = 0x4, offset = 0x4, fixed_abs, tag = 'smem constant byte address 0x4 - core index']
  #allocation1 [shape = 'u32[72,128]{1,0:T(1,128)}', space=vmem, size = 0x9000, scoped, tag = 'internal scratch']
  #allocation2 [shape = 'f32[24,256]{1,0:T(8,128)}', space=vmem, size = 0x6000, scoped, tag = 'scratch operand']
  %s0 = inlined_call_operand.vmem [shape: f32[2,4,256], index: 0, kind: input, shape index: {}]
  %s1 = inlined_call_operand.vmem [shape: f32[24,256], index: 1, kind: input, shape index: {}]
  %s2 = inlined_call_operand.hbm [shape: bf16[16,24], index: 2, kind: input, shape index: {}]
  %s3 = inlined_call_operand.vmem [shape: f32[16,1], index: 3, kind: input, shape index: {}]
  %s4 = inlined_call_operand.hbm [shape: bf16[4,16], index: 4, kind: input, shape index: {}]
  %s5 = inlined_call_operand.hbm [shape: f32[4,1], index: 5, kind: input, shape index: {}]
  %s6 = inlined_call_operand.hbm [shape: bf16[4,16], index: 6, kind: input, shape index: {}]
  %s7 = inlined_call_operand.hbm [shape: f32[4,1], index: 7, kind: input, shape index: {}]
  %s8 = inlined_call_operand.vmem [shape: f32[4,1], index: 8, kind: input, shape index: {}]
  %s9 = inlined_call_operand.vmem [shape: f32[4,1], index: 9, kind: input, shape index: {}]
  %s10 = inlined_call_operand.vmem [shape: f32[2,4,256], index: 10, kind: output, shape index: {0}]
  %s11 = inlined_call_operand.vmem [shape: f32[2,4,3], index: 11, kind: output, shape index: {1}]
  %12 = xla_tuple %s10, %s11
  %s13 = sld [smem:[#allocation0]]
  $region101: #{_lambda_.7} parent=0
    _
  %s15 = ssub.s32 1, %s13
  %s16 = scalar_select 0, %s15, %s13
  $region1: #{_lambda_.7} parent=0
    #allocation3 [shape = 'u8[4096]{0}', space=vmem, size = 0x1000, scoped, tag = 'input window, operand 2, single buffered']
    #allocation4 [shape = 's32[2]{0}', space=sflag, size = 0x8, scoped, tag = 'scoped memory for _lambda_.7']
    #allocation5 [shape = 'u8[1024]{0}', space=vmem, size = 0x400, scoped, tag = 'input window, operand 4, single buffered']
    #allocation6 [shape = 's32[1]{0}', space=sflag, size = 0x4, scoped, tag = 'scoped memory for _lambda_.7']
    #allocation7 [shape = 'u8[2048]{0}', space=vmem, size = 0x800, scoped, tag = 'input window, operand 5, single buffered']
    #allocation8 [shape = 'u8[1024]{0}', space=vmem, size = 0x400, scoped, tag = 'input window, operand 6, single buffered']
    #allocation9 [shape = 's32[1]{0}', space=sflag, size = 0x4, scoped, tag = 'scoped memory for _lambda_.7']
    #allocation10 [shape = 'u8[2048]{0}', space=vmem, size = 0x800, scoped, tag = 'input window, operand 7, single buffered']
    %17 = vsyncpa [#allocation4], 0
    %18 = vsyncpa [#allocation6], 0
    %19 = vsyncpa [#allocation9], 0
    loop: start=0, step=1, limit=4
    $region2: #{_lambda_.7} parent=1 // loop_pre_header
      _
    $region3: #{_lambda_.7} parent=1 // loop_header
      %s21 = sphi 0, %s25
      %p22 = scmp.ge.s32.totalorder %s21, 4
      %s31 = sphi 0, %s33
      %s34 = sphi 0, %s31
      %s35 = sphi 0, %s34
      %s51 = sphi 0, %s35
      %s55 = sphi 0, %s55
      %s57 = sphi 0, %s55
      %s58 = sphi 0, %s57
      %s72 = sphi 0, %s58
      %s76 = sphi 0, %s76
      %s78 = sphi 0, %s76
      %s79 = sphi 0, %s78
      %s93 = sphi 0, %s79
      %s97 = sphi 0, %s97
      %s99 = sphi 0, %s97
      %s100 = sphi 0, %s99
      %s114 = sphi 0, %s100
      %s118 = sphi 0, %s118
      %s120 = sphi 0, %s118
      %s121 = sphi 0, %s120
      %s135 = sphi 0, %s121
      %s139 = sphi 0, %s139
      %s141 = sphi 0, %s139
      %s142 = sphi 0, %s141
      %s156 = sphi 0, %s142
      %s160 = sphi 0, %s160
      %s162 = sphi 0, %s160
      %s163 = sphi 0, %s162
      %s177 = sphi 0, %s163
      %s181 = sphi 0, %s181
      %s183 = sphi 0, %s181
      %s184 = sphi 0, %s183
      %s198 = sphi 0, %s184
      %s202 = sphi 0, %s202
      %s204 = sphi 0, %s202
      %s205 = sphi 0, %s204
      %s219 = sphi 0, %s205
      %s223 = sphi 0, %s223
      %s225 = sphi 0, %s223
      %s226 = sphi 0, %s225
      %s240 = sphi 0, %s226
      %s246 = sphi 0, %s248
      %s249 = sphi 0, %s246
      %s250 = sphi 0, %s249
      %s266 = sphi 0, %s250
      %s272 = sphi 0, %s274
      %s275 = sphi 0, %s272
      %s276 = sphi 0, %s275
      %s292 = sphi 0, %s276
    $region4: #{_lambda_.7} parent=1 // loop_header_branch
      %24 = sbr.rel (%p22) target = $region8
    $region5: #{_lambda_.7} parent=1 // loop_body
      %s26 = ssub.s32 %s21, 1
      %s27 = ssub.s32 %s21, 2
      %s28 = sadd.s32 %s21, 1
      %s29 = ssub.s32 %s21, %s28
      %p30 = scmp.eq.s32.totalorder %s29, 0
      %s32 = sadd.s32 %s31, 1
      %s33 = scalar_select %p30, %s31, %s32
      %p36 = pneg %p30
      %p37 = scmp.eq.s32.totalorder %s21, 1
      %p38 = por %p36, %p37
      %p39 = scmp.ne.s32.totalorder %s31, %s34
      %p40 = scmp.eq.s32.totalorder %s21, 0
      %p41 = por %p39, %p40
      %p42 = scmp.ne.s32.totalorder %s31, %s34
      %p43 = scmp.eq.s32.totalorder %s26, 1
      %p44 = por %p42, %p43
      %p45 = scmp.ne.s32.totalorder %s34, %s35
      %p46 = scmp.eq.s32.totalorder %s26, 0
      %p47 = por %p45, %p46
      %p48 = scmp.ne.s32.totalorder %s34, %s35
      %p49 = scmp.eq.s32.totalorder %s27, 1
      %p50 = por %p48, %p49
      %p52 = scmp.ne.s32.totalorder %s35, %s51
      %p53 = scmp.eq.s32.totalorder %s27, 0
      %p54 = por %p52, %p53
      %s56 = sadd.s32 %s55, 1
      %p59 = scmp.eq.s32.totalorder %s21, 1
      %p60 = scmp.ne.s32.totalorder %s55, %s57
      %p61 = scmp.eq.s32.totalorder %s21, 0
      %p62 = por %p60, %p61
      %p63 = scmp.ne.s32.totalorder %s55, %s57
      %p64 = scmp.eq.s32.totalorder %s26, 1
      %p65 = por %p63, %p64
      %p66 = scmp.ne.s32.totalorder %s57, %s58
      %p67 = scmp.eq.s32.totalorder %s26, 0
      %p68 = por %p66, %p67
      %p69 = scmp.ne.s32.totalorder %s57, %s58
      %p70 = scmp.eq.s32.totalorder %s27, 1
      %p71 = por %p69, %p70
      %p73 = scmp.ne.s32.totalorder %s58, %s72
      %p74 = scmp.eq.s32.totalorder %s27, 0
      %p75 = por %p73, %p74
      %s77 = sadd.s32 %s76, 1
      %p80 = scmp.eq.s32.totalorder %s21, 1
      %p81 = scmp.ne.s32.totalorder %s76, %s78
      %p82 = scmp.eq.s32.totalorder %s21, 0
      %p83 = por %p81, %p82
      %p84 = scmp.ne.s32.totalorder %s76, %s78
      %p85 = scmp.eq.s32.totalorder %s26, 1
      %p86 = por %p84, %p85
      %p87 = scmp.ne.s32.totalorder %s78, %s79
      %p88 = scmp.eq.s32.totalorder %s26, 0
      %p89 = por %p87, %p88
      %p90 = scmp.ne.s32.totalorder %s78, %s79
      %p91 = scmp.eq.s32.totalorder %s27, 1
      %p92 = por %p90, %p91
      %p94 = scmp.ne.s32.totalorder %s79, %s93
      %p95 = scmp.eq.s32.totalorder %s27, 0
      %p96 = por %p94, %p95
      %s98 = sadd.s32 %s97, 1
      %p101 = scmp.eq.s32.totalorder %s21, 1
      %p102 = scmp.ne.s32.totalorder %s97, %s99
      %p103 = scmp.eq.s32.totalorder %s21, 0
      %p104 = por %p102, %p103
      %p105 = scmp.ne.s32.totalorder %s97, %s99
      %p106 = scmp.eq.s32.totalorder %s26, 1
      %p107 = por %p105, %p106
      %p108 = scmp.ne.s32.totalorder %s99, %s100
      %p109 = scmp.eq.s32.totalorder %s26, 0
      %p110 = por %p108, %p109
      %p111 = scmp.ne.s32.totalorder %s99, %s100
      %p112 = scmp.eq.s32.totalorder %s27, 1
      %p113 = por %p111, %p112
      %p115 = scmp.ne.s32.totalorder %s100, %s114
      %p116 = scmp.eq.s32.totalorder %s27, 0
      %p117 = por %p115, %p116
      %s119 = sadd.s32 %s118, 1
      %p122 = scmp.eq.s32.totalorder %s21, 1
      %p123 = scmp.ne.s32.totalorder %s118, %s120
      %p124 = scmp.eq.s32.totalorder %s21, 0
      %p125 = por %p123, %p124
      %p126 = scmp.ne.s32.totalorder %s118, %s120
      %p127 = scmp.eq.s32.totalorder %s26, 1
      %p128 = por %p126, %p127
      %p129 = scmp.ne.s32.totalorder %s120, %s121
      %p130 = scmp.eq.s32.totalorder %s26, 0
      %p131 = por %p129, %p130
      %p132 = scmp.ne.s32.totalorder %s120, %s121
      %p133 = scmp.eq.s32.totalorder %s27, 1
      %p134 = por %p132, %p133
      %p136 = scmp.ne.s32.totalorder %s121, %s135
      %p137 = scmp.eq.s32.totalorder %s27, 0
      %p138 = por %p136, %p137
      %s140 = sadd.s32 %s139, 1
      %p143 = scmp.eq.s32.totalorder %s21, 1
      %p144 = scmp.ne.s32.totalorder %s139, %s141
      %p145 = scmp.eq.s32.totalorder %s21, 0
      %p146 = por %p144, %p145
      %p147 = scmp.ne.s32.totalorder %s139, %s141
      %p148 = scmp.eq.s32.totalorder %s26, 1
      %p149 = por %p147, %p148
      %p150 = scmp.ne.s32.totalorder %s141, %s142
      %p151 = scmp.eq.s32.totalorder %s26, 0
      %p152 = por %p150, %p151
      %p153 = scmp.ne.s32.totalorder %s141, %s142
      %p154 = scmp.eq.s32.totalorder %s27, 1
      %p155 = por %p153, %p154
      %p157 = scmp.ne.s32.totalorder %s142, %s156
      %p158 = scmp.eq.s32.totalorder %s27, 0
      %p159 = por %p157, %p158
      %s161 = sadd.s32 %s160, 1
      %p164 = scmp.eq.s32.totalorder %s21, 1
      %p165 = scmp.ne.s32.totalorder %s160, %s162
      %p166 = scmp.eq.s32.totalorder %s21, 0
      %p167 = por %p165, %p166
      %p168 = scmp.ne.s32.totalorder %s160, %s162
      %p169 = scmp.eq.s32.totalorder %s26, 1
      %p170 = por %p168, %p169
      %p171 = scmp.ne.s32.totalorder %s162, %s163
      %p172 = scmp.eq.s32.totalorder %s26, 0
      %p173 = por %p171, %p172
      %p174 = scmp.ne.s32.totalorder %s162, %s163
      %p175 = scmp.eq.s32.totalorder %s27, 1
      %p176 = por %p174, %p175
      %p178 = scmp.ne.s32.totalorder %s163, %s177
      %p179 = scmp.eq.s32.totalorder %s27, 0
      %p180 = por %p178, %p179
      %s182 = sadd.s32 %s181, 1
      %p185 = scmp.eq.s32.totalorder %s21, 1
      %p186 = scmp.ne.s32.totalorder %s181, %s183
      %p187 = scmp.eq.s32.totalorder %s21, 0
      %p188 = por %p186, %p187
      %p189 = scmp.ne.s32.totalorder %s181, %s183
      %p190 = scmp.eq.s32.totalorder %s26, 1
      %p191 = por %p189, %p190
      %p192 = scmp.ne.s32.totalorder %s183, %s184
      %p193 = scmp.eq.s32.totalorder %s26, 0
      %p194 = por %p192, %p193
      %p195 = scmp.ne.s32.totalorder %s183, %s184
      %p196 = scmp.eq.s32.totalorder %s27, 1
      %p197 = por %p195, %p196
      %p199 = scmp.ne.s32.totalorder %s184, %s198
      %p200 = scmp.eq.s32.totalorder %s27, 0
      %p201 = por %p199, %p200
      %s203 = sadd.s32 %s202, 1
      %p206 = scmp.eq.s32.totalorder %s21, 1
      %p207 = scmp.ne.s32.totalorder %s202, %s204
      %p208 = scmp.eq.s32.totalorder %s21, 0
      %p209 = por %p207, %p208
      %p210 = scmp.ne.s32.totalorder %s202, %s204
      %p211 = scmp.eq.s32.totalorder %s26, 1
      %p212 = por %p210, %p211
      %p213 = scmp.ne.s32.totalorder %s204, %s205
      %p214 = scmp.eq.s32.totalorder %s26, 0
      %p215 = por %p213, %p214
      %p216 = scmp.ne.s32.totalorder %s204, %s205
      %p217 = scmp.eq.s32.totalorder %s27, 1
      %p218 = por %p216, %p217
      %p220 = scmp.ne.s32.totalorder %s205, %s219
      %p221 = scmp.eq.s32.totalorder %s27, 0
      %p222 = por %p220, %p221
      %s224 = sadd.s32 %s223, 1
      %p227 = scmp.eq.s32.totalorder %s21, 1
      %p228 = scmp.ne.s32.totalorder %s223, %s225
      %p229 = scmp.eq.s32.totalorder %s21, 0
      %p230 = por %p228, %p229
      %p231 = scmp.ne.s32.totalorder %s223, %s225
      %p232 = scmp.eq.s32.totalorder %s26, 1
      %p233 = por %p231, %p232
      %p234 = scmp.ne.s32.totalorder %s225, %s226
      %p235 = scmp.eq.s32.totalorder %s26, 0
      %p236 = por %p234, %p235
      %p237 = scmp.ne.s32.totalorder %s225, %s226
      %p238 = scmp.eq.s32.totalorder %s27, 1
      %p239 = por %p237, %p238
      %p241 = scmp.ne.s32.totalorder %s226, %s240
      %p242 = scmp.eq.s32.totalorder %s27, 0
      %p243 = por %p241, %p242
      %s244 = ssub.s32 %s21, %s28
      %p245 = scmp.eq.s32.totalorder %s244, 0
      %s247 = sadd.s32 %s246, 1
      %s248 = scalar_select %p245, %s246, %s247
      %p251 = pneg %p245
      %p252 = scmp.eq.s32.totalorder %s21, 1
      %p253 = por %p251, %p252
      %p254 = scmp.ne.s32.totalorder %s246, %s249
      %p255 = scmp.eq.s32.totalorder %s21, 0
      %p256 = por %p254, %p255
      %p257 = scmp.ne.s32.totalorder %s246, %s249
      %p258 = scmp.eq.s32.totalorder %s26, 1
      %p259 = por %p257, %p258
      %p260 = scmp.ne.s32.totalorder %s249, %s250
      %p261 = scmp.eq.s32.totalorder %s26, 0
      %p262 = por %p260, %p261
      %p263 = scmp.ne.s32.totalorder %s249, %s250
      %p264 = scmp.eq.s32.totalorder %s27, 1
      %p265 = por %p263, %p264
      %p267 = scmp.ne.s32.totalorder %s250, %s266
      %p268 = scmp.eq.s32.totalorder %s27, 0
      %p269 = por %p267, %p268
      %s270 = ssub.s32 %s21, %s28
      %p271 = scmp.eq.s32.totalorder %s270, 0
      %s273 = sadd.s32 %s272, 1
      %s274 = scalar_select %p271, %s272, %s273
      %p277 = pneg %p271
      %p278 = scmp.eq.s32.totalorder %s21, 1
      %p279 = por %p277, %p278
      %p280 = scmp.ne.s32.totalorder %s272, %s275
      %p281 = scmp.eq.s32.totalorder %s21, 0
      %p282 = por %p280, %p281
      %p283 = scmp.ne.s32.totalorder %s272, %s275
      %p284 = scmp.eq.s32.totalorder %s26, 1
      %p285 = por %p283, %p284
      %p286 = scmp.ne.s32.totalorder %s275, %s276
      %p287 = scmp.eq.s32.totalorder %s26, 0
      %p288 = por %p286, %p287
      %p289 = scmp.ne.s32.totalorder %s275, %s276
      %p290 = scmp.eq.s32.totalorder %s27, 1
      %p291 = por %p289, %p290
      %p293 = scmp.ne.s32.totalorder %s276, %s292
      %p294 = scmp.eq.s32.totalorder %s27, 0
      %p295 = por %p293, %p294
      %p296 = scmp.le.s32.totalorder 1, %s21
      %p297 = scmp.lt.s32.totalorder %s21, 3
      %p298 = pnand %p296, %p297
      %p299 = pneg %p298
      // Predicated region
      $region9: #{_lambda_.7} parent=5 // pred_check
        _
      $region10: #{_lambda_.7} parent=5 // pred_check_branch
        %301 = sbr.rel (%p298) target = $region12
      $region11: #{_lambda_.7} parent=5 // pred_region
        %s302 = ssub.s32 %s21, 1
        // Predicated region
        $region13: #{_lambda_.7} parent=11 // pred_check
          %p303 = pneg %p68
        $region14: #{_lambda_.7} parent=11 // pred_check_branch
          %305 = sbr.rel (%p303) target = $region16
        $region15: #{_lambda_.7} parent=11 // pred_region
          _
        $region16: #{_lambda_.7} parent=11 // pred_fallthru
          _
        // Predicated region
        $region17: #{_lambda_.7} parent=11 // pred_check
          %p306 = pneg %p89
        $region18: #{_lambda_.7} parent=11 // pred_check_branch
          %308 = sbr.rel (%p306) target = $region20
        $region19: #{_lambda_.7} parent=11 // pred_region
          %310 = vsyncadd [#allocation4], 0
          %s311 = sshll.u32 %s2, 4
          %s312 = int_to_ptr.hbm [resolvable:$true] %s311
          %s313 = sshll.u32 [#allocation3], 4
          %s314 = int_to_ptr.vmem [resolvable:$true] %s313
          %319 = dma.hbm_to_vmem [thread:$0]  %s312, 128, %s314, [#allocation4], 64, 64, 4
        $region20: #{_lambda_.7} parent=11 // pred_fallthru
          _
        // Predicated region
        $region21: #{_lambda_.7} parent=11 // pred_check
          %p320 = pneg %p110
        $region22: #{_lambda_.7} parent=11 // pred_check_branch
          %322 = sbr.rel (%p320) target = $region24
        $region23: #{_lambda_.7} parent=11 // pred_region
          _
        $region24: #{_lambda_.7} parent=11 // pred_fallthru
          _
        // Predicated region
        $region25: #{_lambda_.7} parent=11 // pred_check
          %p323 = pneg %p131
        $region26: #{_lambda_.7} parent=11 // pred_check_branch
          %325 = sbr.rel (%p323) target = $region28
        $region27: #{_lambda_.7} parent=11 // pred_region
          %327 = vsyncadd [#allocation6], 0
          %s329 = sshll.u32 %s4, 4
          %s330 = int_to_ptr.hbm [resolvable:$true] %s329
          %s331 = sshll.u32 [#allocation5], 4
          %s332 = int_to_ptr.vmem [resolvable:$true] %s331
          %334 = dma.hbm_to_vmem [thread:$0]  %s330, 32, %s332, [#allocation6]
        $region28: #{_lambda_.7} parent=11 // pred_fallthru
          _
        // Predicated region
        $region29: #{_lambda_.7} parent=11 // pred_check
          %p335 = pneg %p152
        $region30: #{_lambda_.7} parent=11 // pred_check_branch
          %337 = sbr.rel (%p335) target = $region32
        $region31: #{_lambda_.7} parent=11 // pred_region
          %339 = vsyncadd [#allocation6], 0
          %s341 = sshll.u32 %s5, 4
          %s342 = int_to_ptr.hbm [resolvable:$true] %s341
          %s343 = sshll.u32 [#allocation7], 4
          %s344 = int_to_ptr.vmem [resolvable:$true] %s343
          %346 = dma.hbm_to_vmem [thread:$0]  %s342, 64, %s344, [#allocation6]
        $region32: #{_lambda_.7} parent=11 // pred_fallthru
          _
        // Predicated region
        $region33: #{_lambda_.7} parent=11 // pred_check
          %p347 = pneg %p173
        $region34: #{_lambda_.7} parent=11 // pred_check_branch
          %349 = sbr.rel (%p347) target = $region36
        $region35: #{_lambda_.7} parent=11 // pred_region
          %351 = vsyncadd [#allocation9], 0
          %s353 = sshll.u32 %s6, 4
          %s354 = int_to_ptr.hbm [resolvable:$true] %s353
          %s355 = sshll.u32 [#allocation8], 4
          %s356 = int_to_ptr.vmem [resolvable:$true] %s355
          %358 = dma.hbm_to_vmem [thread:$0]  %s354, 32, %s356, [#allocation9]
        $region36: #{_lambda_.7} parent=11 // pred_fallthru
          _
        // Predicated region
        $region37: #{_lambda_.7} parent=11 // pred_check
          %p359 = pneg %p194
        $region38: #{_lambda_.7} parent=11 // pred_check_branch
          %361 = sbr.rel (%p359) target = $region40
        $region39: #{_lambda_.7} parent=11 // pred_region
          %363 = vsyncadd [#allocation9], 0
          %s365 = sshll.u32 %s7, 4
          %s366 = int_to_ptr.hbm [resolvable:$true] %s365
          %s367 = sshll.u32 [#allocation10], 4
          %s368 = int_to_ptr.vmem [resolvable:$true] %s367
          %370 = dma.hbm_to_vmem [thread:$0]  %s366, 64, %s368, [#allocation9]
        $region40: #{_lambda_.7} parent=11 // pred_fallthru
          _
        // Predicated region
        $region41: #{_lambda_.7} parent=11 // pred_check
          %p371 = pneg %p215
        $region42: #{_lambda_.7} parent=11 // pred_check_branch
          %373 = sbr.rel (%p371) target = $region44
        $region43: #{_lambda_.7} parent=11 // pred_region
          _
        $region44: #{_lambda_.7} parent=11 // pred_fallthru
          _
        // Predicated region
        $region45: #{_lambda_.7} parent=11 // pred_check
          %p374 = pneg %p236
        $region46: #{_lambda_.7} parent=11 // pred_check_branch
          %376 = sbr.rel (%p374) target = $region48
        $region47: #{_lambda_.7} parent=11 // pred_region
          _
        $region48: #{_lambda_.7} parent=11 // pred_fallthru
          _
      $region12: #{_lambda_.7} parent=5 // pred_fallthru
        _
      %p377 = scmp.lt.s32.totalorder %s21, 2
      // Predicated region
      $region49: #{_lambda_.7} parent=5 // pred_check
        %p378 = pneg %p377
      $region50: #{_lambda_.7} parent=5 // pred_check_branch
        %380 = sbr.rel (%p378) target = $region52
      $region51: #{_lambda_.7} parent=5 // pred_region
        // Predicated region
        $region53: #{_lambda_.7} parent=51 // pred_check
          %p381 = pneg %p41
        $region54: #{_lambda_.7} parent=51 // pred_check_branch
          %383 = sbr.rel (%p381) target = $region56
        $region55: #{_lambda_.7} parent=51 // pred_region
          %p384 = scmp.lt.s32.totalorder %s21, 1
          %s385 = scalar_select %p384, %s21, 1
          %s386 = smul.addr %s385, 2
          %s387 = smul.addr %s386, 4
          %s388 = scalar_lea.vmem %s0, %s387
        $region56: #{_lambda_.7} parent=51 // pred_fallthru
          _
      $region52: #{_lambda_.7} parent=5 // pred_fallthru
        _
      %p389 = scmp.le.s32.totalorder 1, %s21
      %p390 = scmp.lt.s32.totalorder %s21, 3
      %p391 = pnand %p389, %p390
      %p392 = pneg %p391
      // Predicated region
      $region57: #{_lambda_.7} parent=5 // pred_check
        _
      $region58: #{_lambda_.7} parent=5 // pred_check_branch
        %394 = sbr.rel (%p391) target = $region60
      $region59: #{_lambda_.7} parent=5 // pred_region
        %s395 = ssub.s32 %s21, 1
        // Predicated region
        $region61: #{_lambda_.7} parent=59 // pred_check
          %p396 = pneg %p89
        $region62: #{_lambda_.7} parent=59 // pred_check_branch
          %398 = sbr.rel (%p396) target = $region64
        $region63: #{_lambda_.7} parent=59 // pred_region
          %400 = dma.done [#allocation4], 128
        $region64: #{_lambda_.7} parent=59 // pred_fallthru
          _
        // Predicated region
        $region65: #{_lambda_.7} parent=59 // pred_check
          %p401 = pneg %p131
        $region66: #{_lambda_.7} parent=59 // pred_check_branch
          %403 = sbr.rel (%p401) target = $region68
        $region67: #{_lambda_.7} parent=59 // pred_region
          %405 = dma.done [#allocation6], 32
        $region68: #{_lambda_.7} parent=59 // pred_fallthru
          _
        // Predicated region
        $region69: #{_lambda_.7} parent=59 // pred_check
          %p406 = pneg %p152
        $region70: #{_lambda_.7} parent=59 // pred_check_branch
          %408 = sbr.rel (%p406) target = $region72
        $region71: #{_lambda_.7} parent=59 // pred_region
          %410 = dma.done [#allocation6], 64
        $region72: #{_lambda_.7} parent=59 // pred_fallthru
          _
        // Predicated region
        $region73: #{_lambda_.7} parent=59 // pred_check
          %p411 = pneg %p173
        $region74: #{_lambda_.7} parent=59 // pred_check_branch
          %413 = sbr.rel (%p411) target = $region76
        $region75: #{_lambda_.7} parent=59 // pred_region
          %415 = dma.done [#allocation9], 32
        $region76: #{_lambda_.7} parent=59 // pred_fallthru
          _
        // Predicated region
        $region77: #{_lambda_.7} parent=59 // pred_check
          %p416 = pneg %p194
        $region78: #{_lambda_.7} parent=59 // pred_check_branch
          %418 = sbr.rel (%p416) target = $region80
        $region79: #{_lambda_.7} parent=59 // pred_region
          %420 = dma.done [#allocation9], 64
        $region80: #{_lambda_.7} parent=59 // pred_fallthru
          _
        %p421 = scmp.lt.s32.totalorder %s26, 1
        %s422 = scalar_select %p421, %s26, 1
        %s423 = smul.addr %s422, 2
        %s424 = smul.addr %s423, 4
        %s425 = scalar_lea.vmem %s0, %s424
        %p426 = pneg %p47
        %p427 = pneg %p44
        %p428 = pneg %p68
        %p429 = pneg %p65
        %p430 = pneg %p89
        %p431 = pneg %p86
        %p432 = pneg %p110
        %p433 = pneg %p107
        %p434 = pneg %p131
        %p435 = pneg %p128
        %p436 = pneg %p152
        %p437 = pneg %p149
        %p438 = pneg %p173
        %p439 = pneg %p170
        %p440 = pneg %p194
        %p441 = pneg %p191
        %p442 = pneg %p215
        %p443 = pneg %p212
        %p444 = pneg %p236
        %p445 = pneg %p233
        %p446 = pneg %p262
        %p447 = pneg %p259
        %p448 = scmp.lt.s32.totalorder %s26, 1
        %s449 = scalar_select %p448, %s26, 1
        %s450 = smul.addr %s449, 2
        %s451 = smul.addr %s450, 4
        %s452 = scalar_lea.vmem %s10, %s451
        %p453 = pneg %p288
        %p454 = pneg %p285
        %p455 = scmp.lt.s32.totalorder %s26, 1
        %s456 = scalar_select %p455, %s26, 1
        %s457 = smul.addr %s456, 4
        %s458 = scalar_lea.vmem %s11, %s457
        %p459 = scmp.lt.s32.totalorder %s26, 1
        %s460 = scalar_select %p459, %s26, 1
        %s461 = smul.addr %s460, 2
        %s462 = smul.addr %s461, 4
        %s463 = scalar_lea.vmem %s0, %s462
        %p464 = scmp.lt.s32.totalorder %s26, 1
        %s465 = scalar_select %p464, %s26, 1
        %s466 = smul.addr %s465, 2
        %s467 = smul.addr %s466, 4
        %s468 = scalar_lea.vmem %s10, %s467
        %p469 = scmp.lt.s32.totalorder %s26, 1
        %s470 = scalar_select %p469, %s26, 1
        %s471 = smul.addr %s470, 4
        %s472 = scalar_lea.vmem %s11, %s471
        %v474 = vld [vmem:[%s463] sm:$0xff]
        %v475 = vld [vmem:[%s8] sm:$0xf]
        %477 = vset.pattern.permute.xlu0 0
        %478 = vperm.xlu0 %477, %v475
        %v479 = vpop.permute.xlu0 %478
        %v481 = vunpack.c.l.s4 839922192
        %v482 = vunpack.c.0.s8 %v481
        %v483 = vperm.slane %v479, %v482
        %v485 = vmul.f32 %v474, %v483
        %v486 = vld [vmem:[%s9] sm:$0xf]
        %488 = vset.pattern.permute.xlu0 0
        %489 = vperm.xlu0 %488, %v486
        %v490 = vpop.permute.xlu0 %489
        %v492 = vunpack.c.l.s4 839922192
        %v493 = vunpack.c.0.s8 %v492
        %v494 = vperm.slane %v490, %v493
        %v496 = vadd.f32 %v485, %v494
        %498 = vst [vmem:[#allocation1] ss:$2 sm:$0xff] %v496
        %v499 = vld.sshfl [vmem:[#allocation1] sm:$0xff pattern:$0x75316420]
        %v500 = vld.sshfl [vmem:[#allocation1 + $0x8] sm:$0xff pattern:$0x75316420]
        %503 = vrot.lane.b32.xlu0 %v499, 18
        %v504 = vpop.permute.xlu0 %503
        %505 = vrot.lane.b32.xlu0 %v500, 18
        %v506 = vpop.permute.xlu0 %505
        %v507 = vlaneseq
        %v508 = vand.u32 %v507, 127
        %vm509 = vcmp.lt.s32.totalorder %v508, 18
        %v510 = vsel %vm509, %v504, %v506
        %v511 = vsel %vm509, %v506, %v504
        %512 = vst [vmem:[#allocation2] sm:$0xf] %v511
        %513 = vst [vmem:[#allocation2 + $0x8] sm:$0xf] %v510
        %514 = vst [vmem:[#allocation1] ss:$2 sm:$0xff] %v496
        %v515 = vld.sshfl [vmem:[#allocation1] sm:$0xff pattern:$0x75316420]
        %v516 = vld.sshfl [vmem:[#allocation1 + $0x8] sm:$0xff pattern:$0x75316420]
        %519 = vrot.lane.b32.xlu0 %v515, 17
        %v520 = vpop.permute.xlu0 %519
        %521 = vrot.lane.b32.xlu0 %v516, 17
        %v522 = vpop.permute.xlu0 %521
        %vm523 = vcmp.lt.s32.totalorder %v508, 17
        %v524 = vsel %vm523, %v520, %v522
        %v525 = vsel %vm523, %v522, %v520
        %v528 = vrot.slane %v525, 4
        %v529 = vrot.slane %v524, 4
        %532 = vst [vmem:[#allocation2] sm:$0xf0] %v528
        %533 = vst [vmem:[#allocation2 + $0x8] sm:$0xf0] %v529
        %534 = vst [vmem:[#allocation1] ss:$2 sm:$0xff] %v496
        %v535 = vld.sshfl [vmem:[#allocation1] sm:$0xff pattern:$0x75316420]
        %v536 = vld.sshfl [vmem:[#allocation1 + $0x8] sm:$0xff pattern:$0x75316420]
        %539 = vrot.lane.b32.xlu0 %v535, 2
        %v540 = vpop.permute.xlu0 %539
        %541 = vrot.lane.b32.xlu0 %v536, 2
        %v542 = vpop.permute.xlu0 %541
        %vm543 = vcmp.lt.s32.totalorder %v508, 2
        %v544 = vsel %vm543, %v540, %v542
        %v545 = vsel %vm543, %v542, %v540
        %546 = vst [vmem:[#allocation2 + $0x10] sm:$0xf] %v545
        %547 = vst [vmem:[#allocation2 + $0x18] sm:$0xf] %v544
        %548 = vst [vmem:[#allocation1] ss:$2 sm:$0xff] %v496
        %v549 = vld.sshfl [vmem:[#allocation1] sm:$0xff pattern:$0x75316420]
        %v550 = vld.sshfl [vmem:[#allocation1 + $0x8] sm:$0xff pattern:$0x75316420]
        %553 = vrot.lane.b32.xlu0 %v549, 1
        %v554 = vpop.permute.xlu0 %553
        %555 = vrot.lane.b32.xlu0 %v550, 1
        %v556 = vpop.permute.xlu0 %555
        %vm557 = vcmp.lt.s32.totalorder %v508, 1
        %v558 = vsel %vm557, %v554, %v556
        %v559 = vsel %vm557, %v556, %v554
        %v562 = vrot.slane %v559, 4
        %v563 = vrot.slane %v558, 4
        %566 = vst [vmem:[#allocation2 + $0x10] sm:$0xf0] %v562
        %567 = vst [vmem:[#allocation2 + $0x18] sm:$0xf0] %v563
        %568 = vst [vmem:[#allocation1] ss:$2 sm:$0xff] %v496
        %v569 = vld.sshfl [vmem:[#allocation1] sm:$0xff pattern:$0x75316420]
        %v570 = vld.sshfl [vmem:[#allocation1 + $0x8] sm:$0xff pattern:$0x75316420]
        %573 = vrot.lane.b32.xlu0 %v569, 114
        %v574 = vpop.permute.xlu0 %573
        %575 = vrot.lane.b32.xlu0 %v570, 114
        %v576 = vpop.permute.xlu0 %575
        %vm577 = vcmp.lt.s32.totalorder %v508, 114
        %v578 = vsel %vm577, %v574, %v576
        %v579 = vsel %vm577, %v576, %v574
        %580 = vst [vmem:[#allocation2 + $0x20] sm:$0xf] %v578
        %581 = vst [vmem:[#allocation2 + $0x28] sm:$0xf] %v579
        %582 = vst [vmem:[#allocation1] ss:$2 sm:$0xff] %v496
        %v583 = vld.sshfl [vmem:[#allocation1] sm:$0xff pattern:$0x75316420]
        %v584 = vld.sshfl [vmem:[#allocation1 + $0x8] sm:$0xff pattern:$0x75316420]
        %587 = vrot.lane.b32.xlu0 %v583, 113
        %v588 = vpop.permute.xlu0 %587
        %589 = vrot.lane.b32.xlu0 %v584, 113
        %v590 = vpop.permute.xlu0 %589
        %vm591 = vcmp.lt.s32.totalorder %v508, 113
        %v592 = vsel %vm591, %v588, %v590
        %v593 = vsel %vm591, %v590, %v588
        %v596 = vrot.slane %v592, 4
        %v597 = vrot.slane %v593, 4
        %600 = vst [vmem:[#allocation2 + $0x20] sm:$0xf0] %v596
        %601 = vst [vmem:[#allocation2 + $0x28] sm:$0xf0] %v597
        %v602 = vld [vmem:[#allocation2] sm:$0xff]
        %v603 = vld [vmem:[#allocation2 + $0x8] sm:$0xff]
        %v604 = vld [vmem:[#allocation2 + $0x10] sm:$0xff]
        %v605 = vld [vmem:[#allocation2 + $0x18] sm:$0xff]
        %v606 = vld [vmem:[#allocation2 + $0x20] sm:$0xff]
        %v607 = vld [vmem:[#allocation2 + $0x28] sm:$0xff]
        %v608 = vld [vmem:[%s1] sm:$0xff]
        %v609 = vld [vmem:[%s1 + $0x8] sm:$0xff]
        %v610 = vld [vmem:[%s1 + $0x10] sm:$0xff]
        %v611 = vld [vmem:[%s1 + $0x18] sm:$0xff]
        %v612 = vld [vmem:[%s1 + $0x20] sm:$0xff]
        %v613 = vld [vmem:[%s1 + $0x28] sm:$0xff]
        %v614 = vmul.f32 %v602, %v608
        %v615 = vmul.f32 %v603, %v609
        %v616 = vmul.f32 %v604, %v610
        %v617 = vmul.f32 %v605, %v611
        %v618 = vmul.f32 %v606, %v612
        %v619 = vmul.f32 %v607, %v613
        %v620 = vpack.c.bf16 %v616, %v614
        %v621 = vpack.c.bf16 %v617, %v615
        %v622 = vpack.c.bf16 %v618, %v618
        %v623 = vpack.c.bf16 %v619, %v619
        %v624 = vld [vmem:[#allocation3] sm:$0xf]
        %v625 = vld [vmem:[#allocation3 + $0x4] sm:$0xf]
        %v626 = vld [vmem:[%s3] sm:$0xff]
        %v627 = vld [vmem:[%s3 + $0x8] sm:$0xff]
        %629 = vset.pattern.permute.xlu0 0
        %630 = vperm.xlu0 %629, %v626
        %v631 = vpop.permute.xlu0 %630
        %634 = vset.pattern.permute.xlu0 0
        %635 = vperm.xlu0 %634, %v627
        %v636 = vpop.permute.xlu0 %635
        %v640 = vunpack.c.l.b16 %v624
        %v641 = vunpack.c.l.b16 %v625
        %v642 = vpack.c.b16 %v641, %v640
        %vm643 = vcmask 195584
        %v645 = vsel %vm643, %v642, 0
        %vm647 = vcmask 1043456
        %v649 = vsel %vm647, %v622, 0
        %v652 = vsel %vm647, %v623, 0
        %654 = vmatpush.bf16.msra.mxu0 0
        %655 = vmatpush.bf16.msra.mxu0 0
        %656 = vmatpush.bf16.msra.mxu0 0
        %657 = vmatpush.bf16.msra.mxu0 0
        %658 = vmatpush.bf16.msra.mxu0 0
        %659 = vmatpush.bf16.msra.mxu0 0
        %660 = vmatpush.bf16.msra.mxu0 %v649
        %661 = vmatpush.bf16.msra.mxu0 %v620
        %662 = vmatmul.bf16.gmra.mxu0 %v645
        %v663 = vpop.f32.mrf.mxu0
        %v664 = vadd.f32 %v631, %v663
        %v665 = vpop.f32.mrf.mxu0
        %v666 = vadd.f32 %v636, %v665
        %667 = vdwg.mxu0
        %668 = vmatpush.bf16.msra.mxu0 0
        %669 = vmatpush.bf16.msra.mxu0 0
        %670 = vmatpush.bf16.msra.mxu0 0
        %671 = vmatpush.bf16.msra.mxu0 0
        %672 = vmatpush.bf16.msra.mxu0 0
        %673 = vmatpush.bf16.msra.mxu0 0
        %674 = vmatpush.bf16.msra.mxu0 %v652
        %675 = vmatpush.bf16.msra.mxu0 %v621
        %676 = vmatmul.bf16.gmra.mxu0 %v645
        %v677 = vpop.f32.mrf.mxu0
        %v678 = vadd.f32 %v631, %v677
        %v679 = vpop.f32.mrf.mxu0
        %v680 = vadd.f32 %v636, %v679
        %681 = vdwg.mxu0
        %v682 = vmax.f32 %v664, 0.0
        %v683 = vmax.f32 %v678, 0.0
        %v684 = vmax.f32 %v666, 0.0
        %v685 = vmax.f32 %v680, 0.0
        %v686 = vpack.c.bf16 %v684, %v682
        %v687 = vpack.c.bf16 %v685, %v683
        %v688 = vld [vmem:[#allocation5] sm:$0x3]
        %v689 = vld [vmem:[#allocation7] sm:$0xf]
        %691 = vset.pattern.permute.xlu0 0
        %692 = vperm.xlu0 %691, %v689
        %v693 = vpop.permute.xlu0 %692
        %vm695 = vcmask 130048
        %v697 = vsel %vm695, %v688, 0
        %699 = vmatpush.bf16.msra.mxu0 0
        %700 = vmatpush.bf16.msra.mxu0 0
        %701 = vmatpush.bf16.msra.mxu0 0
        %702 = vmatpush.bf16.msra.mxu0 0
        %703 = vmatpush.bf16.msra.mxu0 0
        %704 = vmatpush.bf16.msra.mxu0 0
        %705 = vmatpush.bf16.msra.mxu0 0
        %706 = vmatpush.bf16.msra.mxu0 %v686
        %707 = vmatmul.bf16.gmra.mxu0 %v697
        %v708 = vpop.f32.mrf.mxu0
        %v709 = vadd.f32 %v693, %v708
        %v710 = vpop.f32.mrf.mxu0
        %711 = vdwg.mxu0
        %712 = vmatpush.bf16.msra.mxu0 0
        %713 = vmatpush.bf16.msra.mxu0 0
        %714 = vmatpush.bf16.msra.mxu0 0
        %715 = vmatpush.bf16.msra.mxu0 0
        %716 = vmatpush.bf16.msra.mxu0 0
        %717 = vmatpush.bf16.msra.mxu0 0
        %718 = vmatpush.bf16.msra.mxu0 0
        %719 = vmatpush.bf16.msra.mxu0 %v687
        %720 = vmatmul.bf16.gmra.mxu0 %v697
        %v721 = vpop.f32.mrf.mxu0
        %v722 = vadd.f32 %v693, %v721
        %v723 = vpop.f32.mrf.mxu0
        %724 = vdwg.mxu0
        %v725 = vld [vmem:[#allocation8] sm:$0x3]
        %v726 = vld [vmem:[#allocation10] sm:$0xf]
        %728 = vset.pattern.permute.xlu0 0
        %729 = vperm.xlu0 %728, %v726
        %v730 = vpop.permute.xlu0 %729
        %v733 = vsel %vm695, %v725, 0
        %735 = vmatpush.bf16.msra.mxu0 0
        %736 = vmatpush.bf16.msra.mxu0 0
        %737 = vmatpush.bf16.msra.mxu0 0
        %738 = vmatpush.bf16.msra.mxu0 0
        %739 = vmatpush.bf16.msra.mxu0 0
        %740 = vmatpush.bf16.msra.mxu0 0
        %741 = vmatpush.bf16.msra.mxu0 0
        %742 = vmatpush.bf16.msra.mxu0 %v686
        %743 = vmatmul.bf16.gmra.mxu0 %v733
        %v744 = vpop.f32.mrf.mxu0
        %v745 = vadd.f32 %v730, %v744
        %v746 = vpop.f32.mrf.mxu0
        %747 = vdwg.mxu0
        %748 = vmatpush.bf16.msra.mxu0 0
        %749 = vmatpush.bf16.msra.mxu0 0
        %750 = vmatpush.bf16.msra.mxu0 0
        %751 = vmatpush.bf16.msra.mxu0 0
        %752 = vmatpush.bf16.msra.mxu0 0
        %753 = vmatpush.bf16.msra.mxu0 0
        %754 = vmatpush.bf16.msra.mxu0 0
        %755 = vmatpush.bf16.msra.mxu0 %v687
        %756 = vmatmul.bf16.gmra.mxu0 %v733
        %v757 = vpop.f32.mrf.mxu0
        %v758 = vadd.f32 %v730, %v757
        %v759 = vpop.f32.mrf.mxu0
        %760 = vdwg.mxu0
        %v761 = vadd.f32 %v745, 2.0
        %v762 = vadd.f32 %v758, 2.0
        %v763 = vmin.f32 %v761, 0.0
        %v764 = vmin.f32 %v762, 0.0
        %v765 = vand.u32 2147483647, %v761
        %v766 = vand.u32 2147483647, %v762
        %v767 = vsub.f32 0.0, %v765
        %v768 = vsub.f32 0.0, %v766
        %v769 = vmul.f32 %v767, 1.442695
        %v770 = vpow.pop %v769
        %v771 = vmul.f32 %v768, 1.442695
        %v772 = vpow.pop %v771
        %v773 = vadd.f32 %v770, 1.0
        %v774 = vadd.f32 %v772, 1.0
        %v775 = vlog2.pop %v773
        %v776 = vmul.f32 %v775, 0.6931472
        %v777 = vlog2.pop %v774
        %v778 = vmul.f32 %v777, 0.6931472
        %v779 = vsub.f32 %v763, %v776
        %v780 = vsub.f32 %v764, %v778
        %v781 = vmul.f32 %v779, 1.442695
        %v782 = vpow.pop %v781
        %v783 = vmul.f32 %v780, 1.442695
        %v784 = vpow.pop %v783
        %785 = vst [vmem:[#allocation1] ss:$2 sm:$0xff] %v496
        %v786 = vld.sshfl [vmem:[#allocation1] sm:$0xff pattern:$0x75316420]
        %v787 = vld.sshfl [vmem:[#allocation1 + $0x8] sm:$0xff pattern:$0x75316420]
        %v790 = vmul.f32 %v782, %v786
        %v791 = vmul.f32 %v784, %v787
        %v792 = vadd.f32 %v790, %v709
        %v793 = vadd.f32 %v791, %v722
        %v796 = vrot.slane %v793, 4
        %v797 = vsel %vm647, %v792, %v796
        %799 = vst [vmem:[%s468] sm:$0xff] %v797
        %v800 = vsel %vm647, %v792, 0.0
        %v801 = vsel %vm647, %v793, 0.0
        %v802 = vadd.f32 %v800, %v801
        %803 = vadd.xlane.f32.xlu0 %v802
        %v804 = vpop.xlane.xlu0 %803
        %vm805 = vcmask 3072
        %806 = vst.msk [vmem:[%s472] sm:$0xf] %vm805, %v804
        %v807 = vmul.f32 %v792, %v792
        %v808 = vmul.f32 %v793, %v793
        %v809 = vsel %vm647, %v807, 0.0
        %v810 = vsel %vm647, %v808, 0.0
        %v811 = vadd.f32 %v809, %v810
        %812 = vadd.xlane.f32.xlu0 %v811
        %v813 = vpop.xlane.xlu0 %812
        %vm814 = vcmask 11272
        %815 = vst.msk [vmem:[%s472] sm:$0xf] %vm814, %v813
        %v816 = vsel %vm647, %v779, 0.0
        %v817 = vsel %vm647, %v780, 0.0
        %v818 = vadd.f32 %v816, %v817
        %819 = vadd.xlane.f32.xlu0 %v818
        %v820 = vpop.xlane.xlu0 %819
        %vm821 = vcmask 19472
        %822 = vst.msk [vmem:[%s472] sm:$0xf] %vm821, %v820
        %p823 = scmp.lt.s32.totalorder %s26, 1
        %s824 = scalar_select %p823, %s26, 1
        %s825 = smul.addr %s824, 2
        %s826 = smul.addr %s825, 4
        %s827 = scalar_lea.vmem %s10, %s826
        %p828 = scmp.lt.s32.totalorder %s26, 1
        %s829 = scalar_select %p828, %s26, 1
        %s830 = smul.addr %s829, 4
        %s831 = scalar_lea.vmem %s11, %s830
        // Predicated region
        $region81: #{_lambda_.7} parent=59 // pred_check
          %p832 = pneg %p259
        $region82: #{_lambda_.7} parent=59 // pred_check_branch
          %834 = sbr.rel (%p832) target = $region84
        $region83: #{_lambda_.7} parent=59 // pred_region
          _
        $region84: #{_lambda_.7} parent=59 // pred_fallthru
          _
        // Predicated region
        $region85: #{_lambda_.7} parent=59 // pred_check
          %p835 = pneg %p285
        $region86: #{_lambda_.7} parent=59 // pred_check_branch
          %837 = sbr.rel (%p835) target = $region88
        $region87: #{_lambda_.7} parent=59 // pred_region
          _
        $region88: #{_lambda_.7} parent=59 // pred_fallthru
          _
      $region60: #{_lambda_.7} parent=5 // pred_fallthru
        _
      %p838 = scmp.le.s32.totalorder 2, %s21
      // Predicated region
      $region89: #{_lambda_.7} parent=5 // pred_check
        %p839 = pneg %p838
      $region90: #{_lambda_.7} parent=5 // pred_check_branch
        %841 = sbr.rel (%p839) target = $region92
      $region91: #{_lambda_.7} parent=5 // pred_region
        %s842 = ssub.s32 %s21, 2
        // Predicated region
        $region93: #{_lambda_.7} parent=91 // pred_check
          %p843 = pneg %p265
        $region94: #{_lambda_.7} parent=91 // pred_check_branch
          %845 = sbr.rel (%p843) target = $region96
        $region95: #{_lambda_.7} parent=91 // pred_region
          %p846 = scmp.lt.s32.totalorder %s27, 1
          %s847 = scalar_select %p846, %s27, 1
          %s848 = smul.addr %s847, 2
          %s849 = smul.addr %s848, 4
          %s850 = scalar_lea.vmem %s10, %s849
        $region96: #{_lambda_.7} parent=91 // pred_fallthru
          _
        // Predicated region
        $region97: #{_lambda_.7} parent=91 // pred_check
          %p851 = pneg %p291
        $region98: #{_lambda_.7} parent=91 // pred_check_branch
          %853 = sbr.rel (%p851) target = $region100
        $region99: #{_lambda_.7} parent=91 // pred_region
          %p854 = scmp.lt.s32.totalorder %s27, 1
          %s855 = scalar_select %p854, %s27, 1
          %s856 = smul.addr %s855, 4
          %s857 = scalar_lea.vmem %s11, %s856
        $region100: #{_lambda_.7} parent=91 // pred_fallthru
          _
      $region92: #{_lambda_.7} parent=5 // pred_fallthru
        _
    $region6: #{_lambda_.7} parent=1 // loop_footer
      %s25 = sadd.s32 1, %s21
    $region7: #{_lambda_.7} parent=1 // loop_footer_branch
      %20 = sbr.rel target = $region3
    $region8: #{_lambda_.7} parent=1 // loop_exit
      _
    %858 = vsyncpa [#allocation4], 1
    %s859 = scalar_lea.sflag [#allocation4], 1
    %860 = vsyncpa %s859, 1
    %861 = vsyncpa [#allocation6], 1
    %862 = vsyncpa [#allocation9], 1

// kernel: _lambda_.9
$region0: #{_lambda_.9}
  #allocation0 [shape = 'u32[]', space=smem, size = 0x4, offset = 0x4, fixed_abs, tag = 'smem constant byte address 0x4 - core index']
  #allocation1 [shape = 'u32[72,128]{1,0:T(1,128)}', space=vmem, size = 0x9000, scoped, tag = 'internal scratch']
  %s0 = inlined_call_operand.vmem [shape: f32[2,4,256], index: 0, kind: input, shape index: {}]
  %s1 = inlined_call_operand.vmem [shape: f32[4,1], index: 1, kind: input, shape index: {}]
  %s2 = inlined_call_operand.vmem [shape: f32[4,1], index: 2, kind: input, shape index: {}]
  %s3 = inlined_call_operand.vmem [shape: f32[2,4,256], index: 3, kind: output, shape index: {}]
  %s4 = sld [smem:[#allocation0]]
  $region45: #{_lambda_.9} parent=0
    _
  %s6 = ssub.s32 1, %s4
  %s7 = scalar_select 0, %s6, %s4
  loop: start=0, step=1, limit=4
  $region2: #{_lambda_.9} parent=0 // loop_pre_header
    _
  $region3: #{_lambda_.9} parent=0 // loop_header
    %s9 = sphi 0, %s13
    %p10 = scmp.ge.s32.totalorder %s9, 4
    %s19 = sphi 0, %s21
    %s22 = sphi 0, %s19
    %s23 = sphi 0, %s22
    %s39 = sphi 0, %s23
    %s43 = sphi 0, %s43
    %s45 = sphi 0, %s43
    %s46 = sphi 0, %s45
    %s60 = sphi 0, %s46
    %s64 = sphi 0, %s64
    %s66 = sphi 0, %s64
    %s67 = sphi 0, %s66
    %s81 = sphi 0, %s67
    %s87 = sphi 0, %s89
    %s90 = sphi 0, %s87
    %s91 = sphi 0, %s90
    %s107 = sphi 0, %s91
  $region4: #{_lambda_.9} parent=0 // loop_header_branch
    %12 = sbr.rel (%p10) target = $region8
  $region5: #{_lambda_.9} parent=0 // loop_body
    %s14 = ssub.s32 %s9, 1
    %s15 = ssub.s32 %s9, 2
    %s16 = sadd.s32 %s9, 1
    %s17 = ssub.s32 %s9, %s16
    %p18 = scmp.eq.s32.totalorder %s17, 0
    %s20 = sadd.s32 %s19, 1
    %s21 = scalar_select %p18, %s19, %s20
    %p24 = pneg %p18
    %p25 = scmp.eq.s32.totalorder %s9, 1
    %p26 = por %p24, %p25
    %p27 = scmp.ne.s32.totalorder %s19, %s22
    %p28 = scmp.eq.s32.totalorder %s9, 0
    %p29 = por %p27, %p28
    %p30 = scmp.ne.s32.totalorder %s19, %s22
    %p31 = scmp.eq.s32.totalorder %s14, 1
    %p32 = por %p30, %p31
    %p33 = scmp.ne.s32.totalorder %s22, %s23
    %p34 = scmp.eq.s32.totalorder %s14, 0
    %p35 = por %p33, %p34
    %p36 = scmp.ne.s32.totalorder %s22, %s23
    %p37 = scmp.eq.s32.totalorder %s15, 1
    %p38 = por %p36, %p37
    %p40 = scmp.ne.s32.totalorder %s23, %s39
    %p41 = scmp.eq.s32.totalorder %s15, 0
    %p42 = por %p40, %p41
    %s44 = sadd.s32 %s43, 1
    %p47 = scmp.eq.s32.totalorder %s9, 1
    %p48 = scmp.ne.s32.totalorder %s43, %s45
    %p49 = scmp.eq.s32.totalorder %s9, 0
    %p50 = por %p48, %p49
    %p51 = scmp.ne.s32.totalorder %s43, %s45
    %p52 = scmp.eq.s32.totalorder %s14, 1
    %p53 = por %p51, %p52
    %p54 = scmp.ne.s32.totalorder %s45, %s46
    %p55 = scmp.eq.s32.totalorder %s14, 0
    %p56 = por %p54, %p55
    %p57 = scmp.ne.s32.totalorder %s45, %s46
    %p58 = scmp.eq.s32.totalorder %s15, 1
    %p59 = por %p57, %p58
    %p61 = scmp.ne.s32.totalorder %s46, %s60
    %p62 = scmp.eq.s32.totalorder %s15, 0
    %p63 = por %p61, %p62
    %s65 = sadd.s32 %s64, 1
    %p68 = scmp.eq.s32.totalorder %s9, 1
    %p69 = scmp.ne.s32.totalorder %s64, %s66
    %p70 = scmp.eq.s32.totalorder %s9, 0
    %p71 = por %p69, %p70
    %p72 = scmp.ne.s32.totalorder %s64, %s66
    %p73 = scmp.eq.s32.totalorder %s14, 1
    %p74 = por %p72, %p73
    %p75 = scmp.ne.s32.totalorder %s66, %s67
    %p76 = scmp.eq.s32.totalorder %s14, 0
    %p77 = por %p75, %p76
    %p78 = scmp.ne.s32.totalorder %s66, %s67
    %p79 = scmp.eq.s32.totalorder %s15, 1
    %p80 = por %p78, %p79
    %p82 = scmp.ne.s32.totalorder %s67, %s81
    %p83 = scmp.eq.s32.totalorder %s15, 0
    %p84 = por %p82, %p83
    %s85 = ssub.s32 %s9, %s16
    %p86 = scmp.eq.s32.totalorder %s85, 0
    %s88 = sadd.s32 %s87, 1
    %s89 = scalar_select %p86, %s87, %s88
    %p92 = pneg %p86
    %p93 = scmp.eq.s32.totalorder %s9, 1
    %p94 = por %p92, %p93
    %p95 = scmp.ne.s32.totalorder %s87, %s90
    %p96 = scmp.eq.s32.totalorder %s9, 0
    %p97 = por %p95, %p96
    %p98 = scmp.ne.s32.totalorder %s87, %s90
    %p99 = scmp.eq.s32.totalorder %s14, 1
    %p100 = por %p98, %p99
    %p101 = scmp.ne.s32.totalorder %s90, %s91
    %p102 = scmp.eq.s32.totalorder %s14, 0
    %p103 = por %p101, %p102
    %p104 = scmp.ne.s32.totalorder %s90, %s91
    %p105 = scmp.eq.s32.totalorder %s15, 1
    %p106 = por %p104, %p105
    %p108 = scmp.ne.s32.totalorder %s91, %s107
    %p109 = scmp.eq.s32.totalorder %s15, 0
    %p110 = por %p108, %p109
    %p111 = scmp.le.s32.totalorder 1, %s9
    %p112 = scmp.lt.s32.totalorder %s9, 3
    %p113 = pnand %p111, %p112
    %p114 = pneg %p113
    // Predicated region
    $region9: #{_lambda_.9} parent=5 // pred_check
      _
    $region10: #{_lambda_.9} parent=5 // pred_check_branch
      %116 = sbr.rel (%p113) target = $region12
    $region11: #{_lambda_.9} parent=5 // pred_region
      %s117 = ssub.s32 %s9, 1
      // Predicated region
      $region13: #{_lambda_.9} parent=11 // pred_check
        %p118 = pneg %p56
      $region14: #{_lambda_.9} parent=11 // pred_check_branch
        %120 = sbr.rel (%p118) target = $region16
      $region15: #{_lambda_.9} parent=11 // pred_region
        _
      $region16: #{_lambda_.9} parent=11 // pred_fallthru
        _
      // Predicated region
      $region17: #{_lambda_.9} parent=11 // pred_check
        %p121 = pneg %p77
      $region18: #{_lambda_.9} parent=11 // pred_check_branch
        %123 = sbr.rel (%p121) target = $region20
      $region19: #{_lambda_.9} parent=11 // pred_region
        _
      $region20: #{_lambda_.9} parent=11 // pred_fallthru
        _
    $region12: #{_lambda_.9} parent=5 // pred_fallthru
      _
    %p124 = scmp.lt.s32.totalorder %s9, 2
    // Predicated region
    $region21: #{_lambda_.9} parent=5 // pred_check
      %p125 = pneg %p124
    $region22: #{_lambda_.9} parent=5 // pred_check_branch
      %127 = sbr.rel (%p125) target = $region24
    $region23: #{_lambda_.9} parent=5 // pred_region
      // Predicated region
      $region25: #{_lambda_.9} parent=23 // pred_check
        %p128 = pneg %p29
      $region26: #{_lambda_.9} parent=23 // pred_check_branch
        %130 = sbr.rel (%p128) target = $region28
      $region27: #{_lambda_.9} parent=23 // pred_region
        %p131 = scmp.lt.s32.totalorder %s9, 1
        %s132 = scalar_select %p131, %s9, 1
        %s133 = smul.addr %s132, 2
        %s134 = smul.addr %s133, 4
        %s135 = scalar_lea.vmem %s0, %s134
      $region28: #{_lambda_.9} parent=23 // pred_fallthru
        _
    $region24: #{_lambda_.9} parent=5 // pred_fallthru
      _
    %p136 = scmp.le.s32.totalorder 1, %s9
    %p137 = scmp.lt.s32.totalorder %s9, 3
    %p138 = pnand %p136, %p137
    %p139 = pneg %p138
    // Predicated region
    $region29: #{_lambda_.9} parent=5 // pred_check
      _
    $region30: #{_lambda_.9} parent=5 // pred_check_branch
      %141 = sbr.rel (%p138) target = $region32
    $region31: #{_lambda_.9} parent=5 // pred_region
      %s142 = ssub.s32 %s9, 1
      %p143 = scmp.lt.s32.totalorder %s14, 1
      %s144 = scalar_select %p143, %s14, 1
      %s145 = smul.addr %s144, 2
      %s146 = smul.addr %s145, 4
      %s147 = scalar_lea.vmem %s0, %s146
      %p148 = pneg %p35
      %p149 = pneg %p32
      %p150 = pneg %p56
      %p151 = pneg %p53
      %p152 = pneg %p77
      %p153 = pneg %p74
      %p154 = pneg %p103
      %p155 = pneg %p100
      %p156 = scmp.lt.s32.totalorder %s14, 1
      %s157 = scalar_select %p156, %s14, 1
      %s158 = smul.addr %s157, 2
      %s159 = smul.addr %s158, 4
      %s160 = scalar_lea.vmem %s3, %s159
      %p161 = scmp.lt.s32.totalorder %s14, 1
      %s162 = scalar_select %p161, %s14, 1
      %s163 = smul.addr %s162, 2
      %s164 = smul.addr %s163, 4
      %s165 = scalar_lea.vmem %s0, %s164
      %p166 = scmp.lt.s32.totalorder %s14, 1
      %s167 = scalar_select %p166, %s14, 1
      %s168 = smul.addr %s167, 2
      %s169 = smul.addr %s168, 4
      %s170 = scalar_lea.vmem %s3, %s169
      %v171 = vld [vmem:[%s165] sm:$0xff]
      %v172 = vld [vmem:[%s1] sm:$0xf]
      %174 = vset.pattern.permute.xlu0 0
      %175 = vperm.xlu0 %174, %v172
      %v176 = vpop.permute.xlu0 %175
      %v178 = vunpack.c.l.s4 839922192
      %v179 = vunpack.c.0.s8 %v178
      %v180 = vperm.slane %v176, %v179
      %v182 = vmul.f32 %v171, %v180
      %v183 = vld [vmem:[%s2] sm:$0xf]
      %185 = vset.pattern.permute.xlu0 0
      %186 = vperm.xlu0 %185, %v183
      %v187 = vpop.permute.xlu0 %186
      %v189 = vunpack.c.l.s4 839922192
      %v190 = vunpack.c.0.s8 %v189
      %v191 = vperm.slane %v187, %v190
      %v193 = vadd.f32 %v182, %v191
      %194 = vst [vmem:[%s170] sm:$0xff] %v193
      %p195 = scmp.lt.s32.totalorder %s14, 1
      %s196 = scalar_select %p195, %s14, 1
      %s197 = smul.addr %s196, 2
      %s198 = smul.addr %s197, 4
      %s199 = scalar_lea.vmem %s3, %s198
      // Predicated region
      $region33: #{_lambda_.9} parent=31 // pred_check
        %p200 = pneg %p100
      $region34: #{_lambda_.9} parent=31 // pred_check_branch
        %202 = sbr.rel (%p200) target = $region36
      $region35: #{_lambda_.9} parent=31 // pred_region
        _
      $region36: #{_lambda_.9} parent=31 // pred_fallthru
        _
    $region32: #{_lambda_.9} parent=5 // pred_fallthru
      _
    %p203 = scmp.le.s32.totalorder 2, %s9
    // Predicated region
    $region37: #{_lambda_.9} parent=5 // pred_check
      %p204 = pneg %p203
    $region38: #{_lambda_.9} parent=5 // pred_check_branch
      %206 = sbr.rel (%p204) target = $region40
    $region39: #{_lambda_.9} parent=5 // pred_region
      %s207 = ssub.s32 %s9, 2
      // Predicated region
      $region41: #{_lambda_.9} parent=39 // pred_check
        %p208 = pneg %p106
      $region42: #{_lambda_.9} parent=39 // pred_check_branch
        %210 = sbr.rel (%p208) target = $region44
      $region43: #{_lambda_.9} parent=39 // pred_region
        %p211 = scmp.lt.s32.totalorder %s15, 1
        %s212 = scalar_select %p211, %s15, 1
        %s213 = smul.addr %s212, 2
        %s214 = smul.addr %s213, 4
        %s215 = scalar_lea.vmem %s3, %s214
      $region44: #{_lambda_.9} parent=39 // pred_fallthru
        _
    $region40: #{_lambda_.9} parent=5 // pred_fallthru
      _
  $region6: #{_lambda_.9} parent=0 // loop_footer
    %s13 = sadd.s32 1, %s9
  $region7: #{_lambda_.9} parent=0 // loop_footer_branch
    %8 = sbr.rel target = $region3
  $region8: #{_lambda_.9} parent=0 // loop_exit
    _

</llo_original>
